<compile_context>
chip_gen: v5e
topology: v5e:2x2
jax: 0.10.0
libtpu: 0.0.40
codegen_flags: <defaults>
</compile_context>

<pallas_src>
import jax
import jax.numpy as jnp
from jax import lax
from jax.experimental import pallas as pl
from jax.experimental.pallas import tpu as pltpu


COMPUTE_DTYPE = jnp.bfloat16   # MXU operand dtype; accumulation is always f32
GI_DTYPE = jnp.float32         # streamed gate-preactivation dtype (accuracy)


def _round_up(x, m):
    return (x + m - 1) // m * m


def _largest_divisor_le(n, cap):
    cap = max(1, min(n, cap))
    for c in range(cap, 0, -1):
        if n % c == 0:
            return c
    return 1


def _pad_axis_to(a, axis, size):
    pad = [(0, 0)] * a.ndim
    pad[axis] = (0, size - a.shape[axis])
    return jnp.pad(a, pad)


# ----------------------------------------------------------------------------
# One-time hardware query: VMEM budget + TensorCore count (generation-aware).
# ----------------------------------------------------------------------------
def _query_hw():
    kind = ""
    try:
        kind = jax.devices()[0].device_kind.lower()
    except Exception:
        kind = ""
    vmem = None
    try:
        info = pltpu.get_tpu_info()
        for name in ("vmem_capacity_bytes", "vmem_size_bytes", "vmem_bytes"):
            v = getattr(info, name, None)
            if v:
                vmem = int(v)
                break
    except Exception:
        vmem = None
    if not vmem:
        vmem = (64 if ("7x" in kind or "v7" in kind) else 128) * 1024 * 1024
    # v7x has 2 TCs per chip; v4/v5p megacore also exposes 2; v5e/v6e have 1.
    num_tc = 2 if any(s in kind for s in ("7x", "v7", "v4", "v5p")) else 1
    return vmem, num_tc


_VMEM_PHYS, _NUM_TC = _query_hw()
_VMEM_LIMIT = max(16 * 1024 * 1024, min(_VMEM_PHYS * 3 // 4, 112 * 1024 * 1024))
_CHUNK_BUDGET = _VMEM_LIMIT // 6


# ----------------------------------------------------------------------------
# Kernel 1: hoisted layer-0 input projection  gi = x @ W_ih^T + b  (all steps)
# ----------------------------------------------------------------------------
def _in_proj_kernel(x_ref, w_ref, b_ref, o_ref):
    acc = jnp.dot(x_ref[...], w_ref[...], preferred_element_type=jnp.float32)
    o_ref[...] = (acc + b_ref[...]).astype(o_ref.dtype)


def gru_in_proj(x2d, wih_t, bih, *, block_rows, out_dtype):
    """x2d: (M, Dinp) -> (M, 3Hp), pipelined over fixed-size row blocks."""
    M, Din = x2d.shape
    N = wih_t.shape[1]
    return pl.pallas_call(
        _in_proj_kernel,
        out_shape=jax.ShapeDtypeStruct((M, N), out_dtype),
        grid_spec=pltpu.PrefetchScalarGridSpec(
            num_scalar_prefetch=0,
            grid=(M // block_rows,),
            in_specs=[
                pl.BlockSpec((block_rows, Din), lambda i: (i, 0)),
                pl.BlockSpec((Din, N), lambda i: (0, 0)),
                pl.BlockSpec((1, N), lambda i: (0, 0)),
            ],
            out_specs=pl.BlockSpec((block_rows, N), lambda i: (i, 0)),
        ),
        compiler_params=pltpu.CompilerParams(
            dimension_semantics=("parallel",),
            vmem_limit_bytes=_VMEM_LIMIT,
        ),
    )(x2d, wih_t, bih)


# ----------------------------------------------------------------------------
# Recurrence kernels.  Grid = (batch blocks [parallel], time chunks
# [arbitrary]); hidden state carried in an f32 VMEM scratch across chunks.
# ----------------------------------------------------------------------------
def _time_chunk_loop(gi_ref, whh_ref, bhn_ref, h_scr, hchunk_scr):
    """GRU cell over the Tt timesteps of the current chunk.  h_scr carries h
    across chunks; if hchunk_scr is given, per-step hidden states are also
    stored there for the chunk epilogue (fused next-layer projection)."""
    Tt = gi_ref.shape[0]
    Bt = gi_ref.shape[1]
    Hp = whh_ref.shape[0]

    @pl.when(pl.program_id(1) == 0)
    def _init():
        h_scr[...] = jnp.zeros_like(h_scr)   # h0 = 0, as in the PyTorch module

    whh = whh_ref[...]                                              # (Hp, 3Hp)
    # Only b_hn is added per step (b_hr / b_hz were folded into gi at pack
    # time).  Broadcast hoisted out of the loop (broadcasts are not CSE'd).
    bhn = jnp.broadcast_to(bhn_ref[...].astype(jnp.float32), (Bt, Hp))

    def step(t, carry):
        gi_t = gi_ref[t].astype(jnp.float32)                        # (Bt, 3Hp)
        h_prev = h_scr[...]                                          # (Bt, Hp) f32
        gh = jnp.dot(h_prev.astype(whh.dtype), whh,
                     preferred_element_type=jnp.float32)             # (Bt, 3Hp)
        # Gate order (r, z, n); slices are 128-lane aligned (Hp % 128 == 0).
        i_r, i_z, i_n = gi_t[:, 0:Hp], gi_t[:, Hp:2 * Hp], gi_t[:, 2 * Hp:3 * Hp]
        h_r, h_z = gh[:, 0:Hp], gh[:, Hp:2 * Hp]
        h_n = gh[:, 2 * Hp:3 * Hp] + bhn
        r = jax.nn.sigmoid(i_r + h_r)
        z = jax.nn.sigmoid(i_z + h_z)
        n = jnp.tanh(i_n + r * h_n)
        h_new = (1.0 - z) * n + z * h_prev
        h_scr[...] = h_new
        if hchunk_scr is not None:
            hchunk_scr[t] = h_new
        return carry

    # Deep unroll lets the LLO scheduler overlap step t+1's MXU push with step
    # t's VPU/EUP gate math and removes scalar-slot loop bookkeeping.
    if Tt <= 8:
        unroll = Tt
    elif Tt % 8 == 0:
        unroll = 8
    elif Tt % 4 == 0:
        unroll = 4
    elif Tt % 2 == 0:
        unroll = 2
    else:
        unroll = 1
    lax.fori_loop(0, Tt, step, 0, unroll=unroll)


def _gru_mid_kernel(gi_ref, whh_ref, bhn_ref, wih_nx_ref, bih_nx_ref,
                    gi_next_ref, h_scr, hchunk_scr):
    """Intermediate GRU layer with the NEXT layer's input projection fused into
    the per-chunk epilogue (one medium matmul, M = Tt*Bt)."""
    _time_chunk_loop(gi_ref, whh_ref, bhn_ref, h_scr, hchunk_scr)
    Tt, Bt, Hp = hchunk_scr.shape
    h_chunk = hchunk_scr[...].reshape(Tt * Bt, Hp).astype(wih_nx_ref.dtype)
    gi_nx = jnp.dot(h_chunk, wih_nx_ref[...], preferred_element_type=jnp.float32)
    gi_nx = gi_nx + bih_nx_ref[...]
    gi_next_ref[...] = gi_nx.reshape(Tt, Bt, 3 * Hp).astype(gi_next_ref.dtype)


def _gru_head_kernel(gi_ref, whh_ref, bhn_ref, fcw_ref, fcb_ref, y_ref, h_scr):
    """Last GRU layer with the Linear head fused on the final hidden state."""
    _time_chunk_loop(gi_ref, whh_ref, bhn_ref, h_scr, None)

    @pl.when(pl.program_id(1) == pl.num_programs(1) - 1)
    def _finalize():
        h = h_scr[...].astype(fcw_ref.dtype)
        y_ref[...] = (jnp.dot(h, fcw_ref[...], preferred_element_type=jnp.float32)
                      + fcb_ref[...]).astype(y_ref.dtype)


def gru_layer_mid(gi, whh_t, bhn, wih_next_t, bih_next, *, Bt, Tt, out_dtype):
    """gi: (T, Bp, 3Hp) for layer l  ->  gi of layer l+1 (same shape)."""
    T, Bp, threeHp = gi.shape
    Hp = threeHp // 3
    return pl.pallas_call(
        _gru_mid_kernel,
        out_shape=jax.ShapeDtypeStruct((T, Bp, threeHp), out_dtype),
        grid_spec=pltpu.PrefetchScalarGridSpec(
            num_scalar_prefetch=0,
            grid=(Bp // Bt, T // Tt),
            in_specs=[
                pl.BlockSpec((Tt, Bt, threeHp), lambda b, t: (t, b, 0)),
                pl.BlockSpec((Hp, threeHp), lambda b, t: (0, 0)),
                pl.BlockSpec((1, Hp), lambda b, t: (0, 0)),
                pl.BlockSpec((Hp, threeHp), lambda b, t: (0, 0)),
                pl.BlockSpec((1, threeHp), lambda b, t: (0, 0)),
            ],
            out_specs=pl.BlockSpec((Tt, Bt, threeHp), lambda b, t: (t, b, 0)),
            scratch_shapes=[pltpu.VMEM((Bt, Hp), jnp.float32),
                            pltpu.VMEM((Tt, Bt, Hp), jnp.float32)],
        ),
        compiler_params=pltpu.CompilerParams(
            dimension_semantics=("parallel", "arbitrary"),
            vmem_limit_bytes=_VMEM_LIMIT,
        ),
    )(gi, whh_t, bhn, wih_next_t, bih_next)


def gru_layer_head(gi, whh_t, bhn, fcw_t, fcb, *, Bt, Tt):
    """Last GRU layer; returns y = h_T @ W_fc^T + b_fc, shape (Bp, Op) f32."""
    T, Bp, threeHp = gi.shape
    Hp = threeHp // 3
    Op = fcw_t.shape[1]
    return pl.pallas_call(
        _gru_head_kernel,
        out_shape=jax.ShapeDtypeStruct((Bp, Op), jnp.float32),
        grid_spec=pltpu.PrefetchScalarGridSpec(
            num_scalar_prefetch=0,
            grid=(Bp // Bt, T // Tt),
            in_specs=[
                pl.BlockSpec((Tt, Bt, threeHp), lambda b, t: (t, b, 0)),
                pl.BlockSpec((Hp, threeHp), lambda b, t: (0, 0)),
                pl.BlockSpec((1, Hp), lambda b, t: (0, 0)),
                pl.BlockSpec((Hp, Op), lambda b, t: (0, 0)),
                pl.BlockSpec((1, Op), lambda b, t: (0, 0)),
            ],
            out_specs=pl.BlockSpec((Bt, Op), lambda b, t: (b, 0)),
            scratch_shapes=[pltpu.VMEM((Bt, Hp), jnp.float32)],
        ),
        compiler_params=pltpu.CompilerParams(
            dimension_semantics=("parallel", "arbitrary"),
            vmem_limit_bytes=_VMEM_LIMIT,
        ),
    )(gi, whh_t, bhn, fcw_t, fcb)


# ----------------------------------------------------------------------------
# Parameter init (PyTorch layout) and one-time packing into kernel layout
# ----------------------------------------------------------------------------
def init_params(key, input_dim, hidden_dim, output_dim, num_layers):
    """PyTorch-shaped params, uniform +/- 1/sqrt(H)."""
    params = {"layers": []}
    k = 1.0 / jnp.sqrt(hidden_dim)
    for layer in range(num_layers):
        d_in = input_dim if layer == 0 else hidden_dim
        key, k1, k2, k3, k4 = jax.random.split(key, 5)
        params["layers"].append({
            "w_ih": jax.random.uniform(k1, (3 * hidden_dim, d_in), jnp.float32, -k, k),
            "w_hh": jax.random.uniform(k2, (3 * hidden_dim, hidden_dim), jnp.float32, -k, k),
            "b_ih": jax.random.uniform(k3, (3 * hidden_dim,), jnp.float32, -k, k),
            "b_hh": jax.random.uniform(k4, (3 * hidden_dim,), jnp.float32, -k, k),
        })
    key, k1, k2 = jax.random.split(key, 3)
    params["fc_w"] = jax.random.uniform(k1, (output_dim, hidden_dim), jnp.float32, -k, k)
    params["fc_b"] = jax.random.uniform(k2, (output_dim,), jnp.float32, -k, k)
    return params


def _pack_gate_cols(w_t, H, Hp):
    """(Din, 3H) -> (Din, 3Hp), each gate block zero-padded to Hp lanes."""
    gates = [w_t[:, g * H:(g + 1) * H] for g in range(3)]
    return jnp.concatenate([_pad_axis_to(g, 1, Hp) for g in gates], axis=1)


def pack_params(params):
    """One-time transpose / per-gate pad / bias fold / bf16 cast."""
    H = params["layers"][0]["w_hh"].shape[1]
    Hp = _round_up(H, 128)
    Op = _round_up(params["fc_w"].shape[0], 128)
    packed = {"layers": []}
    for layer_idx, lp in enumerate(params["layers"]):
        Din = lp["w_ih"].shape[1]
        Dinp = _round_up(Din, 128) if layer_idx == 0 else Hp
        wih_t = _pack_gate_cols(lp["w_ih"].T, H, Hp)                  # (Din, 3Hp)
        wih_t = _pad_axis_to(wih_t, 0, Dinp)                          # pad contraction dim
        whh_t = _pad_axis_to(_pack_gate_cols(lp["w_hh"].T, H, Hp), 0, Hp)  # (Hp, 3Hp)
        # Fold b_hr / b_hz into the input-projection bias; keep b_hn separate
        # (it must stay inside r * (W_hn h + b_hn)).
        b_ih, b_hh = lp["b_ih"], lp["b_hh"]
        b_comb = jnp.concatenate([
            b_ih[0:H] + b_hh[0:H],          # r
            b_ih[H:2 * H] + b_hh[H:2 * H],  # z
            b_ih[2 * H:3 * H],              # n (input part only)
        ]).reshape(1, 3 * H)
        bih = _pack_gate_cols(b_comb, H, Hp)                          # (1, 3Hp)
        bhn = _pad_axis_to(b_hh[2 * H:3 * H].reshape(1, H), 1, Hp)    # (1, Hp)
        packed["layers"].append({
            "wih_t": wih_t.astype(COMPUTE_DTYPE),
            "whh_t": whh_t.astype(COMPUTE_DTYPE),
            "bih": bih.astype(jnp.float32),
            "bhn": bhn.astype(jnp.float32),
        })
    fcw_t = _pad_axis_to(params["fc_w"].T, 0, Hp)                     # (Hp, O)
    packed["fcw_t"] = _pad_axis_to(fcw_t, 1, Op).astype(COMPUTE_DTYPE)  # (Hp, Op)
    packed["fcb"] = params["fc_b"].reshape(1, -1).astype(jnp.float32)   # (1, O)
    return packed


# ----------------------------------------------------------------------------
# Full model forward (jittable; all tiling params derived from static shapes)
# ----------------------------------------------------------------------------
@jax.jit
def gru_model_forward(x, packed):
    """x: (B, T, D) batch-first, like the PyTorch module. Returns (B, output_dim)."""
    B, T, D = x.shape
    layers = packed["layers"]
    n_layers = len(layers)
    Hp = layers[0]["whh_t"].shape[0]
    Dinp = layers[0]["wih_t"].shape[0]
    O = packed["fcb"].shape[1]
    Op = packed["fcw_t"].shape[1]

    Bp = _round_up(max(B, 8), 8)
    # Split independent batch rows across TensorCores ONLY on chips that have
    # more than one TC (v7x / megacore); on v5e/v6e keep one batch block.
    Bt = Bp // 2 if (_NUM_TC >= 2 and Bp % 16 == 0) else Bp

    # Time-chunk size from this generation's VMEM budget: double-buffered gi
    # in + gi_next out (f32) + the per-chunk h scratch, minus resident weights.
    gi_bytes = jnp.dtype(GI_DTYPE).itemsize
    per_t = Bt * (2 * 2 * 3 * Hp * gi_bytes + Hp * 4)
    resident = 2 * 2 * (Hp * 3 * Hp * jnp.dtype(COMPUTE_DTYPE).itemsize)
    budget = max(_CHUNK_BUDGET - resident, per_t)
    Tt = _largest_divisor_le(T, max(1, budget // per_t))

    # In-proj M tile: fixed ~512-row tile (multiple of 8, divisor of M),
    # independent of the recurrence chunking.
    M = T * Bp
    block_rows = _largest_divisor_le(M // 8, 64) * 8

    # Batch-first -> time-major; pad batch to 8 sublanes and Din to 128 lanes.
    x_tm = jnp.transpose(x, (1, 0, 2))
    x_tm = jnp.pad(x_tm, ((0, 0), (0, Bp - B), (0, Dinp - D)))
    x2d = x_tm.reshape(M, Dinp).astype(COMPUTE_DTYPE)

    # Hoisted layer-0 input projection: one big pipelined MXU matmul.
    gi = gru_in_proj(x2d, layers[0]["wih_t"], layers[0]["bih"],
                     block_rows=block_rows, out_dtype=GI_DTYPE)
    gi = gi.reshape(T, Bp, 3 * Hp)

    fcb_p = _pad_axis_to(packed["fcb"], 1, Op)                        # (1, Op)

    y = None
    for li in range(n_layers):
        lp = layers[li]
        if li == n_layers - 1:
            y = gru_layer_head(gi, lp["whh_t"], lp["bhn"],
                               packed["fcw_t"], fcb_p, Bt=Bt, Tt=Tt)
        else:
            nxt = layers[li + 1]
            # Recurrence with the next layer's input projection fused into the
            # per-chunk epilogue: no HBM round trip of the hidden sequence.
            gi = gru_layer_mid(gi, lp["whh_t"], lp["bhn"],
                               nxt["wih_t"], nxt["bih"],
                               Bt=Bt, Tt=Tt, out_dtype=GI_DTYPE)
    return y[:B, :O]


# ----------------------------------------------------------------------------
# Pure-JAX f32 reference (for verification)
# ----------------------------------------------------------------------------
def gru_model_reference(x, params):
    h_seq = jnp.transpose(x, (1, 0, 2))
    for lp in params["layers"]:
        H = lp["w_hh"].shape[1]

        def cell(h, x_t, lp=lp, H=H):
            gi = x_t @ lp["w_ih"].T + lp["b_ih"]
            gh = h @ lp["w_hh"].T + lp["b_hh"]
            i_r, i_z, i_n = gi[:, :H], gi[:, H:2 * H], gi[:, 2 * H:]
            h_r, h_z, h_n = gh[:, :H], gh[:, H:2 * H], gh[:, 2 * H:]
            r = jax.nn.sigmoid(i_r + h_r)
            z = jax.nn.sigmoid(i_z + h_z)
            n = jnp.tanh(i_n + r * h_n)
            h_new = (1.0 - z) * n + z * h
            return h_new, h_new

        h0 = jnp.zeros((x.shape[0], H), jnp.float32)
        _, h_seq = lax.scan(cell, h0, h_seq)
    return h_seq[-1] @ params["fc_w"].T + params["fc_b"]


if __name__ == "__main__":
    B, T, D, H, O, L = 2, 8, 16, 32, 4, 2
    key = jax.random.PRNGKey(0)
    key, kx = jax.random.split(key)
    x = jax.random.normal(kx, (B, T, D), jnp.float32)

    params = init_params(key, input_dim=D, hidden_dim=H, output_dim=O, num_layers=L)
    packed = pack_params(params)

    out = gru_model_forward(x, packed)
    out = jax.block_until_ready(out)

    ref = gru_model_reference(x, params)
    assert out.shape == (B, O)
    # bf16 matmul operands (f32 accumulation / f32 gi) vs a pure-f32 reference.
    err = jnp.max(jnp.abs(out - ref))
    assert jnp.allclose(out, ref, atol=5e-2, rtol=5e-2), f"mismatch vs reference: {err}"
    print("KERNEL_OK")
</pallas_src>

<mosaic_0001>
module attributes {stable_mosaic.version = 11 : i64} {
  func.func @_in_proj_kernel(%arg0: i32, %arg1: memref<64x128xbf16, #tpu.memory_space<vmem>>, %arg2: memref<128x384xbf16, #tpu.memory_space<vmem>>, %arg3: memref<1x384xf32, #tpu.memory_space<vmem>>, %arg4: memref<64x384xf32, #tpu.memory_space<vmem>>) attributes {dimension_semantics = [#tpu.dimension_semantics<parallel>], iteration_bounds = array<i64: 1>, scalar_prefetch = 0 : i64, scratch_operands = 0 : i64, tpu.core_type = #tpu.core_type<tc>, window_params = [{transform_indices = @transform_0, window_bounds = array<i64: 64, 128>}, {pipeline_mode = #tpu.pipeline_mode<synchronous>, transform_indices = @transform_1, window_bounds = array<i64: 128, 384>}, {pipeline_mode = #tpu.pipeline_mode<synchronous>, transform_indices = @transform_2, window_bounds = array<i64: 1, 384>}, {transform_indices = @transform_3, window_bounds = array<i64: 64, 384>}]} {
    %c0 = arith.constant 0 : index
    %c0_0 = arith.constant 0 : index
    %0 = vector.load %arg1[%c0, %c0_0] : memref<64x128xbf16, #tpu.memory_space<vmem>>, vector<64x128xbf16>
    %c0_1 = arith.constant 0 : index
    %c0_2 = arith.constant 0 : index
    %1 = vector.load %arg2[%c0_1, %c0_2] : memref<128x384xbf16, #tpu.memory_space<vmem>>, vector<128x384xbf16>
    %cst = arith.constant dense<0.000000e+00> : vector<64x384xf32>
    %2 = tpu.matmul %0, %1, %cst {dimension_numbers = #tpu.dot_dimension_numbers<[1], [0], [0], [1], [0, 0, 1, 1], [], []>} : vector<64x128xbf16>, vector<128x384xbf16>, vector<64x384xf32> -> vector<64x384xf32>
    %c0_3 = arith.constant 0 : index
    %c0_4 = arith.constant 0 : index
    %3 = vector.load %arg3[%c0_3, %c0_4] : memref<1x384xf32, #tpu.memory_space<vmem>>, vector<1x384xf32>
    %4 = vector.broadcast %3 : vector<1x384xf32> to vector<64x384xf32>
    %5 = arith.addf %2, %4 : vector<64x384xf32>
    %c0_5 = arith.constant 0 : index
    %c0_6 = arith.constant 0 : index
    %6 = vector.load %arg4[%c0_5, %c0_6] : memref<64x384xf32, #tpu.memory_space<vmem>>, vector<64x384xf32>
    tpu.vector_store %arg4[%c0_5, %c0_6], %5 {strides = array<i32>} : memref<64x384xf32, #tpu.memory_space<vmem>>, vector<64x384xf32>,
    return
  }
  func.func @transform_0(%arg0: i32) -> (i32, i32) {
    %c0_i32 = arith.constant 0 : i32
    %c0_i32_0 = arith.constant 0 : i32
    return %arg0, %c0_i32 : i32, i32
  }
  func.func @transform_1(%arg0: i32) -> (i32, i32) {
    %c0_i32 = arith.constant 0 : i32
    %c0_i32_0 = arith.constant 0 : i32
    %c0_i32_1 = arith.constant 0 : i32
    return %c0_i32, %c0_i32_0 : i32, i32
  }
  func.func @transform_2(%arg0: i32) -> (i32, i32) {
    %c0_i32 = arith.constant 0 : i32
    %c0_i32_0 = arith.constant 0 : i32
    %c0_i32_1 = arith.constant 0 : i32
    return %c0_i32, %c0_i32_0 : i32, i32
  }
  func.func @transform_3(%arg0: i32) -> (i32, i32) {
    %c0_i32 = arith.constant 0 : i32
    %c0_i32_0 = arith.constant 0 : i32
    return %arg0, %c0_i32 : i32, i32
  }
}

module attributes {stable_mosaic.version = 11 : i64} {
  func.func @_gru_mid_kernel(%arg0: i32, %arg1: i32, %arg2: memref<8x8x384xf32, #tpu.memory_space<vmem>>, %arg3: memref<128x384xbf16, #tpu.memory_space<vmem>>, %arg4: memref<1x128xf32, #tpu.memory_space<vmem>>, %arg5: memref<128x384xbf16, #tpu.memory_space<vmem>>, %arg6: memref<1x384xf32, #tpu.memory_space<vmem>>, %arg7: memref<8x8x384xf32, #tpu.memory_space<vmem>>, %arg8: memref<8x128xf32, #tpu.memory_space<vmem>>, %arg9: memref<8x8x128xf32, #tpu.memory_space<vmem>>) attributes {dimension_semantics = [#tpu.dimension_semantics<parallel>, #tpu.dimension_semantics<arbitrary>], iteration_bounds = array<i64: 1, 1>, scalar_prefetch = 0 : i64, scratch_operands = 2 : i64, tpu.core_type = #tpu.core_type<tc>, window_params = [{transform_indices = @transform_0, window_bounds = array<i64: 8, 8, 384>}, {pipeline_mode = #tpu.pipeline_mode<synchronous>, transform_indices = @transform_1, window_bounds = array<i64: 128, 384>}, {pipeline_mode = #tpu.pipeline_mode<synchronous>, transform_indices = @transform_2, window_bounds = array<i64: 1, 128>}, {pipeline_mode = #tpu.pipeline_mode<synchronous>, transform_indices = @transform_3, window_bounds = array<i64: 128, 384>}, {pipeline_mode = #tpu.pipeline_mode<synchronous>, transform_indices = @transform_4, window_bounds = array<i64: 1, 384>}, {transform_indices = @transform_5, window_bounds = array<i64: 8, 8, 384>}]} {
    %c0_i32 = arith.constant 0 : i32
    %0 = arith.cmpi eq, %arg1, %c0_i32 : i32
    %1 = arith.extui %0 : i1 to i32
    %c0_i32_0 = arith.constant 0 : i32
    %2 = arith.cmpi ne, %1, %c0_i32_0 : i32
    scf.if %2 {
      %cst_111 = arith.constant 0.000000e+00 : f32
      %321 = vector.broadcast %cst_111 : f32 to vector<8x128xf32>
      %c0_112 = arith.constant 0 : index
      %c0_113 = arith.constant 0 : index
      %322 = vector.load %arg8[%c0_112, %c0_113] : memref<8x128xf32, #tpu.memory_space<vmem>>, vector<8x128xf32>
      tpu.vector_store %arg8[%c0_112, %c0_113], %321 {strides = array<i32>} : memref<8x128xf32, #tpu.memory_space<vmem>>, vector<8x128xf32>,
    } else {
    }
    %c0 = arith.constant 0 : index
    %c0_1 = arith.constant 0 : index
    %3 = vector.load %arg3[%c0, %c0_1] : memref<128x384xbf16, #tpu.memory_space<vmem>>, vector<128x384xbf16>
    %c0_2 = arith.constant 0 : index
    %c0_3 = arith.constant 0 : index
    %4 = vector.load %arg4[%c0_2, %c0_3] : memref<1x128xf32, #tpu.memory_space<vmem>>, vector<1x128xf32>
    %5 = vector.shape_cast %4 : vector<1x128xf32> to vector<1x128xf32>
    %6 = vector.broadcast %5 : vector<1x128xf32> to vector<8x128xf32>
    %c0_i32_4 = arith.constant 0 : i32
    %7 = arith.index_cast %c0_i32_4 : i32 to index
    %c0_5 = arith.constant 0 : index
    %c0_6 = arith.constant 0 : index
    %8 = vector.load %arg2[%7, %c0_5, %c0_6] : memref<8x8x384xf32, #tpu.memory_space<vmem>>, vector<1x8x384xf32>
    %9 = vector.shape_cast %8 : vector<1x8x384xf32> to vector<8x384xf32>
    %c0_7 = arith.constant 0 : index
    %c0_8 = arith.constant 0 : index
    %10 = vector.load %arg8[%c0_7, %c0_8] : memref<8x128xf32, #tpu.memory_space<vmem>>, vector<8x128xf32>
    %11 = arith.truncf %10 : vector<8x128xf32> to vector<8x128xbf16>
    %cst = arith.constant dense<0.000000e+00> : vector<8x384xf32>
    %12 = tpu.matmul %11, %3, %cst {dimension_numbers = #tpu.dot_dimension_numbers<[1], [0], [0], [1], [0, 0, 1, 1], [], []>} : vector<8x128xbf16>, vector<128x384xbf16>, vector<8x384xf32> -> vector<8x384xf32>
    %13 = vector.extract_strided_slice %9 {offsets = [0, 0], sizes = [8, 128], strides = [1, 1]} : vector<8x384xf32> to vector<8x128xf32>
    %14 = vector.extract_strided_slice %9 {offsets = [0, 128], sizes = [8, 128], strides = [1, 1]} : vector<8x384xf32> to vector<8x128xf32>
    %15 = vector.extract_strided_slice %9 {offsets = [0, 256], sizes = [8, 128], strides = [1, 1]} : vector<8x384xf32> to vector<8x128xf32>
    %16 = vector.extract_strided_slice %12 {offsets = [0, 0], sizes = [8, 128], strides = [1, 1]} : vector<8x384xf32> to vector<8x128xf32>
    %17 = vector.extract_strided_slice %12 {offsets = [0, 128], sizes = [8, 128], strides = [1, 1]} : vector<8x384xf32> to vector<8x128xf32>
    %18 = vector.extract_strided_slice %12 {offsets = [0, 256], sizes = [8, 128], strides = [1, 1]} : vector<8x384xf32> to vector<8x128xf32>
    %19 = arith.addf %18, %6 : vector<8x128xf32>
    %20 = arith.addf %13, %16 : vector<8x128xf32>
    %21 = arith.negf %20 : vector<8x128xf32>
    %22 = math.exp %21 : vector<8x128xf32>
    %cst_9 = arith.constant 1.000000e+00 : f32
    %23 = vector.broadcast %cst_9 : f32 to vector<8x128xf32>
    %24 = arith.addf %23, %22 : vector<8x128xf32>
    %25 = arith.divf %23, %24 : vector<8x128xf32>
    %26 = arith.addf %14, %17 : vector<8x128xf32>
    %27 = arith.negf %26 : vector<8x128xf32>
    %28 = math.exp %27 : vector<8x128xf32>
    %cst_10 = arith.constant 1.000000e+00 : f32
    %29 = vector.broadcast %cst_10 : f32 to vector<8x128xf32>
    %30 = arith.addf %29, %28 : vector<8x128xf32>
    %31 = arith.divf %29, %30 : vector<8x128xf32>
    %32 = arith.mulf %25, %19 : vector<8x128xf32>
    %33 = arith.addf %15, %32 : vector<8x128xf32>
    %34 = math.tanh %33 : vector<8x128xf32>
    %cst_11 = arith.constant 1.000000e+00 : f32
    %35 = vector.broadcast %cst_11 : f32 to vector<8x128xf32>
    %36 = arith.subf %35, %31 : vector<8x128xf32>
    %37 = arith.mulf %36, %34 : vector<8x128xf32>
    %38 = arith.mulf %31, %10 : vector<8x128xf32>
    %39 = arith.addf %37, %38 : vector<8x128xf32>
    %c0_12 = arith.constant 0 : index
    %c0_13 = arith.constant 0 : index
    %40 = vector.load %arg8[%c0_12, %c0_13] : memref<8x128xf32, #tpu.memory_space<vmem>>, vector<8x128xf32>
    tpu.vector_store %arg8[%c0_12, %c0_13], %39 {strides = array<i32>} : memref<8x128xf32, #tpu.memory_space<vmem>>, vector<8x128xf32>,
    %41 = arith.index_cast %c0_i32_4 : i32 to index
    %c0_14 = arith.constant 0 : index
    %c0_15 = arith.constant 0 : index
    %42 = vector.load %arg9[%41, %c0_14, %c0_15] : memref<8x8x128xf32, #tpu.memory_space<vmem>>, vector<1x8x128xf32>
    %43 = vector.shape_cast %42 : vector<1x8x128xf32> to vector<8x128xf32>
    %44 = vector.shape_cast %39 : vector<8x128xf32> to vector<1x8x128xf32>
    tpu.vector_store %arg9[%41, %c0_14, %c0_15], %44 {strides = array<i32>} : memref<8x8x128xf32, #tpu.memory_space<vmem>>, vector<1x8x128xf32>,
    %c1_i32 = arith.constant 1 : i32
    %45 = arith.index_cast %c1_i32 : i32 to index
    %c0_16 = arith.constant 0 : index
    %c0_17 = arith.constant 0 : index
    %46 = vector.load %arg2[%45, %c0_16, %c0_17] : memref<8x8x384xf32, #tpu.memory_space<vmem>>, vector<1x8x384xf32>
    %47 = vector.shape_cast %46 : vector<1x8x384xf32> to vector<8x384xf32>
    %c0_18 = arith.constant 0 : index
    %c0_19 = arith.constant 0 : index
    %48 = vector.load %arg8[%c0_18, %c0_19] : memref<8x128xf32, #tpu.memory_space<vmem>>, vector<8x128xf32>
    %49 = arith.truncf %48 : vector<8x128xf32> to vector<8x128xbf16>
    %cst_20 = arith.constant dense<0.000000e+00> : vector<8x384xf32>
    %50 = tpu.matmul %49, %3, %cst_20 {dimension_numbers = #tpu.dot_dimension_numbers<[1], [0], [0], [1], [0, 0, 1, 1], [], []>} : vector<8x128xbf16>, vector<128x384xbf16>, vector<8x384xf32> -> vector<8x384xf32>
    %51 = vector.extract_strided_slice %47 {offsets = [0, 0], sizes = [8, 128], strides = [1, 1]} : vector<8x384xf32> to vector<8x128xf32>
    %52 = vector.extract_strided_slice %47 {offsets = [0, 128], sizes = [8, 128], strides = [1, 1]} : vector<8x384xf32> to vector<8x128xf32>
    %53 = vector.extract_strided_slice %47 {offsets = [0, 256], sizes = [8, 128], strides = [1, 1]} : vector<8x384xf32> to vector<8x128xf32>
    %54 = vector.extract_strided_slice %50 {offsets = [0, 0], sizes = [8, 128], strides = [1, 1]} : vector<8x384xf32> to vector<8x128xf32>
    %55 = vector.extract_strided_slice %50 {offsets = [0, 128], sizes = [8, 128], strides = [1, 1]} : vector<8x384xf32> to vector<8x128xf32>
    %56 = vector.extract_strided_slice %50 {offsets = [0, 256], sizes = [8, 128], strides = [1, 1]} : vector<8x384xf32> to vector<8x128xf32>
    %57 = arith.addf %56, %6 : vector<8x128xf32>
    %58 = arith.addf %51, %54 : vector<8x128xf32>
    %59 = arith.negf %58 : vector<8x128xf32>
    %60 = math.exp %59 : vector<8x128xf32>
    %cst_21 = arith.constant 1.000000e+00 : f32
    %61 = vector.broadcast %cst_21 : f32 to vector<8x128xf32>
    %62 = arith.addf %61, %60 : vector<8x128xf32>
    %63 = arith.divf %61, %62 : vector<8x128xf32>
    %64 = arith.addf %52, %55 : vector<8x128xf32>
    %65 = arith.negf %64 : vector<8x128xf32>
    %66 = math.exp %65 : vector<8x128xf32>
    %cst_22 = arith.constant 1.000000e+00 : f32
    %67 = vector.broadcast %cst_22 : f32 to vector<8x128xf32>
    %68 = arith.addf %67, %66 : vector<8x128xf32>
    %69 = arith.divf %67, %68 : vector<8x128xf32>
    %70 = arith.mulf %63, %57 : vector<8x128xf32>
    %71 = arith.addf %53, %70 : vector<8x128xf32>
    %72 = math.tanh %71 : vector<8x128xf32>
    %cst_23 = arith.constant 1.000000e+00 : f32
    %73 = vector.broadcast %cst_23 : f32 to vector<8x128xf32>
    %74 = arith.subf %73, %69 : vector<8x128xf32>
    %75 = arith.mulf %74, %72 : vector<8x128xf32>
    %76 = arith.mulf %69, %48 : vector<8x128xf32>
    %77 = arith.addf %75, %76 : vector<8x128xf32>
    %c0_24 = arith.constant 0 : index
    %c0_25 = arith.constant 0 : index
    %78 = vector.load %arg8[%c0_24, %c0_25] : memref<8x128xf32, #tpu.memory_space<vmem>>, vector<8x128xf32>
    tpu.vector_store %arg8[%c0_24, %c0_25], %77 {strides = array<i32>} : memref<8x128xf32, #tpu.memory_space<vmem>>, vector<8x128xf32>,
    %79 = arith.index_cast %c1_i32 : i32 to index
    %c0_26 = arith.constant 0 : index
    %c0_27 = arith.constant 0 : index
    %80 = vector.load %arg9[%79, %c0_26, %c0_27] : memref<8x8x128xf32, #tpu.memory_space<vmem>>, vector<1x8x128xf32>
    %81 = vector.shape_cast %80 : vector<1x8x128xf32> to vector<8x128xf32>
    %82 = vector.shape_cast %77 : vector<8x128xf32> to vector<1x8x128xf32>
    tpu.vector_store %arg9[%79, %c0_26, %c0_27], %82 {strides = array<i32>} : memref<8x8x128xf32, #tpu.memory_space<vmem>>, vector<1x8x128xf32>,
    %c2_i32 = arith.constant 2 : i32
    %83 = arith.index_cast %c2_i32 : i32 to index
    %c0_28 = arith.constant 0 : index
    %c0_29 = arith.constant 0 : index
    %84 = vector.load %arg2[%83, %c0_28, %c0_29] : memref<8x8x384xf32, #tpu.memory_space<vmem>>, vector<1x8x384xf32>
    %85 = vector.shape_cast %84 : vector<1x8x384xf32> to vector<8x384xf32>
    %c0_30 = arith.constant 0 : index
    %c0_31 = arith.constant 0 : index
    %86 = vector.load %arg8[%c0_30, %c0_31] : memref<8x128xf32, #tpu.memory_space<vmem>>, vector<8x128xf32>
    %87 = arith.truncf %86 : vector<8x128xf32> to vector<8x128xbf16>
    %cst_32 = arith.constant dense<0.000000e+00> : vector<8x384xf32>
    %88 = tpu.matmul %87, %3, %cst_32 {dimension_numbers = #tpu.dot_dimension_numbers<[1], [0], [0], [1], [0, 0, 1, 1], [], []>} : vector<8x128xbf16>, vector<128x384xbf16>, vector<8x384xf32> -> vector<8x384xf32>
    %89 = vector.extract_strided_slice %85 {offsets = [0, 0], sizes = [8, 128], strides = [1, 1]} : vector<8x384xf32> to vector<8x128xf32>
    %90 = vector.extract_strided_slice %85 {offsets = [0, 128], sizes = [8, 128], strides = [1, 1]} : vector<8x384xf32> to vector<8x128xf32>
    %91 = vector.extract_strided_slice %85 {offsets = [0, 256], sizes = [8, 128], strides = [1, 1]} : vector<8x384xf32> to vector<8x128xf32>
    %92 = vector.extract_strided_slice %88 {offsets = [0, 0], sizes = [8, 128], strides = [1, 1]} : vector<8x384xf32> to vector<8x128xf32>
    %93 = vector.extract_strided_slice %88 {offsets = [0, 128], sizes = [8, 128], strides = [1, 1]} : vector<8x384xf32> to vector<8x128xf32>
    %94 = vector.extract_strided_slice %88 {offsets = [0, 256], sizes = [8, 128], strides = [1, 1]} : vector<8x384xf32> to vector<8x128xf32>
    %95 = arith.addf %94, %6 : vector<8x128xf32>
    %96 = arith.addf %89, %92 : vector<8x128xf32>
    %97 = arith.negf %96 : vector<8x128xf32>
    %98 = math.exp %97 : vector<8x128xf32>
    %cst_33 = arith.constant 1.000000e+00 : f32
    %99 = vector.broadcast %cst_33 : f32 to vector<8x128xf32>
    %100 = arith.addf %99, %98 : vector<8x128xf32>
    %101 = arith.divf %99, %100 : vector<8x128xf32>
    %102 = arith.addf %90, %93 : vector<8x128xf32>
    %103 = arith.negf %102 : vector<8x128xf32>
    %104 = math.exp %103 : vector<8x128xf32>
    %cst_34 = arith.constant 1.000000e+00 : f32
    %105 = vector.broadcast %cst_34 : f32 to vector<8x128xf32>
    %106 = arith.addf %105, %104 : vector<8x128xf32>
    %107 = arith.divf %105, %106 : vector<8x128xf32>
    %108 = arith.mulf %101, %95 : vector<8x128xf32>
    %109 = arith.addf %91, %108 : vector<8x128xf32>
    %110 = math.tanh %109 : vector<8x128xf32>
    %cst_35 = arith.constant 1.000000e+00 : f32
    %111 = vector.broadcast %cst_35 : f32 to vector<8x128xf32>
    %112 = arith.subf %111, %107 : vector<8x128xf32>
    %113 = arith.mulf %112, %110 : vector<8x128xf32>
    %114 = arith.mulf %107, %86 : vector<8x128xf32>
    %115 = arith.addf %113, %114 : vector<8x128xf32>
    %c0_36 = arith.constant 0 : index
    %c0_37 = arith.constant 0 : index
    %116 = vector.load %arg8[%c0_36, %c0_37] : memref<8x128xf32, #tpu.memory_space<vmem>>, vector<8x128xf32>
    tpu.vector_store %arg8[%c0_36, %c0_37], %115 {strides = array<i32>} : memref<8x128xf32, #tpu.memory_space<vmem>>, vector<8x128xf32>,
    %117 = arith.index_cast %c2_i32 : i32 to index
    %c0_38 = arith.constant 0 : index
    %c0_39 = arith.constant 0 : index
    %118 = vector.load %arg9[%117, %c0_38, %c0_39] : memref<8x8x128xf32, #tpu.memory_space<vmem>>, vector<1x8x128xf32>
    %119 = vector.shape_cast %118 : vector<1x8x128xf32> to vector<8x128xf32>
    %120 = vector.shape_cast %115 : vector<8x128xf32> to vector<1x8x128xf32>
    tpu.vector_store %arg9[%117, %c0_38, %c0_39], %120 {strides = array<i32>} : memref<8x8x128xf32, #tpu.memory_space<vmem>>, vector<1x8x128xf32>,
    %c3_i32 = arith.constant 3 : i32
    %121 = arith.index_cast %c3_i32 : i32 to index
    %c0_40 = arith.constant 0 : index
    %c0_41 = arith.constant 0 : index
    %122 = vector.load %arg2[%121, %c0_40, %c0_41] : memref<8x8x384xf32, #tpu.memory_space<vmem>>, vector<1x8x384xf32>
    %123 = vector.shape_cast %122 : vector<1x8x384xf32> to vector<8x384xf32>
    %c0_42 = arith.constant 0 : index
    %c0_43 = arith.constant 0 : index
    %124 = vector.load %arg8[%c0_42, %c0_43] : memref<8x128xf32, #tpu.memory_space<vmem>>, vector<8x128xf32>
    %125 = arith.truncf %124 : vector<8x128xf32> to vector<8x128xbf16>
    %cst_44 = arith.constant dense<0.000000e+00> : vector<8x384xf32>
    %126 = tpu.matmul %125, %3, %cst_44 {dimension_numbers = #tpu.dot_dimension_numbers<[1], [0], [0], [1], [0, 0, 1, 1], [], []>} : vector<8x128xbf16>, vector<128x384xbf16>, vector<8x384xf32> -> vector<8x384xf32>
    %127 = vector.extract_strided_slice %123 {offsets = [0, 0], sizes = [8, 128], strides = [1, 1]} : vector<8x384xf32> to vector<8x128xf32>
    %128 = vector.extract_strided_slice %123 {offsets = [0, 128], sizes = [8, 128], strides = [1, 1]} : vector<8x384xf32> to vector<8x128xf32>
    %129 = vector.extract_strided_slice %123 {offsets = [0, 256], sizes = [8, 128], strides = [1, 1]} : vector<8x384xf32> to vector<8x128xf32>
    %130 = vector.extract_strided_slice %126 {offsets = [0, 0], sizes = [8, 128], strides = [1, 1]} : vector<8x384xf32> to vector<8x128xf32>
    %131 = vector.extract_strided_slice %126 {offsets = [0, 128], sizes = [8, 128], strides = [1, 1]} : vector<8x384xf32> to vector<8x128xf32>
    %132 = vector.extract_strided_slice %126 {offsets = [0, 256], sizes = [8, 128], strides = [1, 1]} : vector<8x384xf32> to vector<8x128xf32>
    %133 = arith.addf %132, %6 : vector<8x128xf32>
    %134 = arith.addf %127, %130 : vector<8x128xf32>
    %135 = arith.negf %134 : vector<8x128xf32>
    %136 = math.exp %135 : vector<8x128xf32>
    %cst_45 = arith.constant 1.000000e+00 : f32
    %137 = vector.broadcast %cst_45 : f32 to vector<8x128xf32>
    %138 = arith.addf %137, %136 : vector<8x128xf32>
    %139 = arith.divf %137, %138 : vector<8x128xf32>
    %140 = arith.addf %128, %131 : vector<8x128xf32>
    %141 = arith.negf %140 : vector<8x128xf32>
    %142 = math.exp %141 : vector<8x128xf32>
    %cst_46 = arith.constant 1.000000e+00 : f32
    %143 = vector.broadcast %cst_46 : f32 to vector<8x128xf32>
    %144 = arith.addf %143, %142 : vector<8x128xf32>
    %145 = arith.divf %143, %144 : vector<8x128xf32>
    %146 = arith.mulf %139, %133 : vector<8x128xf32>
    %147 = arith.addf %129, %146 : vector<8x128xf32>
    %148 = math.tanh %147 : vector<8x128xf32>
    %cst_47 = arith.constant 1.000000e+00 : f32
    %149 = vector.broadcast %cst_47 : f32 to vector<8x128xf32>
    %150 = arith.subf %149, %145 : vector<8x128xf32>
    %151 = arith.mulf %150, %148 : vector<8x128xf32>
    %152 = arith.mulf %145, %124 : vector<8x128xf32>
    %153 = arith.addf %151, %152 : vector<8x128xf32>
    %c0_48 = arith.constant 0 : index
    %c0_49 = arith.constant 0 : index
    %154 = vector.load %arg8[%c0_48, %c0_49] : memref<8x128xf32, #tpu.memory_space<vmem>>, vector<8x128xf32>
    tpu.vector_store %arg8[%c0_48, %c0_49], %153 {strides = array<i32>} : memref<8x128xf32, #tpu.memory_space<vmem>>, vector<8x128xf32>,
    %155 = arith.index_cast %c3_i32 : i32 to index
    %c0_50 = arith.constant 0 : index
    %c0_51 = arith.constant 0 : index
    %156 = vector.load %arg9[%155, %c0_50, %c0_51] : memref<8x8x128xf32, #tpu.memory_space<vmem>>, vector<1x8x128xf32>
    %157 = vector.shape_cast %156 : vector<1x8x128xf32> to vector<8x128xf32>
    %158 = vector.shape_cast %153 : vector<8x128xf32> to vector<1x8x128xf32>
    tpu.vector_store %arg9[%155, %c0_50, %c0_51], %158 {strides = array<i32>} : memref<8x8x128xf32, #tpu.memory_space<vmem>>, vector<1x8x128xf32>,
    %c4_i32 = arith.constant 4 : i32
    %159 = arith.index_cast %c4_i32 : i32 to index
    %c0_52 = arith.constant 0 : index
    %c0_53 = arith.constant 0 : index
    %160 = vector.load %arg2[%159, %c0_52, %c0_53] : memref<8x8x384xf32, #tpu.memory_space<vmem>>, vector<1x8x384xf32>
    %161 = vector.shape_cast %160 : vector<1x8x384xf32> to vector<8x384xf32>
    %c0_54 = arith.constant 0 : index
    %c0_55 = arith.constant 0 : index
    %162 = vector.load %arg8[%c0_54, %c0_55] : memref<8x128xf32, #tpu.memory_space<vmem>>, vector<8x128xf32>
    %163 = arith.truncf %162 : vector<8x128xf32> to vector<8x128xbf16>
    %cst_56 = arith.constant dense<0.000000e+00> : vector<8x384xf32>
    %164 = tpu.matmul %163, %3, %cst_56 {dimension_numbers = #tpu.dot_dimension_numbers<[1], [0], [0], [1], [0, 0, 1, 1], [], []>} : vector<8x128xbf16>, vector<128x384xbf16>, vector<8x384xf32> -> vector<8x384xf32>
    %165 = vector.extract_strided_slice %161 {offsets = [0, 0], sizes = [8, 128], strides = [1, 1]} : vector<8x384xf32> to vector<8x128xf32>
    %166 = vector.extract_strided_slice %161 {offsets = [0, 128], sizes = [8, 128], strides = [1, 1]} : vector<8x384xf32> to vector<8x128xf32>
    %167 = vector.extract_strided_slice %161 {offsets = [0, 256], sizes = [8, 128], strides = [1, 1]} : vector<8x384xf32> to vector<8x128xf32>
    %168 = vector.extract_strided_slice %164 {offsets = [0, 0], sizes = [8, 128], strides = [1, 1]} : vector<8x384xf32> to vector<8x128xf32>
    %169 = vector.extract_strided_slice %164 {offsets = [0, 128], sizes = [8, 128], strides = [1, 1]} : vector<8x384xf32> to vector<8x128xf32>
    %170 = vector.extract_strided_slice %164 {offsets = [0, 256], sizes = [8, 128], strides = [1, 1]} : vector<8x384xf32> to vector<8x128xf32>
    %171 = arith.addf %170, %6 : vector<8x128xf32>
    %172 = arith.addf %165, %168 : vector<8x128xf32>
    %173 = arith.negf %172 : vector<8x128xf32>
    %174 = math.exp %173 : vector<8x128xf32>
    %cst_57 = arith.constant 1.000000e+00 : f32
    %175 = vector.broadcast %cst_57 : f32 to vector<8x128xf32>
    %176 = arith.addf %175, %174 : vector<8x128xf32>
    %177 = arith.divf %175, %176 : vector<8x128xf32>
    %178 = arith.addf %166, %169 : vector<8x128xf32>
    %179 = arith.negf %178 : vector<8x128xf32>
    %180 = math.exp %179 : vector<8x128xf32>
    %cst_58 = arith.constant 1.000000e+00 : f32
    %181 = vector.broadcast %cst_58 : f32 to vector<8x128xf32>
    %182 = arith.addf %181, %180 : vector<8x128xf32>
    %183 = arith.divf %181, %182 : vector<8x128xf32>
    %184 = arith.mulf %177, %171 : vector<8x128xf32>
    %185 = arith.addf %167, %184 : vector<8x128xf32>
    %186 = math.tanh %185 : vector<8x128xf32>
    %cst_59 = arith.constant 1.000000e+00 : f32
    %187 = vector.broadcast %cst_59 : f32 to vector<8x128xf32>
    %188 = arith.subf %187, %183 : vector<8x128xf32>
    %189 = arith.mulf %188, %186 : vector<8x128xf32>
    %190 = arith.mulf %183, %162 : vector<8x128xf32>
    %191 = arith.addf %189, %190 : vector<8x128xf32>
    %c0_60 = arith.constant 0 : index
    %c0_61 = arith.constant 0 : index
    %192 = vector.load %arg8[%c0_60, %c0_61] : memref<8x128xf32, #tpu.memory_space<vmem>>, vector<8x128xf32>
    tpu.vector_store %arg8[%c0_60, %c0_61], %191 {strides = array<i32>} : memref<8x128xf32, #tpu.memory_space<vmem>>, vector<8x128xf32>,
    %193 = arith.index_cast %c4_i32 : i32 to index
    %c0_62 = arith.constant 0 : index
    %c0_63 = arith.constant 0 : index
    %194 = vector.load %arg9[%193, %c0_62, %c0_63] : memref<8x8x128xf32, #tpu.memory_space<vmem>>, vector<1x8x128xf32>
    %195 = vector.shape_cast %194 : vector<1x8x128xf32> to vector<8x128xf32>
    %196 = vector.shape_cast %191 : vector<8x128xf32> to vector<1x8x128xf32>
    tpu.vector_store %arg9[%193, %c0_62, %c0_63], %196 {strides = array<i32>} : memref<8x8x128xf32, #tpu.memory_space<vmem>>, vector<1x8x128xf32>,
    %c5_i32 = arith.constant 5 : i32
    %197 = arith.index_cast %c5_i32 : i32 to index
    %c0_64 = arith.constant 0 : index
    %c0_65 = arith.constant 0 : index
    %198 = vector.load %arg2[%197, %c0_64, %c0_65] : memref<8x8x384xf32, #tpu.memory_space<vmem>>, vector<1x8x384xf32>
    %199 = vector.shape_cast %198 : vector<1x8x384xf32> to vector<8x384xf32>
    %c0_66 = arith.constant 0 : index
    %c0_67 = arith.constant 0 : index
    %200 = vector.load %arg8[%c0_66, %c0_67] : memref<8x128xf32, #tpu.memory_space<vmem>>, vector<8x128xf32>
    %201 = arith.truncf %200 : vector<8x128xf32> to vector<8x128xbf16>
    %cst_68 = arith.constant dense<0.000000e+00> : vector<8x384xf32>
    %202 = tpu.matmul %201, %3, %cst_68 {dimension_numbers = #tpu.dot_dimension_numbers<[1], [0], [0], [1], [0, 0, 1, 1], [], []>} : vector<8x128xbf16>, vector<128x384xbf16>, vector<8x384xf32> -> vector<8x384xf32>
    %203 = vector.extract_strided_slice %199 {offsets = [0, 0], sizes = [8, 128], strides = [1, 1]} : vector<8x384xf32> to vector<8x128xf32>
    %204 = vector.extract_strided_slice %199 {offsets = [0, 128], sizes = [8, 128], strides = [1, 1]} : vector<8x384xf32> to vector<8x128xf32>
    %205 = vector.extract_strided_slice %199 {offsets = [0, 256], sizes = [8, 128], strides = [1, 1]} : vector<8x384xf32> to vector<8x128xf32>
    %206 = vector.extract_strided_slice %202 {offsets = [0, 0], sizes = [8, 128], strides = [1, 1]} : vector<8x384xf32> to vector<8x128xf32>
    %207 = vector.extract_strided_slice %202 {offsets = [0, 128], sizes = [8, 128], strides = [1, 1]} : vector<8x384xf32> to vector<8x128xf32>
    %208 = vector.extract_strided_slice %202 {offsets = [0, 256], sizes = [8, 128], strides = [1, 1]} : vector<8x384xf32> to vector<8x128xf32>
    %209 = arith.addf %208, %6 : vector<8x128xf32>
    %210 = arith.addf %203, %206 : vector<8x128xf32>
    %211 = arith.negf %210 : vector<8x128xf32>
    %212 = math.exp %211 : vector<8x128xf32>
    %cst_69 = arith.constant 1.000000e+00 : f32
    %213 = vector.broadcast %cst_69 : f32 to vector<8x128xf32>
    %214 = arith.addf %213, %212 : vector<8x128xf32>
    %215 = arith.divf %213, %214 : vector<8x128xf32>
    %216 = arith.addf %204, %207 : vector<8x128xf32>
    %217 = arith.negf %216 : vector<8x128xf32>
    %218 = math.exp %217 : vector<8x128xf32>
    %cst_70 = arith.constant 1.000000e+00 : f32
    %219 = vector.broadcast %cst_70 : f32 to vector<8x128xf32>
    %220 = arith.addf %219, %218 : vector<8x128xf32>
    %221 = arith.divf %219, %220 : vector<8x128xf32>
    %222 = arith.mulf %215, %209 : vector<8x128xf32>
    %223 = arith.addf %205, %222 : vector<8x128xf32>
    %224 = math.tanh %223 : vector<8x128xf32>
    %cst_71 = arith.constant 1.000000e+00 : f32
    %225 = vector.broadcast %cst_71 : f32 to vector<8x128xf32>
    %226 = arith.subf %225, %221 : vector<8x128xf32>
    %227 = arith.mulf %226, %224 : vector<8x128xf32>
    %228 = arith.mulf %221, %200 : vector<8x128xf32>
    %229 = arith.addf %227, %228 : vector<8x128xf32>
    %c0_72 = arith.constant 0 : index
    %c0_73 = arith.constant 0 : index
    %230 = vector.load %arg8[%c0_72, %c0_73] : memref<8x128xf32, #tpu.memory_space<vmem>>, vector<8x128xf32>
    tpu.vector_store %arg8[%c0_72, %c0_73], %229 {strides = array<i32>} : memref<8x128xf32, #tpu.memory_space<vmem>>, vector<8x128xf32>,
    %231 = arith.index_cast %c5_i32 : i32 to index
    %c0_74 = arith.constant 0 : index
    %c0_75 = arith.constant 0 : index
    %232 = vector.load %arg9[%231, %c0_74, %c0_75] : memref<8x8x128xf32, #tpu.memory_space<vmem>>, vector<1x8x128xf32>
    %233 = vector.shape_cast %232 : vector<1x8x128xf32> to vector<8x128xf32>
    %234 = vector.shape_cast %229 : vector<8x128xf32> to vector<1x8x128xf32>
    tpu.vector_store %arg9[%231, %c0_74, %c0_75], %234 {strides = array<i32>} : memref<8x8x128xf32, #tpu.memory_space<vmem>>, vector<1x8x128xf32>,
    %c6_i32 = arith.constant 6 : i32
    %235 = arith.index_cast %c6_i32 : i32 to index
    %c0_76 = arith.constant 0 : index
    %c0_77 = arith.constant 0 : index
    %236 = vector.load %arg2[%235, %c0_76, %c0_77] : memref<8x8x384xf32, #tpu.memory_space<vmem>>, vector<1x8x384xf32>
    %237 = vector.shape_cast %236 : vector<1x8x384xf32> to vector<8x384xf32>
    %c0_78 = arith.constant 0 : index
    %c0_79 = arith.constant 0 : index
    %238 = vector.load %arg8[%c0_78, %c0_79] : memref<8x128xf32, #tpu.memory_space<vmem>>, vector<8x128xf32>
    %239 = arith.truncf %238 : vector<8x128xf32> to vector<8x128xbf16>
    %cst_80 = arith.constant dense<0.000000e+00> : vector<8x384xf32>
    %240 = tpu.matmul %239, %3, %cst_80 {dimension_numbers = #tpu.dot_dimension_numbers<[1], [0], [0], [1], [0, 0, 1, 1], [], []>} : vector<8x128xbf16>, vector<128x384xbf16>, vector<8x384xf32> -> vector<8x384xf32>
    %241 = vector.extract_strided_slice %237 {offsets = [0, 0], sizes = [8, 128], strides = [1, 1]} : vector<8x384xf32> to vector<8x128xf32>
    %242 = vector.extract_strided_slice %237 {offsets = [0, 128], sizes = [8, 128], strides = [1, 1]} : vector<8x384xf32> to vector<8x128xf32>
    %243 = vector.extract_strided_slice %237 {offsets = [0, 256], sizes = [8, 128], strides = [1, 1]} : vector<8x384xf32> to vector<8x128xf32>
    %244 = vector.extract_strided_slice %240 {offsets = [0, 0], sizes = [8, 128], strides = [1, 1]} : vector<8x384xf32> to vector<8x128xf32>
    %245 = vector.extract_strided_slice %240 {offsets = [0, 128], sizes = [8, 128], strides = [1, 1]} : vector<8x384xf32> to vector<8x128xf32>
    %246 = vector.extract_strided_slice %240 {offsets = [0, 256], sizes = [8, 128], strides = [1, 1]} : vector<8x384xf32> to vector<8x128xf32>
    %247 = arith.addf %246, %6 : vector<8x128xf32>
    %248 = arith.addf %241, %244 : vector<8x128xf32>
    %249 = arith.negf %248 : vector<8x128xf32>
    %250 = math.exp %249 : vector<8x128xf32>
    %cst_81 = arith.constant 1.000000e+00 : f32
    %251 = vector.broadcast %cst_81 : f32 to vector<8x128xf32>
    %252 = arith.addf %251, %250 : vector<8x128xf32>
    %253 = arith.divf %251, %252 : vector<8x128xf32>
    %254 = arith.addf %242, %245 : vector<8x128xf32>
    %255 = arith.negf %254 : vector<8x128xf32>
    %256 = math.exp %255 : vector<8x128xf32>
    %cst_82 = arith.constant 1.000000e+00 : f32
    %257 = vector.broadcast %cst_82 : f32 to vector<8x128xf32>
    %258 = arith.addf %257, %256 : vector<8x128xf32>
    %259 = arith.divf %257, %258 : vector<8x128xf32>
    %260 = arith.mulf %253, %247 : vector<8x128xf32>
    %261 = arith.addf %243, %260 : vector<8x128xf32>
    %262 = math.tanh %261 : vector<8x128xf32>
    %cst_83 = arith.constant 1.000000e+00 : f32
    %263 = vector.broadcast %cst_83 : f32 to vector<8x128xf32>
    %264 = arith.subf %263, %259 : vector<8x128xf32>
    %265 = arith.mulf %264, %262 : vector<8x128xf32>
    %266 = arith.mulf %259, %238 : vector<8x128xf32>
    %267 = arith.addf %265, %266 : vector<8x128xf32>
    %c0_84 = arith.constant 0 : index
    %c0_85 = arith.constant 0 : index
    %268 = vector.load %arg8[%c0_84, %c0_85] : memref<8x128xf32, #tpu.memory_space<vmem>>, vector<8x128xf32>
    tpu.vector_store %arg8[%c0_84, %c0_85], %267 {strides = array<i32>} : memref<8x128xf32, #tpu.memory_space<vmem>>, vector<8x128xf32>,
    %269 = arith.index_cast %c6_i32 : i32 to index
    %c0_86 = arith.constant 0 : index
    %c0_87 = arith.constant 0 : index
    %270 = vector.load %arg9[%269, %c0_86, %c0_87] : memref<8x8x128xf32, #tpu.memory_space<vmem>>, vector<1x8x128xf32>
    %271 = vector.shape_cast %270 : vector<1x8x128xf32> to vector<8x128xf32>
    %272 = vector.shape_cast %267 : vector<8x128xf32> to vector<1x8x128xf32>
    tpu.vector_store %arg9[%269, %c0_86, %c0_87], %272 {strides = array<i32>} : memref<8x8x128xf32, #tpu.memory_space<vmem>>, vector<1x8x128xf32>,
    %c7_i32 = arith.constant 7 : i32
    %273 = arith.index_cast %c7_i32 : i32 to index
    %c0_88 = arith.constant 0 : index
    %c0_89 = arith.constant 0 : index
    %274 = vector.load %arg2[%273, %c0_88, %c0_89] : memref<8x8x384xf32, #tpu.memory_space<vmem>>, vector<1x8x384xf32>
    %275 = vector.shape_cast %274 : vector<1x8x384xf32> to vector<8x384xf32>
    %c0_90 = arith.constant 0 : index
    %c0_91 = arith.constant 0 : index
    %276 = vector.load %arg8[%c0_90, %c0_91] : memref<8x128xf32, #tpu.memory_space<vmem>>, vector<8x128xf32>
    %277 = arith.truncf %276 : vector<8x128xf32> to vector<8x128xbf16>
    %cst_92 = arith.constant dense<0.000000e+00> : vector<8x384xf32>
    %278 = tpu.matmul %277, %3, %cst_92 {dimension_numbers = #tpu.dot_dimension_numbers<[1], [0], [0], [1], [0, 0, 1, 1], [], []>} : vector<8x128xbf16>, vector<128x384xbf16>, vector<8x384xf32> -> vector<8x384xf32>
    %279 = vector.extract_strided_slice %275 {offsets = [0, 0], sizes = [8, 128], strides = [1, 1]} : vector<8x384xf32> to vector<8x128xf32>
    %280 = vector.extract_strided_slice %275 {offsets = [0, 128], sizes = [8, 128], strides = [1, 1]} : vector<8x384xf32> to vector<8x128xf32>
    %281 = vector.extract_strided_slice %275 {offsets = [0, 256], sizes = [8, 128], strides = [1, 1]} : vector<8x384xf32> to vector<8x128xf32>
    %282 = vector.extract_strided_slice %278 {offsets = [0, 0], sizes = [8, 128], strides = [1, 1]} : vector<8x384xf32> to vector<8x128xf32>
    %283 = vector.extract_strided_slice %278 {offsets = [0, 128], sizes = [8, 128], strides = [1, 1]} : vector<8x384xf32> to vector<8x128xf32>
    %284 = vector.extract_strided_slice %278 {offsets = [0, 256], sizes = [8, 128], strides = [1, 1]} : vector<8x384xf32> to vector<8x128xf32>
    %285 = arith.addf %284, %6 : vector<8x128xf32>
    %286 = arith.addf %279, %282 : vector<8x128xf32>
    %287 = arith.negf %286 : vector<8x128xf32>
    %288 = math.exp %287 : vector<8x128xf32>
    %cst_93 = arith.constant 1.000000e+00 : f32
    %289 = vector.broadcast %cst_93 : f32 to vector<8x128xf32>
    %290 = arith.addf %289, %288 : vector<8x128xf32>
    %291 = arith.divf %289, %290 : vector<8x128xf32>
    %292 = arith.addf %280, %283 : vector<8x128xf32>
    %293 = arith.negf %292 : vector<8x128xf32>
    %294 = math.exp %293 : vector<8x128xf32>
    %cst_94 = arith.constant 1.000000e+00 : f32
    %295 = vector.broadcast %cst_94 : f32 to vector<8x128xf32>
    %296 = arith.addf %295, %294 : vector<8x128xf32>
    %297 = arith.divf %295, %296 : vector<8x128xf32>
    %298 = arith.mulf %291, %285 : vector<8x128xf32>
    %299 = arith.addf %281, %298 : vector<8x128xf32>
    %300 = math.tanh %299 : vector<8x128xf32>
    %cst_95 = arith.constant 1.000000e+00 : f32
    %301 = vector.broadcast %cst_95 : f32 to vector<8x128xf32>
    %302 = arith.subf %301, %297 : vector<8x128xf32>
    %303 = arith.mulf %302, %300 : vector<8x128xf32>
    %304 = arith.mulf %297, %276 : vector<8x128xf32>
    %305 = arith.addf %303, %304 : vector<8x128xf32>
    %c0_96 = arith.constant 0 : index
    %c0_97 = arith.constant 0 : index
    %306 = vector.load %arg8[%c0_96, %c0_97] : memref<8x128xf32, #tpu.memory_space<vmem>>, vector<8x128xf32>
    tpu.vector_store %arg8[%c0_96, %c0_97], %305 {strides = array<i32>} : memref<8x128xf32, #tpu.memory_space<vmem>>, vector<8x128xf32>,
    %307 = arith.index_cast %c7_i32 : i32 to index
    %c0_98 = arith.constant 0 : index
    %c0_99 = arith.constant 0 : index
    %308 = vector.load %arg9[%307, %c0_98, %c0_99] : memref<8x8x128xf32, #tpu.memory_space<vmem>>, vector<1x8x128xf32>
    %309 = vector.shape_cast %308 : vector<1x8x128xf32> to vector<8x128xf32>
    %310 = vector.shape_cast %305 : vector<8x128xf32> to vector<1x8x128xf32>
    tpu.vector_store %arg9[%307, %c0_98, %c0_99], %310 {strides = array<i32>} : memref<8x8x128xf32, #tpu.memory_space<vmem>>, vector<1x8x128xf32>,
    %c8_i32 = arith.constant 8 : i32
    %c0_100 = arith.constant 0 : index
    %c0_101 = arith.constant 0 : index
    %c0_102 = arith.constant 0 : index
    %311 = vector.load %arg9[%c0_100, %c0_101, %c0_102] : memref<8x8x128xf32, #tpu.memory_space<vmem>>, vector<8x8x128xf32>
    %312 = vector.shape_cast %311 : vector<8x8x128xf32> to vector<64x128xf32>
    %313 = arith.truncf %312 : vector<64x128xf32> to vector<64x128xbf16>
    %c0_103 = arith.constant 0 : index
    %c0_104 = arith.constant 0 : index
    %314 = vector.load %arg5[%c0_103, %c0_104] : memref<128x384xbf16, #tpu.memory_space<vmem>>, vector<128x384xbf16>
    %cst_105 = arith.constant dense<0.000000e+00> : vector<64x384xf32>
    %315 = tpu.matmul %313, %314, %cst_105 {dimension_numbers = #tpu.dot_dimension_numbers<[1], [0], [0], [1], [0, 0, 1, 1], [], []>} : vector<64x128xbf16>, vector<128x384xbf16>, vector<64x384xf32> -> vector<64x384xf32>
    %c0_106 = arith.constant 0 : index
    %c0_107 = arith.constant 0 : index
    %316 = vector.load %arg6[%c0_106, %c0_107] : memref<1x384xf32, #tpu.memory_space<vmem>>, vector<1x384xf32>
    %317 = vector.broadcast %316 : vector<1x384xf32> to vector<64x384xf32>
    %318 = arith.addf %315, %317 : vector<64x384xf32>
    %319 = vector.shape_cast %318 : vector<64x384xf32> to vector<8x8x384xf32>
    %c0_108 = arith.constant 0 : index
    %c0_109 = arith.constant 0 : index
    %c0_110 = arith.constant 0 : index
    %320 = vector.load %arg7[%c0_108, %c0_109, %c0_110] : memref<8x8x384xf32, #tpu.memory_space<vmem>>, vector<8x8x384xf32>
    tpu.vector_store %arg7[%c0_108, %c0_109, %c0_110], %319 {strides = array<i32>} : memref<8x8x384xf32, #tpu.memory_space<vmem>>, vector<8x8x384xf32>,
    return
  }
  func.func @transform_0(%arg0: i32, %arg1: i32) -> (i32, i32, i32) {
    %c0_i32 = arith.constant 0 : i32
    %c0_i32_0 = arith.constant 0 : i32
    return %arg1, %arg0, %c0_i32 : i32, i32, i32
  }
  func.func @transform_1(%arg0: i32, %arg1: i32) -> (i32, i32) {
    %c0_i32 = arith.constant 0 : i32
    %c0_i32_0 = arith.constant 0 : i32
    %c0_i32_1 = arith.constant 0 : i32
    return %c0_i32, %c0_i32_0 : i32, i32
  }
  func.func @transform_2(%arg0: i32, %arg1: i32) -> (i32, i32) {
    %c0_i32 = arith.constant 0 : i32
    %c0_i32_0 = arith.constant 0 : i32
    %c0_i32_1 = arith.constant 0 : i32
    return %c0_i32, %c0_i32_0 : i32, i32
  }
  func.func @transform_3(%arg0: i32, %arg1: i32) -> (i32, i32) {
    %c0_i32 = arith.constant 0 : i32
    %c0_i32_0 = arith.constant 0 : i32
    %c0_i32_1 = arith.constant 0 : i32
    return %c0_i32, %c0_i32_0 : i32, i32
  }
  func.func @transform_4(%arg0: i32, %arg1: i32) -> (i32, i32) {
    %c0_i32 = arith.constant 0 : i32
    %c0_i32_0 = arith.constant 0 : i32
    %c0_i32_1 = arith.constant 0 : i32
    return %c0_i32, %c0_i32_0 : i32, i32
  }
  func.func @transform_5(%arg0: i32, %arg1: i32) -> (i32, i32, i32) {
    %c0_i32 = arith.constant 0 : i32
    %c0_i32_0 = arith.constant 0 : i32
    return %arg1, %arg0, %c0_i32 : i32, i32, i32
  }
}

module attributes {stable_mosaic.version = 11 : i64} {
  func.func @_gru_head_kernel(%arg0: i32, %arg1: i32, %arg2: memref<8x8x384xf32, #tpu.memory_space<vmem>>, %arg3: memref<128x384xbf16, #tpu.memory_space<vmem>>, %arg4: memref<1x128xf32, #tpu.memory_space<vmem>>, %arg5: memref<128x128xbf16, #tpu.memory_space<vmem>>, %arg6: memref<1x128xf32, #tpu.memory_space<vmem>>, %arg7: memref<8x128xf32, #tpu.memory_space<vmem>>, %arg8: memref<8x128xf32, #tpu.memory_space<vmem>>) attributes {dimension_semantics = [#tpu.dimension_semantics<parallel>, #tpu.dimension_semantics<arbitrary>], iteration_bounds = array<i64: 1, 1>, scalar_prefetch = 0 : i64, scratch_operands = 1 : i64, tpu.core_type = #tpu.core_type<tc>, window_params = [{transform_indices = @transform_0, window_bounds = array<i64: 8, 8, 384>}, {pipeline_mode = #tpu.pipeline_mode<synchronous>, transform_indices = @transform_1, window_bounds = array<i64: 128, 384>}, {pipeline_mode = #tpu.pipeline_mode<synchronous>, transform_indices = @transform_2, window_bounds = array<i64: 1, 128>}, {pipeline_mode = #tpu.pipeline_mode<synchronous>, transform_indices = @transform_3, window_bounds = array<i64: 128, 128>}, {pipeline_mode = #tpu.pipeline_mode<synchronous>, transform_indices = @transform_4, window_bounds = array<i64: 1, 128>}, {transform_indices = @transform_5, window_bounds = array<i64: 8, 128>}]} {
    %c0_i32 = arith.constant 0 : i32
    %0 = arith.cmpi eq, %arg1, %c0_i32 : i32
    %1 = arith.extui %0 : i1 to i32
    %c0_i32_0 = arith.constant 0 : i32
    %2 = arith.cmpi ne, %1, %c0_i32_0 : i32
    scf.if %2 {
      %cst_86 = arith.constant 0.000000e+00 : f32
      %282 = vector.broadcast %cst_86 : f32 to vector<8x128xf32>
      %c0_87 = arith.constant 0 : index
      %c0_88 = arith.constant 0 : index
      %283 = vector.load %arg8[%c0_87, %c0_88] : memref<8x128xf32, #tpu.memory_space<vmem>>, vector<8x128xf32>
      tpu.vector_store %arg8[%c0_87, %c0_88], %282 {strides = array<i32>} : memref<8x128xf32, #tpu.memory_space<vmem>>, vector<8x128xf32>,
    } else {
    }
    %c0 = arith.constant 0 : index
    %c0_1 = arith.constant 0 : index
    %3 = vector.load %arg3[%c0, %c0_1] : memref<128x384xbf16, #tpu.memory_space<vmem>>, vector<128x384xbf16>
    %c0_2 = arith.constant 0 : index
    %c0_3 = arith.constant 0 : index
    %4 = vector.load %arg4[%c0_2, %c0_3] : memref<1x128xf32, #tpu.memory_space<vmem>>, vector<1x128xf32>
    %5 = vector.shape_cast %4 : vector<1x128xf32> to vector<1x128xf32>
    %6 = vector.broadcast %5 : vector<1x128xf32> to vector<8x128xf32>
    %c0_i32_4 = arith.constant 0 : i32
    %7 = arith.index_cast %c0_i32_4 : i32 to index
    %c0_5 = arith.constant 0 : index
    %c0_6 = arith.constant 0 : index
    %8 = vector.load %arg2[%7, %c0_5, %c0_6] : memref<8x8x384xf32, #tpu.memory_space<vmem>>, vector<1x8x384xf32>
    %9 = vector.shape_cast %8 : vector<1x8x384xf32> to vector<8x384xf32>
    %c0_7 = arith.constant 0 : index
    %c0_8 = arith.constant 0 : index
    %10 = vector.load %arg8[%c0_7, %c0_8] : memref<8x128xf32, #tpu.memory_space<vmem>>, vector<8x128xf32>
    %11 = arith.truncf %10 : vector<8x128xf32> to vector<8x128xbf16>
    %cst = arith.constant dense<0.000000e+00> : vector<8x384xf32>
    %12 = tpu.matmul %11, %3, %cst {dimension_numbers = #tpu.dot_dimension_numbers<[1], [0], [0], [1], [0, 0, 1, 1], [], []>} : vector<8x128xbf16>, vector<128x384xbf16>, vector<8x384xf32> -> vector<8x384xf32>
    %13 = vector.extract_strided_slice %9 {offsets = [0, 0], sizes = [8, 128], strides = [1, 1]} : vector<8x384xf32> to vector<8x128xf32>
    %14 = vector.extract_strided_slice %9 {offsets = [0, 128], sizes = [8, 128], strides = [1, 1]} : vector<8x384xf32> to vector<8x128xf32>
    %15 = vector.extract_strided_slice %9 {offsets = [0, 256], sizes = [8, 128], strides = [1, 1]} : vector<8x384xf32> to vector<8x128xf32>
    %16 = vector.extract_strided_slice %12 {offsets = [0, 0], sizes = [8, 128], strides = [1, 1]} : vector<8x384xf32> to vector<8x128xf32>
    %17 = vector.extract_strided_slice %12 {offsets = [0, 128], sizes = [8, 128], strides = [1, 1]} : vector<8x384xf32> to vector<8x128xf32>
    %18 = vector.extract_strided_slice %12 {offsets = [0, 256], sizes = [8, 128], strides = [1, 1]} : vector<8x384xf32> to vector<8x128xf32>
    %19 = arith.addf %18, %6 : vector<8x128xf32>
    %20 = arith.addf %13, %16 : vector<8x128xf32>
    %21 = arith.negf %20 : vector<8x128xf32>
    %22 = math.exp %21 : vector<8x128xf32>
    %cst_9 = arith.constant 1.000000e+00 : f32
    %23 = vector.broadcast %cst_9 : f32 to vector<8x128xf32>
    %24 = arith.addf %23, %22 : vector<8x128xf32>
    %25 = arith.divf %23, %24 : vector<8x128xf32>
    %26 = arith.addf %14, %17 : vector<8x128xf32>
    %27 = arith.negf %26 : vector<8x128xf32>
    %28 = math.exp %27 : vector<8x128xf32>
    %cst_10 = arith.constant 1.000000e+00 : f32
    %29 = vector.broadcast %cst_10 : f32 to vector<8x128xf32>
    %30 = arith.addf %29, %28 : vector<8x128xf32>
    %31 = arith.divf %29, %30 : vector<8x128xf32>
    %32 = arith.mulf %25, %19 : vector<8x128xf32>
    %33 = arith.addf %15, %32 : vector<8x128xf32>
    %34 = math.tanh %33 : vector<8x128xf32>
    %cst_11 = arith.constant 1.000000e+00 : f32
    %35 = vector.broadcast %cst_11 : f32 to vector<8x128xf32>
    %36 = arith.subf %35, %31 : vector<8x128xf32>
    %37 = arith.mulf %36, %34 : vector<8x128xf32>
    %38 = arith.mulf %31, %10 : vector<8x128xf32>
    %39 = arith.addf %37, %38 : vector<8x128xf32>
    %c0_12 = arith.constant 0 : index
    %c0_13 = arith.constant 0 : index
    %40 = vector.load %arg8[%c0_12, %c0_13] : memref<8x128xf32, #tpu.memory_space<vmem>>, vector<8x128xf32>
    tpu.vector_store %arg8[%c0_12, %c0_13], %39 {strides = array<i32>} : memref<8x128xf32, #tpu.memory_space<vmem>>, vector<8x128xf32>,
    %c1_i32 = arith.constant 1 : i32
    %41 = arith.index_cast %c1_i32 : i32 to index
    %c0_14 = arith.constant 0 : index
    %c0_15 = arith.constant 0 : index
    %42 = vector.load %arg2[%41, %c0_14, %c0_15] : memref<8x8x384xf32, #tpu.memory_space<vmem>>, vector<1x8x384xf32>
    %43 = vector.shape_cast %42 : vector<1x8x384xf32> to vector<8x384xf32>
    %c0_16 = arith.constant 0 : index
    %c0_17 = arith.constant 0 : index
    %44 = vector.load %arg8[%c0_16, %c0_17] : memref<8x128xf32, #tpu.memory_space<vmem>>, vector<8x128xf32>
    %45 = arith.truncf %44 : vector<8x128xf32> to vector<8x128xbf16>
    %cst_18 = arith.constant dense<0.000000e+00> : vector<8x384xf32>
    %46 = tpu.matmul %45, %3, %cst_18 {dimension_numbers = #tpu.dot_dimension_numbers<[1], [0], [0], [1], [0, 0, 1, 1], [], []>} : vector<8x128xbf16>, vector<128x384xbf16>, vector<8x384xf32> -> vector<8x384xf32>
    %47 = vector.extract_strided_slice %43 {offsets = [0, 0], sizes = [8, 128], strides = [1, 1]} : vector<8x384xf32> to vector<8x128xf32>
    %48 = vector.extract_strided_slice %43 {offsets = [0, 128], sizes = [8, 128], strides = [1, 1]} : vector<8x384xf32> to vector<8x128xf32>
    %49 = vector.extract_strided_slice %43 {offsets = [0, 256], sizes = [8, 128], strides = [1, 1]} : vector<8x384xf32> to vector<8x128xf32>
    %50 = vector.extract_strided_slice %46 {offsets = [0, 0], sizes = [8, 128], strides = [1, 1]} : vector<8x384xf32> to vector<8x128xf32>
    %51 = vector.extract_strided_slice %46 {offsets = [0, 128], sizes = [8, 128], strides = [1, 1]} : vector<8x384xf32> to vector<8x128xf32>
    %52 = vector.extract_strided_slice %46 {offsets = [0, 256], sizes = [8, 128], strides = [1, 1]} : vector<8x384xf32> to vector<8x128xf32>
    %53 = arith.addf %52, %6 : vector<8x128xf32>
    %54 = arith.addf %47, %50 : vector<8x128xf32>
    %55 = arith.negf %54 : vector<8x128xf32>
    %56 = math.exp %55 : vector<8x128xf32>
    %cst_19 = arith.constant 1.000000e+00 : f32
    %57 = vector.broadcast %cst_19 : f32 to vector<8x128xf32>
    %58 = arith.addf %57, %56 : vector<8x128xf32>
    %59 = arith.divf %57, %58 : vector<8x128xf32>
    %60 = arith.addf %48, %51 : vector<8x128xf32>
    %61 = arith.negf %60 : vector<8x128xf32>
    %62 = math.exp %61 : vector<8x128xf32>
    %cst_20 = arith.constant 1.000000e+00 : f32
    %63 = vector.broadcast %cst_20 : f32 to vector<8x128xf32>
    %64 = arith.addf %63, %62 : vector<8x128xf32>
    %65 = arith.divf %63, %64 : vector<8x128xf32>
    %66 = arith.mulf %59, %53 : vector<8x128xf32>
    %67 = arith.addf %49, %66 : vector<8x128xf32>
    %68 = math.tanh %67 : vector<8x128xf32>
    %cst_21 = arith.constant 1.000000e+00 : f32
    %69 = vector.broadcast %cst_21 : f32 to vector<8x128xf32>
    %70 = arith.subf %69, %65 : vector<8x128xf32>
    %71 = arith.mulf %70, %68 : vector<8x128xf32>
    %72 = arith.mulf %65, %44 : vector<8x128xf32>
    %73 = arith.addf %71, %72 : vector<8x128xf32>
    %c0_22 = arith.constant 0 : index
    %c0_23 = arith.constant 0 : index
    %74 = vector.load %arg8[%c0_22, %c0_23] : memref<8x128xf32, #tpu.memory_space<vmem>>, vector<8x128xf32>
    tpu.vector_store %arg8[%c0_22, %c0_23], %73 {strides = array<i32>} : memref<8x128xf32, #tpu.memory_space<vmem>>, vector<8x128xf32>,
    %c2_i32 = arith.constant 2 : i32
    %75 = arith.index_cast %c2_i32 : i32 to index
    %c0_24 = arith.constant 0 : index
    %c0_25 = arith.constant 0 : index
    %76 = vector.load %arg2[%75, %c0_24, %c0_25] : memref<8x8x384xf32, #tpu.memory_space<vmem>>, vector<1x8x384xf32>
    %77 = vector.shape_cast %76 : vector<1x8x384xf32> to vector<8x384xf32>
    %c0_26 = arith.constant 0 : index
    %c0_27 = arith.constant 0 : index
    %78 = vector.load %arg8[%c0_26, %c0_27] : memref<8x128xf32, #tpu.memory_space<vmem>>, vector<8x128xf32>
    %79 = arith.truncf %78 : vector<8x128xf32> to vector<8x128xbf16>
    %cst_28 = arith.constant dense<0.000000e+00> : vector<8x384xf32>
    %80 = tpu.matmul %79, %3, %cst_28 {dimension_numbers = #tpu.dot_dimension_numbers<[1], [0], [0], [1], [0, 0, 1, 1], [], []>} : vector<8x128xbf16>, vector<128x384xbf16>, vector<8x384xf32> -> vector<8x384xf32>
    %81 = vector.extract_strided_slice %77 {offsets = [0, 0], sizes = [8, 128], strides = [1, 1]} : vector<8x384xf32> to vector<8x128xf32>
    %82 = vector.extract_strided_slice %77 {offsets = [0, 128], sizes = [8, 128], strides = [1, 1]} : vector<8x384xf32> to vector<8x128xf32>
    %83 = vector.extract_strided_slice %77 {offsets = [0, 256], sizes = [8, 128], strides = [1, 1]} : vector<8x384xf32> to vector<8x128xf32>
    %84 = vector.extract_strided_slice %80 {offsets = [0, 0], sizes = [8, 128], strides = [1, 1]} : vector<8x384xf32> to vector<8x128xf32>
    %85 = vector.extract_strided_slice %80 {offsets = [0, 128], sizes = [8, 128], strides = [1, 1]} : vector<8x384xf32> to vector<8x128xf32>
    %86 = vector.extract_strided_slice %80 {offsets = [0, 256], sizes = [8, 128], strides = [1, 1]} : vector<8x384xf32> to vector<8x128xf32>
    %87 = arith.addf %86, %6 : vector<8x128xf32>
    %88 = arith.addf %81, %84 : vector<8x128xf32>
    %89 = arith.negf %88 : vector<8x128xf32>
    %90 = math.exp %89 : vector<8x128xf32>
    %cst_29 = arith.constant 1.000000e+00 : f32
    %91 = vector.broadcast %cst_29 : f32 to vector<8x128xf32>
    %92 = arith.addf %91, %90 : vector<8x128xf32>
    %93 = arith.divf %91, %92 : vector<8x128xf32>
    %94 = arith.addf %82, %85 : vector<8x128xf32>
    %95 = arith.negf %94 : vector<8x128xf32>
    %96 = math.exp %95 : vector<8x128xf32>
    %cst_30 = arith.constant 1.000000e+00 : f32
    %97 = vector.broadcast %cst_30 : f32 to vector<8x128xf32>
    %98 = arith.addf %97, %96 : vector<8x128xf32>
    %99 = arith.divf %97, %98 : vector<8x128xf32>
    %100 = arith.mulf %93, %87 : vector<8x128xf32>
    %101 = arith.addf %83, %100 : vector<8x128xf32>
    %102 = math.tanh %101 : vector<8x128xf32>
    %cst_31 = arith.constant 1.000000e+00 : f32
    %103 = vector.broadcast %cst_31 : f32 to vector<8x128xf32>
    %104 = arith.subf %103, %99 : vector<8x128xf32>
    %105 = arith.mulf %104, %102 : vector<8x128xf32>
    %106 = arith.mulf %99, %78 : vector<8x128xf32>
    %107 = arith.addf %105, %106 : vector<8x128xf32>
    %c0_32 = arith.constant 0 : index
    %c0_33 = arith.constant 0 : index
    %108 = vector.load %arg8[%c0_32, %c0_33] : memref<8x128xf32, #tpu.memory_space<vmem>>, vector<8x128xf32>
    tpu.vector_store %arg8[%c0_32, %c0_33], %107 {strides = array<i32>} : memref<8x128xf32, #tpu.memory_space<vmem>>, vector<8x128xf32>,
    %c3_i32 = arith.constant 3 : i32
    %109 = arith.index_cast %c3_i32 : i32 to index
    %c0_34 = arith.constant 0 : index
    %c0_35 = arith.constant 0 : index
    %110 = vector.load %arg2[%109, %c0_34, %c0_35] : memref<8x8x384xf32, #tpu.memory_space<vmem>>, vector<1x8x384xf32>
    %111 = vector.shape_cast %110 : vector<1x8x384xf32> to vector<8x384xf32>
    %c0_36 = arith.constant 0 : index
    %c0_37 = arith.constant 0 : index
    %112 = vector.load %arg8[%c0_36, %c0_37] : memref<8x128xf32, #tpu.memory_space<vmem>>, vector<8x128xf32>
    %113 = arith.truncf %112 : vector<8x128xf32> to vector<8x128xbf16>
    %cst_38 = arith.constant dense<0.000000e+00> : vector<8x384xf32>
    %114 = tpu.matmul %113, %3, %cst_38 {dimension_numbers = #tpu.dot_dimension_numbers<[1], [0], [0], [1], [0, 0, 1, 1], [], []>} : vector<8x128xbf16>, vector<128x384xbf16>, vector<8x384xf32> -> vector<8x384xf32>
    %115 = vector.extract_strided_slice %111 {offsets = [0, 0], sizes = [8, 128], strides = [1, 1]} : vector<8x384xf32> to vector<8x128xf32>
    %116 = vector.extract_strided_slice %111 {offsets = [0, 128], sizes = [8, 128], strides = [1, 1]} : vector<8x384xf32> to vector<8x128xf32>
    %117 = vector.extract_strided_slice %111 {offsets = [0, 256], sizes = [8, 128], strides = [1, 1]} : vector<8x384xf32> to vector<8x128xf32>
    %118 = vector.extract_strided_slice %114 {offsets = [0, 0], sizes = [8, 128], strides = [1, 1]} : vector<8x384xf32> to vector<8x128xf32>
    %119 = vector.extract_strided_slice %114 {offsets = [0, 128], sizes = [8, 128], strides = [1, 1]} : vector<8x384xf32> to vector<8x128xf32>
    %120 = vector.extract_strided_slice %114 {offsets = [0, 256], sizes = [8, 128], strides = [1, 1]} : vector<8x384xf32> to vector<8x128xf32>
    %121 = arith.addf %120, %6 : vector<8x128xf32>
    %122 = arith.addf %115, %118 : vector<8x128xf32>
    %123 = arith.negf %122 : vector<8x128xf32>
    %124 = math.exp %123 : vector<8x128xf32>
    %cst_39 = arith.constant 1.000000e+00 : f32
    %125 = vector.broadcast %cst_39 : f32 to vector<8x128xf32>
    %126 = arith.addf %125, %124 : vector<8x128xf32>
    %127 = arith.divf %125, %126 : vector<8x128xf32>
    %128 = arith.addf %116, %119 : vector<8x128xf32>
    %129 = arith.negf %128 : vector<8x128xf32>
    %130 = math.exp %129 : vector<8x128xf32>
    %cst_40 = arith.constant 1.000000e+00 : f32
    %131 = vector.broadcast %cst_40 : f32 to vector<8x128xf32>
    %132 = arith.addf %131, %130 : vector<8x128xf32>
    %133 = arith.divf %131, %132 : vector<8x128xf32>
    %134 = arith.mulf %127, %121 : vector<8x128xf32>
    %135 = arith.addf %117, %134 : vector<8x128xf32>
    %136 = math.tanh %135 : vector<8x128xf32>
    %cst_41 = arith.constant 1.000000e+00 : f32
    %137 = vector.broadcast %cst_41 : f32 to vector<8x128xf32>
    %138 = arith.subf %137, %133 : vector<8x128xf32>
    %139 = arith.mulf %138, %136 : vector<8x128xf32>
    %140 = arith.mulf %133, %112 : vector<8x128xf32>
    %141 = arith.addf %139, %140 : vector<8x128xf32>
    %c0_42 = arith.constant 0 : index
    %c0_43 = arith.constant 0 : index
    %142 = vector.load %arg8[%c0_42, %c0_43] : memref<8x128xf32, #tpu.memory_space<vmem>>, vector<8x128xf32>
    tpu.vector_store %arg8[%c0_42, %c0_43], %141 {strides = array<i32>} : memref<8x128xf32, #tpu.memory_space<vmem>>, vector<8x128xf32>,
    %c4_i32 = arith.constant 4 : i32
    %143 = arith.index_cast %c4_i32 : i32 to index
    %c0_44 = arith.constant 0 : index
    %c0_45 = arith.constant 0 : index
    %144 = vector.load %arg2[%143, %c0_44, %c0_45] : memref<8x8x384xf32, #tpu.memory_space<vmem>>, vector<1x8x384xf32>
    %145 = vector.shape_cast %144 : vector<1x8x384xf32> to vector<8x384xf32>
    %c0_46 = arith.constant 0 : index
    %c0_47 = arith.constant 0 : index
    %146 = vector.load %arg8[%c0_46, %c0_47] : memref<8x128xf32, #tpu.memory_space<vmem>>, vector<8x128xf32>
    %147 = arith.truncf %146 : vector<8x128xf32> to vector<8x128xbf16>
    %cst_48 = arith.constant dense<0.000000e+00> : vector<8x384xf32>
    %148 = tpu.matmul %147, %3, %cst_48 {dimension_numbers = #tpu.dot_dimension_numbers<[1], [0], [0], [1], [0, 0, 1, 1], [], []>} : vector<8x128xbf16>, vector<128x384xbf16>, vector<8x384xf32> -> vector<8x384xf32>
    %149 = vector.extract_strided_slice %145 {offsets = [0, 0], sizes = [8, 128], strides = [1, 1]} : vector<8x384xf32> to vector<8x128xf32>
    %150 = vector.extract_strided_slice %145 {offsets = [0, 128], sizes = [8, 128], strides = [1, 1]} : vector<8x384xf32> to vector<8x128xf32>
    %151 = vector.extract_strided_slice %145 {offsets = [0, 256], sizes = [8, 128], strides = [1, 1]} : vector<8x384xf32> to vector<8x128xf32>
    %152 = vector.extract_strided_slice %148 {offsets = [0, 0], sizes = [8, 128], strides = [1, 1]} : vector<8x384xf32> to vector<8x128xf32>
    %153 = vector.extract_strided_slice %148 {offsets = [0, 128], sizes = [8, 128], strides = [1, 1]} : vector<8x384xf32> to vector<8x128xf32>
    %154 = vector.extract_strided_slice %148 {offsets = [0, 256], sizes = [8, 128], strides = [1, 1]} : vector<8x384xf32> to vector<8x128xf32>
    %155 = arith.addf %154, %6 : vector<8x128xf32>
    %156 = arith.addf %149, %152 : vector<8x128xf32>
    %157 = arith.negf %156 : vector<8x128xf32>
    %158 = math.exp %157 : vector<8x128xf32>
    %cst_49 = arith.constant 1.000000e+00 : f32
    %159 = vector.broadcast %cst_49 : f32 to vector<8x128xf32>
    %160 = arith.addf %159, %158 : vector<8x128xf32>
    %161 = arith.divf %159, %160 : vector<8x128xf32>
    %162 = arith.addf %150, %153 : vector<8x128xf32>
    %163 = arith.negf %162 : vector<8x128xf32>
    %164 = math.exp %163 : vector<8x128xf32>
    %cst_50 = arith.constant 1.000000e+00 : f32
    %165 = vector.broadcast %cst_50 : f32 to vector<8x128xf32>
    %166 = arith.addf %165, %164 : vector<8x128xf32>
    %167 = arith.divf %165, %166 : vector<8x128xf32>
    %168 = arith.mulf %161, %155 : vector<8x128xf32>
    %169 = arith.addf %151, %168 : vector<8x128xf32>
    %170 = math.tanh %169 : vector<8x128xf32>
    %cst_51 = arith.constant 1.000000e+00 : f32
    %171 = vector.broadcast %cst_51 : f32 to vector<8x128xf32>
    %172 = arith.subf %171, %167 : vector<8x128xf32>
    %173 = arith.mulf %172, %170 : vector<8x128xf32>
    %174 = arith.mulf %167, %146 : vector<8x128xf32>
    %175 = arith.addf %173, %174 : vector<8x128xf32>
    %c0_52 = arith.constant 0 : index
    %c0_53 = arith.constant 0 : index
    %176 = vector.load %arg8[%c0_52, %c0_53] : memref<8x128xf32, #tpu.memory_space<vmem>>, vector<8x128xf32>
    tpu.vector_store %arg8[%c0_52, %c0_53], %175 {strides = array<i32>} : memref<8x128xf32, #tpu.memory_space<vmem>>, vector<8x128xf32>,
    %c5_i32 = arith.constant 5 : i32
    %177 = arith.index_cast %c5_i32 : i32 to index
    %c0_54 = arith.constant 0 : index
    %c0_55 = arith.constant 0 : index
    %178 = vector.load %arg2[%177, %c0_54, %c0_55] : memref<8x8x384xf32, #tpu.memory_space<vmem>>, vector<1x8x384xf32>
    %179 = vector.shape_cast %178 : vector<1x8x384xf32> to vector<8x384xf32>
    %c0_56 = arith.constant 0 : index
    %c0_57 = arith.constant 0 : index
    %180 = vector.load %arg8[%c0_56, %c0_57] : memref<8x128xf32, #tpu.memory_space<vmem>>, vector<8x128xf32>
    %181 = arith.truncf %180 : vector<8x128xf32> to vector<8x128xbf16>
    %cst_58 = arith.constant dense<0.000000e+00> : vector<8x384xf32>
    %182 = tpu.matmul %181, %3, %cst_58 {dimension_numbers = #tpu.dot_dimension_numbers<[1], [0], [0], [1], [0, 0, 1, 1], [], []>} : vector<8x128xbf16>, vector<128x384xbf16>, vector<8x384xf32> -> vector<8x384xf32>
    %183 = vector.extract_strided_slice %179 {offsets = [0, 0], sizes = [8, 128], strides = [1, 1]} : vector<8x384xf32> to vector<8x128xf32>
    %184 = vector.extract_strided_slice %179 {offsets = [0, 128], sizes = [8, 128], strides = [1, 1]} : vector<8x384xf32> to vector<8x128xf32>
    %185 = vector.extract_strided_slice %179 {offsets = [0, 256], sizes = [8, 128], strides = [1, 1]} : vector<8x384xf32> to vector<8x128xf32>
    %186 = vector.extract_strided_slice %182 {offsets = [0, 0], sizes = [8, 128], strides = [1, 1]} : vector<8x384xf32> to vector<8x128xf32>
    %187 = vector.extract_strided_slice %182 {offsets = [0, 128], sizes = [8, 128], strides = [1, 1]} : vector<8x384xf32> to vector<8x128xf32>
    %188 = vector.extract_strided_slice %182 {offsets = [0, 256], sizes = [8, 128], strides = [1, 1]} : vector<8x384xf32> to vector<8x128xf32>
    %189 = arith.addf %188, %6 : vector<8x128xf32>
    %190 = arith.addf %183, %186 : vector<8x128xf32>
    %191 = arith.negf %190 : vector<8x128xf32>
    %192 = math.exp %191 : vector<8x128xf32>
    %cst_59 = arith.constant 1.000000e+00 : f32
    %193 = vector.broadcast %cst_59 : f32 to vector<8x128xf32>
    %194 = arith.addf %193, %192 : vector<8x128xf32>
    %195 = arith.divf %193, %194 : vector<8x128xf32>
    %196 = arith.addf %184, %187 : vector<8x128xf32>
    %197 = arith.negf %196 : vector<8x128xf32>
    %198 = math.exp %197 : vector<8x128xf32>
    %cst_60 = arith.constant 1.000000e+00 : f32
    %199 = vector.broadcast %cst_60 : f32 to vector<8x128xf32>
    %200 = arith.addf %199, %198 : vector<8x128xf32>
    %201 = arith.divf %199, %200 : vector<8x128xf32>
    %202 = arith.mulf %195, %189 : vector<8x128xf32>
    %203 = arith.addf %185, %202 : vector<8x128xf32>
    %204 = math.tanh %203 : vector<8x128xf32>
    %cst_61 = arith.constant 1.000000e+00 : f32
    %205 = vector.broadcast %cst_61 : f32 to vector<8x128xf32>
    %206 = arith.subf %205, %201 : vector<8x128xf32>
    %207 = arith.mulf %206, %204 : vector<8x128xf32>
    %208 = arith.mulf %201, %180 : vector<8x128xf32>
    %209 = arith.addf %207, %208 : vector<8x128xf32>
    %c0_62 = arith.constant 0 : index
    %c0_63 = arith.constant 0 : index
    %210 = vector.load %arg8[%c0_62, %c0_63] : memref<8x128xf32, #tpu.memory_space<vmem>>, vector<8x128xf32>
    tpu.vector_store %arg8[%c0_62, %c0_63], %209 {strides = array<i32>} : memref<8x128xf32, #tpu.memory_space<vmem>>, vector<8x128xf32>,
    %c6_i32 = arith.constant 6 : i32
    %211 = arith.index_cast %c6_i32 : i32 to index
    %c0_64 = arith.constant 0 : index
    %c0_65 = arith.constant 0 : index
    %212 = vector.load %arg2[%211, %c0_64, %c0_65] : memref<8x8x384xf32, #tpu.memory_space<vmem>>, vector<1x8x384xf32>
    %213 = vector.shape_cast %212 : vector<1x8x384xf32> to vector<8x384xf32>
    %c0_66 = arith.constant 0 : index
    %c0_67 = arith.constant 0 : index
    %214 = vector.load %arg8[%c0_66, %c0_67] : memref<8x128xf32, #tpu.memory_space<vmem>>, vector<8x128xf32>
    %215 = arith.truncf %214 : vector<8x128xf32> to vector<8x128xbf16>
    %cst_68 = arith.constant dense<0.000000e+00> : vector<8x384xf32>
    %216 = tpu.matmul %215, %3, %cst_68 {dimension_numbers = #tpu.dot_dimension_numbers<[1], [0], [0], [1], [0, 0, 1, 1], [], []>} : vector<8x128xbf16>, vector<128x384xbf16>, vector<8x384xf32> -> vector<8x384xf32>
    %217 = vector.extract_strided_slice %213 {offsets = [0, 0], sizes = [8, 128], strides = [1, 1]} : vector<8x384xf32> to vector<8x128xf32>
    %218 = vector.extract_strided_slice %213 {offsets = [0, 128], sizes = [8, 128], strides = [1, 1]} : vector<8x384xf32> to vector<8x128xf32>
    %219 = vector.extract_strided_slice %213 {offsets = [0, 256], sizes = [8, 128], strides = [1, 1]} : vector<8x384xf32> to vector<8x128xf32>
    %220 = vector.extract_strided_slice %216 {offsets = [0, 0], sizes = [8, 128], strides = [1, 1]} : vector<8x384xf32> to vector<8x128xf32>
    %221 = vector.extract_strided_slice %216 {offsets = [0, 128], sizes = [8, 128], strides = [1, 1]} : vector<8x384xf32> to vector<8x128xf32>
    %222 = vector.extract_strided_slice %216 {offsets = [0, 256], sizes = [8, 128], strides = [1, 1]} : vector<8x384xf32> to vector<8x128xf32>
    %223 = arith.addf %222, %6 : vector<8x128xf32>
    %224 = arith.addf %217, %220 : vector<8x128xf32>
    %225 = arith.negf %224 : vector<8x128xf32>
    %226 = math.exp %225 : vector<8x128xf32>
    %cst_69 = arith.constant 1.000000e+00 : f32
    %227 = vector.broadcast %cst_69 : f32 to vector<8x128xf32>
    %228 = arith.addf %227, %226 : vector<8x128xf32>
    %229 = arith.divf %227, %228 : vector<8x128xf32>
    %230 = arith.addf %218, %221 : vector<8x128xf32>
    %231 = arith.negf %230 : vector<8x128xf32>
    %232 = math.exp %231 : vector<8x128xf32>
    %cst_70 = arith.constant 1.000000e+00 : f32
    %233 = vector.broadcast %cst_70 : f32 to vector<8x128xf32>
    %234 = arith.addf %233, %232 : vector<8x128xf32>
    %235 = arith.divf %233, %234 : vector<8x128xf32>
    %236 = arith.mulf %229, %223 : vector<8x128xf32>
    %237 = arith.addf %219, %236 : vector<8x128xf32>
    %238 = math.tanh %237 : vector<8x128xf32>
    %cst_71 = arith.constant 1.000000e+00 : f32
    %239 = vector.broadcast %cst_71 : f32 to vector<8x128xf32>
    %240 = arith.subf %239, %235 : vector<8x128xf32>
    %241 = arith.mulf %240, %238 : vector<8x128xf32>
    %242 = arith.mulf %235, %214 : vector<8x128xf32>
    %243 = arith.addf %241, %242 : vector<8x128xf32>
    %c0_72 = arith.constant 0 : index
    %c0_73 = arith.constant 0 : index
    %244 = vector.load %arg8[%c0_72, %c0_73] : memref<8x128xf32, #tpu.memory_space<vmem>>, vector<8x128xf32>
    tpu.vector_store %arg8[%c0_72, %c0_73], %243 {strides = array<i32>} : memref<8x128xf32, #tpu.memory_space<vmem>>, vector<8x128xf32>,
    %c7_i32 = arith.constant 7 : i32
    %245 = arith.index_cast %c7_i32 : i32 to index
    %c0_74 = arith.constant 0 : index
    %c0_75 = arith.constant 0 : index
    %246 = vector.load %arg2[%245, %c0_74, %c0_75] : memref<8x8x384xf32, #tpu.memory_space<vmem>>, vector<1x8x384xf32>
    %247 = vector.shape_cast %246 : vector<1x8x384xf32> to vector<8x384xf32>
    %c0_76 = arith.constant 0 : index
    %c0_77 = arith.constant 0 : index
    %248 = vector.load %arg8[%c0_76, %c0_77] : memref<8x128xf32, #tpu.memory_space<vmem>>, vector<8x128xf32>
    %249 = arith.truncf %248 : vector<8x128xf32> to vector<8x128xbf16>
    %cst_78 = arith.constant dense<0.000000e+00> : vector<8x384xf32>
    %250 = tpu.matmul %249, %3, %cst_78 {dimension_numbers = #tpu.dot_dimension_numbers<[1], [0], [0], [1], [0, 0, 1, 1], [], []>} : vector<8x128xbf16>, vector<128x384xbf16>, vector<8x384xf32> -> vector<8x384xf32>
    %251 = vector.extract_strided_slice %247 {offsets = [0, 0], sizes = [8, 128], strides = [1, 1]} : vector<8x384xf32> to vector<8x128xf32>
    %252 = vector.extract_strided_slice %247 {offsets = [0, 128], sizes = [8, 128], strides = [1, 1]} : vector<8x384xf32> to vector<8x128xf32>
    %253 = vector.extract_strided_slice %247 {offsets = [0, 256], sizes = [8, 128], strides = [1, 1]} : vector<8x384xf32> to vector<8x128xf32>
    %254 = vector.extract_strided_slice %250 {offsets = [0, 0], sizes = [8, 128], strides = [1, 1]} : vector<8x384xf32> to vector<8x128xf32>
    %255 = vector.extract_strided_slice %250 {offsets = [0, 128], sizes = [8, 128], strides = [1, 1]} : vector<8x384xf32> to vector<8x128xf32>
    %256 = vector.extract_strided_slice %250 {offsets = [0, 256], sizes = [8, 128], strides = [1, 1]} : vector<8x384xf32> to vector<8x128xf32>
    %257 = arith.addf %256, %6 : vector<8x128xf32>
    %258 = arith.addf %251, %254 : vector<8x128xf32>
    %259 = arith.negf %258 : vector<8x128xf32>
    %260 = math.exp %259 : vector<8x128xf32>
    %cst_79 = arith.constant 1.000000e+00 : f32
    %261 = vector.broadcast %cst_79 : f32 to vector<8x128xf32>
    %262 = arith.addf %261, %260 : vector<8x128xf32>
    %263 = arith.divf %261, %262 : vector<8x128xf32>
    %264 = arith.addf %252, %255 : vector<8x128xf32>
    %265 = arith.negf %264 : vector<8x128xf32>
    %266 = math.exp %265 : vector<8x128xf32>
    %cst_80 = arith.constant 1.000000e+00 : f32
    %267 = vector.broadcast %cst_80 : f32 to vector<8x128xf32>
    %268 = arith.addf %267, %266 : vector<8x128xf32>
    %269 = arith.divf %267, %268 : vector<8x128xf32>
    %270 = arith.mulf %263, %257 : vector<8x128xf32>
    %271 = arith.addf %253, %270 : vector<8x128xf32>
    %272 = math.tanh %271 : vector<8x128xf32>
    %cst_81 = arith.constant 1.000000e+00 : f32
    %273 = vector.broadcast %cst_81 : f32 to vector<8x128xf32>
    %274 = arith.subf %273, %269 : vector<8x128xf32>
    %275 = arith.mulf %274, %272 : vector<8x128xf32>
    %276 = arith.mulf %269, %248 : vector<8x128xf32>
    %277 = arith.addf %275, %276 : vector<8x128xf32>
    %c0_82 = arith.constant 0 : index
    %c0_83 = arith.constant 0 : index
    %278 = vector.load %arg8[%c0_82, %c0_83] : memref<8x128xf32, #tpu.memory_space<vmem>>, vector<8x128xf32>
    tpu.vector_store %arg8[%c0_82, %c0_83], %277 {strides = array<i32>} : memref<8x128xf32, #tpu.memory_space<vmem>>, vector<8x128xf32>,
    %c8_i32 = arith.constant 8 : i32
    %c0_i32_84 = arith.constant 0 : i32
    %279 = arith.cmpi eq, %arg1, %c0_i32_84 : i32
    %280 = arith.extui %279 : i1 to i32
    %c0_i32_85 = arith.constant 0 : i32
    %281 = arith.cmpi ne, %280, %c0_i32_85 : i32
    scf.if %281 {
      %c0_86 = arith.constant 0 : index
      %c0_87 = arith.constant 0 : index
      %282 = vector.load %arg8[%c0_86, %c0_87] : memref<8x128xf32, #tpu.memory_space<vmem>>, vector<8x128xf32>
      %283 = arith.truncf %282 : vector<8x128xf32> to vector<8x128xbf16>
      %c0_88 = arith.constant 0 : index
      %c0_89 = arith.constant 0 : index
      %284 = vector.load %arg5[%c0_88, %c0_89] : memref<128x128xbf16, #tpu.memory_space<vmem>>, vector<128x128xbf16>
      %cst_90 = arith.constant dense<0.000000e+00> : vector<8x128xf32>
      %285 = tpu.matmul %283, %284, %cst_90 {dimension_numbers = #tpu.dot_dimension_numbers<[1], [0], [0], [1], [0, 0, 1, 1], [], []>} : vector<8x128xbf16>, vector<128x128xbf16>, vector<8x128xf32> -> vector<8x128xf32>
      %c0_91 = arith.constant 0 : index
      %c0_92 = arith.constant 0 : index
      %286 = vector.load %arg6[%c0_91, %c0_92] : memref<1x128xf32, #tpu.memory_space<vmem>>, vector<1x128xf32>
      %287 = vector.broadcast %286 : vector<1x128xf32> to vector<8x128xf32>
      %288 = arith.addf %285, %287 : vector<8x128xf32>
      %c0_93 = arith.constant 0 : index
      %c0_94 = arith.constant 0 : index
      %289 = vector.load %arg7[%c0_93, %c0_94] : memref<8x128xf32, #tpu.memory_space<vmem>>, vector<8x128xf32>
      tpu.vector_store %arg7[%c0_93, %c0_94], %288 {strides = array<i32>} : memref<8x128xf32, #tpu.memory_space<vmem>>, vector<8x128xf32>,
    } else {
    }
    return
  }
  func.func @transform_0(%arg0: i32, %arg1: i32) -> (i32, i32, i32) {
    %c0_i32 = arith.constant 0 : i32
    %c0_i32_0 = arith.constant 0 : i32
    return %arg1, %arg0, %c0_i32 : i32, i32, i32
  }
  func.func @transform_1(%arg0: i32, %arg1: i32) -> (i32, i32) {
    %c0_i32 = arith.constant 0 : i32
    %c0_i32_0 = arith.constant 0 : i32
    %c0_i32_1 = arith.constant 0 : i32
    return %c0_i32, %c0_i32_0 : i32, i32
  }
  func.func @transform_2(%arg0: i32, %arg1: i32) -> (i32, i32) {
    %c0_i32 = arith.constant 0 : i32
    %c0_i32_0 = arith.constant 0 : i32
    %c0_i32_1 = arith.constant 0 : i32
    return %c0_i32, %c0_i32_0 : i32, i32
  }
  func.func @transform_3(%arg0: i32, %arg1: i32) -> (i32, i32) {
    %c0_i32 = arith.constant 0 : i32
    %c0_i32_0 = arith.constant 0 : i32
    %c0_i32_1 = arith.constant 0 : i32
    return %c0_i32, %c0_i32_0 : i32, i32
  }
  func.func @transform_4(%arg0: i32, %arg1: i32) -> (i32, i32) {
    %c0_i32 = arith.constant 0 : i32
    %c0_i32_0 = arith.constant 0 : i32
    %c0_i32_1 = arith.constant 0 : i32
    return %c0_i32, %c0_i32_0 : i32, i32
  }
  func.func @transform_5(%arg0: i32, %arg1: i32) -> (i32, i32) {
    %c0_i32 = arith.constant 0 : i32
    %c0_i32_0 = arith.constant 0 : i32
    return %arg0, %c0_i32 : i32, i32
  }
}

</mosaic_0001>

<llo_original>
// kernel: gru_model_forward.3
$region0: #{gru_model_forward.3}
  #allocation0 [shape = 'u32[]', space=smem, size = 0x4, offset = 0x4, fixed_abs, tag = 'smem constant byte address 0x4 - core index']
  #allocation1 [shape = 'u32[72,128]{1,0:T(1,128)}', space=vmem, size = 0x9000, scoped, tag = 'internal scratch']
  %s0 = inlined_call_operand.vmem [shape: bf16[64,128], index: 0, kind: input, shape index: {}]
  %s1 = inlined_call_operand.hbm [shape: bf16[128,384], index: 1, kind: input, shape index: {}]
  %s2 = inlined_call_operand.vmem [shape: f32[1,384], index: 2, kind: input, shape index: {}]
  %s3 = inlined_call_operand.vmem [shape: f32[64,384], index: 3, kind: output, shape index: {}]
  %s4 = sld [smem:[#allocation0]]
  $region26: #{gru_model_forward.3} parent=0
    _
  %s6 = ssub.s32 1, %s4
  %s7 = scalar_select 0, %s6, %s4
  $region1: #{gru_model_forward.3} parent=0
    #allocation2 [shape = 'u8[98304]{0}', space=vmem, size = 0x18000, scoped, tag = 'input window, operand 1, single buffered']
    #allocation3 [shape = 's32[1]{0}', space=sflag, size = 0x4, scoped, tag = 'scoped memory for gru_model_forward.3']
    %8 = vsyncpa [#allocation3], 0
    // Predicated region
    $region2: #{gru_model_forward.3} parent=1 // pred_check
      _
    $region3: #{gru_model_forward.3} parent=1 // pred_check_branch
      %10 = sbr.rel (0) target = $region5
    $region4: #{gru_model_forward.3} parent=1 // pred_region
      _
    $region5: #{gru_model_forward.3} parent=1 // pred_fallthru
      _
    // Predicated region
    $region6: #{gru_model_forward.3} parent=1 // pred_check
      _
    $region7: #{gru_model_forward.3} parent=1 // pred_check_branch
      %12 = sbr.rel (0) target = $region9
    $region8: #{gru_model_forward.3} parent=1 // pred_region
      %14 = vsyncadd [#allocation3], 0
      %s15 = sshll.u32 %s1, 4
      %s16 = int_to_ptr.hbm [resolvable:$true] %s15
      %s17 = sshll.u32 [#allocation2], 4
      %s18 = int_to_ptr.vmem [resolvable:$true] %s17
      %23 = dma.hbm_to_vmem [thread:$0]  %s16, 3072, %s18, [#allocation3], 192, 192, 12
    $region9: #{gru_model_forward.3} parent=1 // pred_fallthru
      _
    // Predicated region
    $region10: #{gru_model_forward.3} parent=1 // pred_check
      _
    $region11: #{gru_model_forward.3} parent=1 // pred_check_branch
      %25 = sbr.rel (0) target = $region13
    $region12: #{gru_model_forward.3} parent=1 // pred_region
      _
    $region13: #{gru_model_forward.3} parent=1 // pred_fallthru
      _
    // Predicated region
    $region14: #{gru_model_forward.3} parent=1 // pred_check
      _
    $region15: #{gru_model_forward.3} parent=1 // pred_check_branch
      %27 = sbr.rel (0) target = $region17
    $region16: #{gru_model_forward.3} parent=1 // pred_region
      %29 = dma.done [#allocation3], 3072
    $region17: #{gru_model_forward.3} parent=1 // pred_fallthru
      _
    %v30 = vld [vmem:[%s0] sm:$0xf]
    %v31 = vld [vmem:[%s0 + $0x4] sm:$0xf]
    %v32 = vld [vmem:[%s0 + $0x8] sm:$0xf]
    %v33 = vld [vmem:[%s0 + $0xc] sm:$0xf]
    %v34 = vld [vmem:[%s0 + $0x10] sm:$0xf]
    %v35 = vld [vmem:[%s0 + $0x14] sm:$0xf]
    %v36 = vld [vmem:[%s0 + $0x18] sm:$0xf]
    %v37 = vld [vmem:[%s0 + $0x1c] sm:$0xf]
    %v38 = vld [vmem:[#allocation2] sm:$0xff]
    %v39 = vld [vmem:[#allocation2 + $0x8] sm:$0xf]
    %v40 = vld [vmem:[#allocation2 + $0xc] sm:$0xff]
    %v41 = vld [vmem:[#allocation2 + $0x14] sm:$0xf]
    %v42 = vld [vmem:[#allocation2 + $0x18] sm:$0xff]
    %v43 = vld [vmem:[#allocation2 + $0x20] sm:$0xf]
    %v44 = vld [vmem:[#allocation2 + $0x24] sm:$0xff]
    %v45 = vld [vmem:[#allocation2 + $0x2c] sm:$0xf]
    %v46 = vld [vmem:[#allocation2 + $0x30] sm:$0xff]
    %v47 = vld [vmem:[#allocation2 + $0x38] sm:$0xf]
    %v48 = vld [vmem:[#allocation2 + $0x3c] sm:$0xff]
    %v49 = vld [vmem:[#allocation2 + $0x44] sm:$0xf]
    %v50 = vld [vmem:[#allocation2 + $0x48] sm:$0xff]
    %v51 = vld [vmem:[#allocation2 + $0x50] sm:$0xf]
    %v52 = vld [vmem:[#allocation2 + $0x54] sm:$0xff]
    %v53 = vld [vmem:[#allocation2 + $0x5c] sm:$0xf]
    %v54 = vld [vmem:[#allocation2 + $0x60] sm:$0xff]
    %v55 = vld [vmem:[#allocation2 + $0x68] sm:$0xf]
    %v56 = vld [vmem:[#allocation2 + $0x6c] sm:$0xff]
    %v57 = vld [vmem:[#allocation2 + $0x74] sm:$0xf]
    %v58 = vld [vmem:[#allocation2 + $0x78] sm:$0xff]
    %v59 = vld [vmem:[#allocation2 + $0x80] sm:$0xf]
    %v60 = vld [vmem:[#allocation2 + $0x84] sm:$0xff]
    %v61 = vld [vmem:[#allocation2 + $0x8c] sm:$0xf]
    %v62 = vld [vmem:[#allocation2 + $0x90] sm:$0xff]
    %v63 = vld [vmem:[#allocation2 + $0x98] sm:$0xf]
    %v64 = vld [vmem:[#allocation2 + $0x9c] sm:$0xff]
    %v65 = vld [vmem:[#allocation2 + $0xa4] sm:$0xf]
    %v66 = vld [vmem:[#allocation2 + $0xa8] sm:$0xff]
    %v67 = vld [vmem:[#allocation2 + $0xb0] sm:$0xf]
    %v68 = vld [vmem:[#allocation2 + $0xb4] sm:$0xff]
    %v69 = vld [vmem:[#allocation2 + $0xbc] sm:$0xf]
    %v70 = vld [vmem:[%s2] sm:$0x7]
    %v72 = vperm.slane %v70, 0
    %v73 = vperm.slane %v70, 1
    %v74 = vperm.slane %v70, 2
    %v86 = vunpack.c.l.b16 %v30
    %v87 = vunpack.c.l.b16 %v31
    %v88 = vunpack.c.l.b16 %v32
    %v89 = vunpack.c.l.b16 %v33
    %v90 = vunpack.c.l.b16 %v34
    %v91 = vunpack.c.l.b16 %v35
    %v92 = vunpack.c.l.b16 %v36
    %v93 = vunpack.c.l.b16 %v37
    %v94 = vpack.c.b16 %v87, %v86
    %v95 = vpack.c.b16 %v89, %v88
    %v96 = vpack.c.b16 %v91, %v90
    %v97 = vpack.c.b16 %v93, %v92
    %v134 = vunpack.c.l.b16 %v38
    %v135 = vunpack.c.h.b16 %v38
    %v136 = vunpack.c.l.b16 %v39
    %v137 = vunpack.c.l.b16 %v40
    %v138 = vunpack.c.h.b16 %v40
    %v139 = vunpack.c.l.b16 %v41
    %v140 = vunpack.c.l.b16 %v42
    %v141 = vunpack.c.h.b16 %v42
    %v142 = vunpack.c.l.b16 %v43
    %v143 = vunpack.c.l.b16 %v44
    %v144 = vunpack.c.h.b16 %v44
    %v145 = vunpack.c.l.b16 %v45
    %v146 = vunpack.c.l.b16 %v46
    %v147 = vunpack.c.h.b16 %v46
    %v148 = vunpack.c.l.b16 %v47
    %v149 = vunpack.c.l.b16 %v48
    %v150 = vunpack.c.h.b16 %v48
    %v151 = vunpack.c.l.b16 %v49
    %v152 = vunpack.c.l.b16 %v50
    %v153 = vunpack.c.h.b16 %v50
    %v154 = vunpack.c.l.b16 %v51
    %v155 = vunpack.c.l.b16 %v52
    %v156 = vunpack.c.h.b16 %v52
    %v157 = vunpack.c.l.b16 %v53
    %v158 = vunpack.c.l.b16 %v54
    %v159 = vunpack.c.h.b16 %v54
    %v160 = vunpack.c.l.b16 %v55
    %v161 = vunpack.c.l.b16 %v56
    %v162 = vunpack.c.h.b16 %v56
    %v163 = vunpack.c.l.b16 %v57
    %v164 = vunpack.c.l.b16 %v58
    %v165 = vunpack.c.h.b16 %v58
    %v166 = vunpack.c.l.b16 %v59
    %v167 = vunpack.c.l.b16 %v60
    %v168 = vunpack.c.h.b16 %v60
    %v169 = vunpack.c.l.b16 %v61
    %v170 = vunpack.c.l.b16 %v62
    %v171 = vunpack.c.h.b16 %v62
    %v172 = vunpack.c.l.b16 %v63
    %v173 = vunpack.c.l.b16 %v64
    %v174 = vunpack.c.h.b16 %v64
    %v175 = vunpack.c.l.b16 %v65
    %v176 = vunpack.c.l.b16 %v66
    %v177 = vunpack.c.h.b16 %v66
    %v178 = vunpack.c.l.b16 %v67
    %v179 = vunpack.c.l.b16 %v68
    %v180 = vunpack.c.h.b16 %v68
    %v181 = vunpack.c.l.b16 %v69
    %v182 = vpack.c.b16 %v137, %v134
    %v183 = vpack.c.b16 %v138, %v135
    %v184 = vpack.c.b16 %v139, %v136
    %v185 = vpack.c.b16 %v143, %v140
    %v186 = vpack.c.b16 %v144, %v141
    %v187 = vpack.c.b16 %v145, %v142
    %v188 = vpack.c.b16 %v149, %v146
    %v189 = vpack.c.b16 %v150, %v147
    %v190 = vpack.c.b16 %v151, %v148
    %v191 = vpack.c.b16 %v155, %v152
    %v192 = vpack.c.b16 %v156, %v153
    %v193 = vpack.c.b16 %v157, %v154
    %v194 = vpack.c.b16 %v161, %v158
    %v195 = vpack.c.b16 %v162, %v159
    %v196 = vpack.c.b16 %v163, %v160
    %v197 = vpack.c.b16 %v167, %v164
    %v198 = vpack.c.b16 %v168, %v165
    %v199 = vpack.c.b16 %v169, %v166
    %v200 = vpack.c.b16 %v173, %v170
    %v201 = vpack.c.b16 %v174, %v171
    %v202 = vpack.c.b16 %v175, %v172
    %v203 = vpack.c.b16 %v179, %v176
    %v204 = vpack.c.b16 %v180, %v177
    %v205 = vpack.c.b16 %v181, %v178
    %230 = vmatpush.bf16.msra.mxu0 %v203
    %231 = vmatpush.bf16.msra.mxu0 %v200
    %232 = vmatpush.bf16.msra.mxu0 %v197
    %233 = vmatpush.bf16.msra.mxu0 %v194
    %234 = vmatpush.bf16.msra.mxu0 %v191
    %235 = vmatpush.bf16.msra.mxu0 %v188
    %236 = vmatpush.bf16.msra.mxu0 %v185
    %237 = vmatpush.bf16.msra.mxu0 %v182
    %238 = vmatmul.bf16.gmra.mxu0 %v94
    %v239 = vpop.f32.mrf.mxu0
    %v240 = vadd.f32 %v72, %v239
    %v241 = vpop.f32.mrf.mxu0
    %v242 = vadd.f32 %v72, %v241
    %243 = vmatmul.bf16.gmra.mxu0 %v95
    %v244 = vpop.f32.mrf.mxu0
    %v245 = vadd.f32 %v72, %v244
    %v246 = vpop.f32.mrf.mxu0
    %v247 = vadd.f32 %v72, %v246
    %248 = vmatmul.bf16.gmra.mxu0 %v96
    %v249 = vpop.f32.mrf.mxu0
    %v250 = vadd.f32 %v72, %v249
    %v251 = vpop.f32.mrf.mxu0
    %v252 = vadd.f32 %v72, %v251
    %253 = vmatmul.bf16.gmra.mxu0 %v97
    %v254 = vpop.f32.mrf.mxu0
    %v255 = vadd.f32 %v72, %v254
    %v256 = vpop.f32.mrf.mxu0
    %v257 = vadd.f32 %v72, %v256
    %258 = vdwg.mxu0
    %259 = vmatpush.bf16.msra.mxu0 %v204
    %260 = vmatpush.bf16.msra.mxu0 %v201
    %261 = vmatpush.bf16.msra.mxu0 %v198
    %262 = vmatpush.bf16.msra.mxu0 %v195
    %263 = vmatpush.bf16.msra.mxu0 %v192
    %264 = vmatpush.bf16.msra.mxu0 %v189
    %265 = vmatpush.bf16.msra.mxu0 %v186
    %266 = vmatpush.bf16.msra.mxu0 %v183
    %267 = vmatmul.bf16.gmra.mxu0 %v94
    %v268 = vpop.f32.mrf.mxu0
    %v269 = vadd.f32 %v73, %v268
    %v270 = vpop.f32.mrf.mxu0
    %v271 = vadd.f32 %v73, %v270
    %272 = vmatmul.bf16.gmra.mxu0 %v95
    %v273 = vpop.f32.mrf.mxu0
    %v274 = vadd.f32 %v73, %v273
    %v275 = vpop.f32.mrf.mxu0
    %v276 = vadd.f32 %v73, %v275
    %277 = vmatmul.bf16.gmra.mxu0 %v96
    %v278 = vpop.f32.mrf.mxu0
    %v279 = vadd.f32 %v73, %v278
    %v280 = vpop.f32.mrf.mxu0
    %v281 = vadd.f32 %v73, %v280
    %282 = vmatmul.bf16.gmra.mxu0 %v97
    %v283 = vpop.f32.mrf.mxu0
    %v284 = vadd.f32 %v73, %v283
    %v285 = vpop.f32.mrf.mxu0
    %v286 = vadd.f32 %v73, %v285
    %287 = vdwg.mxu0
    %288 = vmatpush.bf16.msra.mxu0 %v205
    %289 = vmatpush.bf16.msra.mxu0 %v202
    %290 = vmatpush.bf16.msra.mxu0 %v199
    %291 = vmatpush.bf16.msra.mxu0 %v196
    %292 = vmatpush.bf16.msra.mxu0 %v193
    %293 = vmatpush.bf16.msra.mxu0 %v190
    %294 = vmatpush.bf16.msra.mxu0 %v187
    %295 = vmatpush.bf16.msra.mxu0 %v184
    %296 = vmatmul.bf16.gmra.mxu0 %v94
    %v297 = vpop.f32.mrf.mxu0
    %v298 = vadd.f32 %v74, %v297
    %v299 = vpop.f32.mrf.mxu0
    %v300 = vadd.f32 %v74, %v299
    %301 = vmatmul.bf16.gmra.mxu0 %v95
    %v302 = vpop.f32.mrf.mxu0
    %v303 = vadd.f32 %v74, %v302
    %v304 = vpop.f32.mrf.mxu0
    %v305 = vadd.f32 %v74, %v304
    %306 = vmatmul.bf16.gmra.mxu0 %v96
    %v307 = vpop.f32.mrf.mxu0
    %v308 = vadd.f32 %v74, %v307
    %v309 = vpop.f32.mrf.mxu0
    %v310 = vadd.f32 %v74, %v309
    %311 = vmatmul.bf16.gmra.mxu0 %v97
    %v312 = vpop.f32.mrf.mxu0
    %v313 = vadd.f32 %v74, %v312
    %v314 = vpop.f32.mrf.mxu0
    %v315 = vadd.f32 %v74, %v314
    %316 = vdwg.mxu0
    %317 = vst [vmem:[%s3] sm:$0xff] %v240
    %318 = vst [vmem:[%s3 + $0x8] sm:$0xff] %v269
    %319 = vst [vmem:[%s3 + $0x10] sm:$0xff] %v298
    %320 = vst [vmem:[%s3 + $0x18] sm:$0xff] %v242
    %321 = vst [vmem:[%s3 + $0x20] sm:$0xff] %v271
    %322 = vst [vmem:[%s3 + $0x28] sm:$0xff] %v300
    %323 = vst [vmem:[%s3 + $0x30] sm:$0xff] %v245
    %324 = vst [vmem:[%s3 + $0x38] sm:$0xff] %v274
    %325 = vst [vmem:[%s3 + $0x40] sm:$0xff] %v303
    %326 = vst [vmem:[%s3 + $0x48] sm:$0xff] %v247
    %327 = vst [vmem:[%s3 + $0x50] sm:$0xff] %v276
    %328 = vst [vmem:[%s3 + $0x58] sm:$0xff] %v305
    %329 = vst [vmem:[%s3 + $0x60] sm:$0xff] %v250
    %330 = vst [vmem:[%s3 + $0x68] sm:$0xff] %v279
    %331 = vst [vmem:[%s3 + $0x70] sm:$0xff] %v308
    %332 = vst [vmem:[%s3 + $0x78] sm:$0xff] %v252
    %333 = vst [vmem:[%s3 + $0x80] sm:$0xff] %v281
    %334 = vst [vmem:[%s3 + $0x88] sm:$0xff] %v310
    %335 = vst [vmem:[%s3 + $0x90] sm:$0xff] %v255
    %336 = vst [vmem:[%s3 + $0x98] sm:$0xff] %v284
    %337 = vst [vmem:[%s3 + $0xa0] sm:$0xff] %v313
    %338 = vst [vmem:[%s3 + $0xa8] sm:$0xff] %v257
    %339 = vst [vmem:[%s3 + $0xb0] sm:$0xff] %v286
    %340 = vst [vmem:[%s3 + $0xb8] sm:$0xff] %v315
    // Predicated region
    $region18: #{gru_model_forward.3} parent=1 // pred_check
      _
    $region19: #{gru_model_forward.3} parent=1 // pred_check_branch
      %342 = sbr.rel (0) target = $region21
    $region20: #{gru_model_forward.3} parent=1 // pred_region
      _
    $region21: #{gru_model_forward.3} parent=1 // pred_fallthru
      _
    // Predicated region
    $region22: #{gru_model_forward.3} parent=1 // pred_check
      _
    $region23: #{gru_model_forward.3} parent=1 // pred_check_branch
      %344 = sbr.rel (0) target = $region25
    $region24: #{gru_model_forward.3} parent=1 // pred_region
      _
    $region25: #{gru_model_forward.3} parent=1 // pred_fallthru
      _
    %345 = vsyncpa [#allocation3], 1

// kernel: gru_model_forward.5
$region0: #{gru_model_forward.5}
  #allocation0 [shape = 'u32[]', space=smem, size = 0x4, offset = 0x4, fixed_abs, tag = 'smem constant byte address 0x4 - core index']
  #allocation1 [shape = 'u32[72,128]{1,0:T(1,128)}', space=vmem, size = 0x9000, scoped, tag = 'internal scratch']
  #allocation2 [shape = 'f32[8,128]{1,0:T(8,128)}', space=vmem, size = 0x1000, scoped, tag = 'scratch operand']
  %s0 = inlined_call_operand.vmem [shape: f32[8,8,384], index: 0, kind: input, shape index: {}]
  %s1 = inlined_call_operand.hbm [shape: bf16[128,384], index: 1, kind: input, shape index: {}]
  %s2 = inlined_call_operand.vmem [shape: f32[1,128], index: 2, kind: input, shape index: {}]
  %s3 = inlined_call_operand.vmem [shape: bf16[128,128], index: 3, kind: input, shape index: {}]
  %s4 = inlined_call_operand.vmem [shape: f32[1,128], index: 4, kind: input, shape index: {}]
  %s5 = inlined_call_operand.vmem [shape: f32[8,128], index: 5, kind: output, shape index: {}]
  %s6 = sld [smem:[#allocation0]]
  $region42: #{gru_model_forward.5} parent=0
    _
  %s8 = ssub.s32 1, %s6
  %s9 = scalar_select 0, %s8, %s6
  $region1: #{gru_model_forward.5} parent=0
    #allocation3 [shape = 'u8[98304]{0}', space=vmem, size = 0x18000, scoped, tag = 'input window, operand 1, single buffered']
    #allocation4 [shape = 's32[1]{0}', space=sflag, size = 0x4, scoped, tag = 'scoped memory for gru_model_forward.5']
    %10 = vsyncpa [#allocation4], 0
    // Predicated region
    $region2: #{gru_model_forward.5} parent=1 // pred_check
      _
    $region3: #{gru_model_forward.5} parent=1 // pred_check_branch
      %12 = sbr.rel (0) target = $region5
    $region4: #{gru_model_forward.5} parent=1 // pred_region
      _
    $region5: #{gru_model_forward.5} parent=1 // pred_fallthru
      _
    // Predicated region
    $region6: #{gru_model_forward.5} parent=1 // pred_check
      _
    $region7: #{gru_model_forward.5} parent=1 // pred_check_branch
      %14 = sbr.rel (0) target = $region9
    $region8: #{gru_model_forward.5} parent=1 // pred_region
      %16 = vsyncadd [#allocation4], 0
      %s17 = sshll.u32 %s1, 4
      %s18 = int_to_ptr.hbm [resolvable:$true] %s17
      %s19 = sshll.u32 [#allocation3], 4
      %s20 = int_to_ptr.vmem [resolvable:$true] %s19
      %25 = dma.hbm_to_vmem [thread:$0]  %s18, 3072, %s20, [#allocation4], 192, 192, 12
    $region9: #{gru_model_forward.5} parent=1 // pred_fallthru
      _
    // Predicated region
    $region10: #{gru_model_forward.5} parent=1 // pred_check
      _
    $region11: #{gru_model_forward.5} parent=1 // pred_check_branch
      %27 = sbr.rel (0) target = $region13
    $region12: #{gru_model_forward.5} parent=1 // pred_region
      _
    $region13: #{gru_model_forward.5} parent=1 // pred_fallthru
      _
    // Predicated region
    $region14: #{gru_model_forward.5} parent=1 // pred_check
      _
    $region15: #{gru_model_forward.5} parent=1 // pred_check_branch
      %29 = sbr.rel (0) target = $region17
    $region16: #{gru_model_forward.5} parent=1 // pred_region
      _
    $region17: #{gru_model_forward.5} parent=1 // pred_fallthru
      _
    // Predicated region
    $region18: #{gru_model_forward.5} parent=1 // pred_check
      _
    $region19: #{gru_model_forward.5} parent=1 // pred_check_branch
      %31 = sbr.rel (0) target = $region21
    $region20: #{gru_model_forward.5} parent=1 // pred_region
      _
    $region21: #{gru_model_forward.5} parent=1 // pred_fallthru
      _
    // Predicated region
    $region22: #{gru_model_forward.5} parent=1 // pred_check
      _
    $region23: #{gru_model_forward.5} parent=1 // pred_check_branch
      %33 = sbr.rel (0) target = $region25
    $region24: #{gru_model_forward.5} parent=1 // pred_region
      %35 = dma.done [#allocation4], 3072
    $region25: #{gru_model_forward.5} parent=1 // pred_fallthru
      _
    %p36 = scmp.eq.s32.totalorder 0, 0
    // Predicated region
    $region26: #{gru_model_forward.5} parent=1 // pred_check
      %p37 = pneg %p36
    $region27: #{gru_model_forward.5} parent=1 // pred_check_branch
      %39 = sbr.rel (%p37) target = $region29
    $region28: #{gru_model_forward.5} parent=1 // pred_region
      %40 = vst [vmem:[#allocation2] sm:$0xff] 0.0
    $region29: #{gru_model_forward.5} parent=1 // pred_fallthru
      _
    %v41 = vld [vmem:[#allocation3] sm:$0xff]
    %v42 = vld [vmem:[#allocation3 + $0x8] sm:$0xf]
    %v43 = vld [vmem:[#allocation3 + $0xc] sm:$0xff]
    %v44 = vld [vmem:[#allocation3 + $0x14] sm:$0xf]
    %v45 = vld [vmem:[#allocation3 + $0x18] sm:$0xff]
    %v46 = vld [vmem:[#allocation3 + $0x20] sm:$0xf]
    %v47 = vld [vmem:[#allocation3 + $0x24] sm:$0xff]
    %v48 = vld [vmem:[#allocation3 + $0x2c] sm:$0xf]
    %v49 = vld [vmem:[#allocation3 + $0x30] sm:$0xff]
    %v50 = vld [vmem:[#allocation3 + $0x38] sm:$0xf]
    %v51 = vld [vmem:[#allocation3 + $0x3c] sm:$0xff]
    %v52 = vld [vmem:[#allocation3 + $0x44] sm:$0xf]
    %v53 = vld [vmem:[#allocation3 + $0x48] sm:$0xff]
    %v54 = vld [vmem:[#allocation3 + $0x50] sm:$0xf]
    %v55 = vld [vmem:[#allocation3 + $0x54] sm:$0xff]
    %v56 = vld [vmem:[#allocation3 + $0x5c] sm:$0xf]
    %v57 = vld [vmem:[#allocation3 + $0x60] sm:$0xff]
    %v58 = vld [vmem:[#allocation3 + $0x68] sm:$0xf]
    %v59 = vld [vmem:[#allocation3 + $0x6c] sm:$0xff]
    %v60 = vld [vmem:[#allocation3 + $0x74] sm:$0xf]
    %v61 = vld [vmem:[#allocation3 + $0x78] sm:$0xff]
    %v62 = vld [vmem:[#allocation3 + $0x80] sm:$0xf]
    %v63 = vld [vmem:[#allocation3 + $0x84] sm:$0xff]
    %v64 = vld [vmem:[#allocation3 + $0x8c] sm:$0xf]
    %v65 = vld [vmem:[#allocation3 + $0x90] sm:$0xff]
    %v66 = vld [vmem:[#allocation3 + $0x98] sm:$0xf]
    %v67 = vld [vmem:[#allocation3 + $0x9c] sm:$0xff]
    %v68 = vld [vmem:[#allocation3 + $0xa4] sm:$0xf]
    %v69 = vld [vmem:[#allocation3 + $0xa8] sm:$0xff]
    %v70 = vld [vmem:[#allocation3 + $0xb0] sm:$0xf]
    %v71 = vld [vmem:[#allocation3 + $0xb4] sm:$0xff]
    %v72 = vld [vmem:[#allocation3 + $0xbc] sm:$0xf]
    %v73 = vld [vmem:[%s2] sm:$0x1]
    %v75 = vperm.slane %v73, 0
    %v77 = vld [vmem:[%s0] sm:$0xff]
    %v78 = vld [vmem:[%s0 + $0x8] sm:$0xff]
    %v79 = vld [vmem:[%s0 + $0x10] sm:$0xff]
    %v80 = vld [vmem:[#allocation2] sm:$0xff]
    %v81 = vpack.c.bf16 %v80, %v80
    %v114 = vunpack.c.l.b16 %v41
    %v115 = vunpack.c.h.b16 %v41
    %v116 = vunpack.c.l.b16 %v42
    %v117 = vunpack.c.l.b16 %v43
    %v118 = vunpack.c.h.b16 %v43
    %v119 = vunpack.c.l.b16 %v44
    %v120 = vunpack.c.l.b16 %v45
    %v121 = vunpack.c.h.b16 %v45
    %v122 = vunpack.c.l.b16 %v46
    %v123 = vunpack.c.l.b16 %v47
    %v124 = vunpack.c.h.b16 %v47
    %v125 = vunpack.c.l.b16 %v48
    %v126 = vunpack.c.l.b16 %v49
    %v127 = vunpack.c.h.b16 %v49
    %v128 = vunpack.c.l.b16 %v50
    %v129 = vunpack.c.l.b16 %v51
    %v130 = vunpack.c.h.b16 %v51
    %v131 = vunpack.c.l.b16 %v52
    %v132 = vunpack.c.l.b16 %v53
    %v133 = vunpack.c.h.b16 %v53
    %v134 = vunpack.c.l.b16 %v54
    %v135 = vunpack.c.l.b16 %v55
    %v136 = vunpack.c.h.b16 %v55
    %v137 = vunpack.c.l.b16 %v56
    %v138 = vunpack.c.l.b16 %v57
    %v139 = vunpack.c.h.b16 %v57
    %v140 = vunpack.c.l.b16 %v58
    %v141 = vunpack.c.l.b16 %v59
    %v142 = vunpack.c.h.b16 %v59
    %v143 = vunpack.c.l.b16 %v60
    %v144 = vunpack.c.l.b16 %v61
    %v145 = vunpack.c.h.b16 %v61
    %v146 = vunpack.c.l.b16 %v62
    %v147 = vunpack.c.l.b16 %v63
    %v148 = vunpack.c.h.b16 %v63
    %v149 = vunpack.c.l.b16 %v64
    %v150 = vunpack.c.l.b16 %v65
    %v151 = vunpack.c.h.b16 %v65
    %v152 = vunpack.c.l.b16 %v66
    %v153 = vunpack.c.l.b16 %v67
    %v154 = vunpack.c.h.b16 %v67
    %v155 = vunpack.c.l.b16 %v68
    %v156 = vunpack.c.l.b16 %v69
    %v157 = vunpack.c.h.b16 %v69
    %v158 = vunpack.c.l.b16 %v70
    %v159 = vunpack.c.l.b16 %v71
    %v160 = vunpack.c.h.b16 %v71
    %v161 = vunpack.c.l.b16 %v72
    %v162 = vpack.c.b16 %v117, %v114
    %v163 = vpack.c.b16 %v118, %v115
    %v164 = vpack.c.b16 %v119, %v116
    %v165 = vpack.c.b16 %v123, %v120
    %v166 = vpack.c.b16 %v124, %v121
    %v167 = vpack.c.b16 %v125, %v122
    %v168 = vpack.c.b16 %v129, %v126
    %v169 = vpack.c.b16 %v130, %v127
    %v170 = vpack.c.b16 %v131, %v128
    %v171 = vpack.c.b16 %v135, %v132
    %v172 = vpack.c.b16 %v136, %v133
    %v173 = vpack.c.b16 %v137, %v134
    %v174 = vpack.c.b16 %v141, %v138
    %v175 = vpack.c.b16 %v142, %v139
    %v176 = vpack.c.b16 %v143, %v140
    %v177 = vpack.c.b16 %v147, %v144
    %v178 = vpack.c.b16 %v148, %v145
    %v179 = vpack.c.b16 %v149, %v146
    %v180 = vpack.c.b16 %v153, %v150
    %v181 = vpack.c.b16 %v154, %v151
    %v182 = vpack.c.b16 %v155, %v152
    %v183 = vpack.c.b16 %v159, %v156
    %v184 = vpack.c.b16 %v160, %v157
    %v185 = vpack.c.b16 %v161, %v158
    %210 = vmatpush.bf16.msra.mxu0 %v183
    %211 = vmatpush.bf16.msra.mxu0 %v180
    %212 = vmatpush.bf16.msra.mxu0 %v177
    %213 = vmatpush.bf16.msra.mxu0 %v174
    %214 = vmatpush.bf16.msra.mxu0 %v171
    %215 = vmatpush.bf16.msra.mxu0 %v168
    %216 = vmatpush.bf16.msra.mxu0 %v165
    %217 = vmatpush.bf16.msra.mxu0 %v162
    %218 = vmatmul.bf16.gmra.mxu0 %v81
    %v219 = vpop.f32.mrf.mxu0
    %v220 = vadd.f32 0.0, %v219
    %v221 = vpop.f32.mrf.mxu0
    %222 = vdwg.mxu0
    %223 = vmatpush.bf16.msra.mxu0 %v184
    %224 = vmatpush.bf16.msra.mxu0 %v181
    %225 = vmatpush.bf16.msra.mxu0 %v178
    %226 = vmatpush.bf16.msra.mxu0 %v175
    %227 = vmatpush.bf16.msra.mxu0 %v172
    %228 = vmatpush.bf16.msra.mxu0 %v169
    %229 = vmatpush.bf16.msra.mxu0 %v166
    %230 = vmatpush.bf16.msra.mxu0 %v163
    %231 = vmatmul.bf16.gmra.mxu0 %v81
    %v232 = vpop.f32.mrf.mxu0
    %v233 = vadd.f32 0.0, %v232
    %v234 = vpop.f32.mrf.mxu0
    %235 = vdwg.mxu0
    %236 = vmatpush.bf16.msra.mxu0 %v185
    %237 = vmatpush.bf16.msra.mxu0 %v182
    %238 = vmatpush.bf16.msra.mxu0 %v179
    %239 = vmatpush.bf16.msra.mxu0 %v176
    %240 = vmatpush.bf16.msra.mxu0 %v173
    %241 = vmatpush.bf16.msra.mxu0 %v170
    %242 = vmatpush.bf16.msra.mxu0 %v167
    %243 = vmatpush.bf16.msra.mxu0 %v164
    %244 = vmatmul.bf16.gmra.mxu0 %v81
    %v245 = vpop.f32.mrf.mxu0
    %v246 = vadd.f32 0.0, %v245
    %v247 = vpop.f32.mrf.mxu0
    %248 = vdwg.mxu0
    %v249 = vadd.f32 %v246, %v75
    %v250 = vadd.f32 %v77, %v220
    %v251 = vxor.u32 %v250, 2147483648
    %v252 = vmul.f32 %v251, 1.442695
    %v253 = vpow.pop %v252
    %v254 = vadd.f32 %v253, 1.0
    %v255 = vrcp.pop %v254
    %v256 = vmul.f32 %v254, %v255
    %v257 = vsub.f32 1.0, %v256
    %v258 = vmul.f32 %v255, %v257
    %v259 = vadd.f32 %v255, %v258
    %vm260 = vweird.f32 %v254
    %vm261 = vweird.f32 %v255
    %vm262 = vmor %vm260, %vm261
    %v263 = vsel %vm262, %v255, %v259
    %v264 = vand.u32 2147483647, %v254
    %vm265 = vcmp.eq.f32.partialorder %v264, 8.507059e+37
    %v266 = vand.u32 %v254, 2147483648
    %v267 = vor.u32 1.1754944e-38, %v266
    %v268 = vsel %vm265, %v267, %v263
    %v269 = vmul.f32 1.0, %v268
    %v270 = vadd.f32 %v78, %v233
    %v271 = vxor.u32 %v270, 2147483648
    %v272 = vmul.f32 %v271, 1.442695
    %v273 = vpow.pop %v272
    %v274 = vadd.f32 %v273, 1.0
    %v275 = vrcp.pop %v274
    %v276 = vmul.f32 %v274, %v275
    %v277 = vsub.f32 1.0, %v276
    %v278 = vmul.f32 %v275, %v277
    %v279 = vadd.f32 %v275, %v278
    %vm280 = vweird.f32 %v274
    %vm281 = vweird.f32 %v275
    %vm282 = vmor %vm280, %vm281
    %v283 = vsel %vm282, %v275, %v279
    %v284 = vand.u32 2147483647, %v274
    %vm285 = vcmp.eq.f32.partialorder %v284, 8.507059e+37
    %v286 = vand.u32 %v274, 2147483648
    %v287 = vor.u32 1.1754944e-38, %v286
    %v288 = vsel %vm285, %v287, %v283
    %v289 = vmul.f32 1.0, %v288
    %v290 = vmul.f32 %v269, %v249
    %v291 = vadd.f32 %v79, %v290
    %v292 = vtanh.pop %v291
    %v293 = vsub.f32 1.0, %v289
    %v294 = vmul.f32 %v293, %v292
    %v295 = vmul.f32 %v289, %v80
    %v296 = vadd.f32 %v294, %v295
    %297 = vst [vmem:[#allocation2] sm:$0xff] %v296
    %s298 = scalar_lea.vmem %s0, 24
    %v299 = vld [vmem:[%s298] sm:$0xff]
    %v300 = vld [vmem:[%s298 + $0x8] sm:$0xff]
    %v301 = vld [vmem:[%s298 + $0x10] sm:$0xff]
    %v302 = vld [vmem:[#allocation2] sm:$0xff]
    %v303 = vpack.c.bf16 %v302, %v302
    %304 = vmatpush.bf16.msra.mxu0 %v183
    %305 = vmatpush.bf16.msra.mxu0 %v180
    %306 = vmatpush.bf16.msra.mxu0 %v177
    %307 = vmatpush.bf16.msra.mxu0 %v174
    %308 = vmatpush.bf16.msra.mxu0 %v171
    %309 = vmatpush.bf16.msra.mxu0 %v168
    %310 = vmatpush.bf16.msra.mxu0 %v165
    %311 = vmatpush.bf16.msra.mxu0 %v162
    %312 = vmatmul.bf16.gmra.mxu0 %v303
    %v313 = vpop.f32.mrf.mxu0
    %v314 = vadd.f32 0.0, %v313
    %v315 = vpop.f32.mrf.mxu0
    %316 = vdwg.mxu0
    %317 = vmatpush.bf16.msra.mxu0 %v184
    %318 = vmatpush.bf16.msra.mxu0 %v181
    %319 = vmatpush.bf16.msra.mxu0 %v178
    %320 = vmatpush.bf16.msra.mxu0 %v175
    %321 = vmatpush.bf16.msra.mxu0 %v172
    %322 = vmatpush.bf16.msra.mxu0 %v169
    %323 = vmatpush.bf16.msra.mxu0 %v166
    %324 = vmatpush.bf16.msra.mxu0 %v163
    %325 = vmatmul.bf16.gmra.mxu0 %v303
    %v326 = vpop.f32.mrf.mxu0
    %v327 = vadd.f32 0.0, %v326
    %v328 = vpop.f32.mrf.mxu0
    %329 = vdwg.mxu0
    %330 = vmatpush.bf16.msra.mxu0 %v185
    %331 = vmatpush.bf16.msra.mxu0 %v182
    %332 = vmatpush.bf16.msra.mxu0 %v179
    %333 = vmatpush.bf16.msra.mxu0 %v176
    %334 = vmatpush.bf16.msra.mxu0 %v173
    %335 = vmatpush.bf16.msra.mxu0 %v170
    %336 = vmatpush.bf16.msra.mxu0 %v167
    %337 = vmatpush.bf16.msra.mxu0 %v164
    %338 = vmatmul.bf16.gmra.mxu0 %v303
    %v339 = vpop.f32.mrf.mxu0
    %v340 = vadd.f32 0.0, %v339
    %v341 = vpop.f32.mrf.mxu0
    %342 = vdwg.mxu0
    %v343 = vadd.f32 %v340, %v75
    %v344 = vadd.f32 %v299, %v314
    %v345 = vxor.u32 %v344, 2147483648
    %v346 = vmul.f32 %v345, 1.442695
    %v347 = vpow.pop %v346
    %v348 = vadd.f32 %v347, 1.0
    %v349 = vrcp.pop %v348
    %v350 = vmul.f32 %v348, %v349
    %v351 = vsub.f32 1.0, %v350
    %v352 = vmul.f32 %v349, %v351
    %v353 = vadd.f32 %v349, %v352
    %vm354 = vweird.f32 %v348
    %vm355 = vweird.f32 %v349
    %vm356 = vmor %vm354, %vm355
    %v357 = vsel %vm356, %v349, %v353
    %v358 = vand.u32 2147483647, %v348
    %vm359 = vcmp.eq.f32.partialorder %v358, 8.507059e+37
    %v360 = vand.u32 %v348, 2147483648
    %v361 = vor.u32 1.1754944e-38, %v360
    %v362 = vsel %vm359, %v361, %v357
    %v363 = vmul.f32 1.0, %v362
    %v364 = vadd.f32 %v300, %v327
    %v365 = vxor.u32 %v364, 2147483648
    %v366 = vmul.f32 %v365, 1.442695
    %v367 = vpow.pop %v366
    %v368 = vadd.f32 %v367, 1.0
    %v369 = vrcp.pop %v368
    %v370 = vmul.f32 %v368, %v369
    %v371 = vsub.f32 1.0, %v370
    %v372 = vmul.f32 %v369, %v371
    %v373 = vadd.f32 %v369, %v372
    %vm374 = vweird.f32 %v368
    %vm375 = vweird.f32 %v369
    %vm376 = vmor %vm374, %vm375
    %v377 = vsel %vm376, %v369, %v373
    %v378 = vand.u32 2147483647, %v368
    %vm379 = vcmp.eq.f32.partialorder %v378, 8.507059e+37
    %v380 = vand.u32 %v368, 2147483648
    %v381 = vor.u32 1.1754944e-38, %v380
    %v382 = vsel %vm379, %v381, %v377
    %v383 = vmul.f32 1.0, %v382
    %v384 = vmul.f32 %v363, %v343
    %v385 = vadd.f32 %v301, %v384
    %v386 = vtanh.pop %v385
    %v387 = vsub.f32 1.0, %v383
    %v388 = vmul.f32 %v387, %v386
    %v389 = vmul.f32 %v383, %v302
    %v390 = vadd.f32 %v388, %v389
    %391 = vst [vmem:[#allocation2] sm:$0xff] %v390
    %s392 = scalar_lea.vmem %s0, 48
    %v393 = vld [vmem:[%s392] sm:$0xff]
    %v394 = vld [vmem:[%s392 + $0x8] sm:$0xff]
    %v395 = vld [vmem:[%s392 + $0x10] sm:$0xff]
    %v396 = vld [vmem:[#allocation2] sm:$0xff]
    %v397 = vpack.c.bf16 %v396, %v396
    %398 = vmatpush.bf16.msra.mxu0 %v183
    %399 = vmatpush.bf16.msra.mxu0 %v180
    %400 = vmatpush.bf16.msra.mxu0 %v177
    %401 = vmatpush.bf16.msra.mxu0 %v174
    %402 = vmatpush.bf16.msra.mxu0 %v171
    %403 = vmatpush.bf16.msra.mxu0 %v168
    %404 = vmatpush.bf16.msra.mxu0 %v165
    %405 = vmatpush.bf16.msra.mxu0 %v162
    %406 = vmatmul.bf16.gmra.mxu0 %v397
    %v407 = vpop.f32.mrf.mxu0
    %v408 = vadd.f32 0.0, %v407
    %v409 = vpop.f32.mrf.mxu0
    %410 = vdwg.mxu0
    %411 = vmatpush.bf16.msra.mxu0 %v184
    %412 = vmatpush.bf16.msra.mxu0 %v181
    %413 = vmatpush.bf16.msra.mxu0 %v178
    %414 = vmatpush.bf16.msra.mxu0 %v175
    %415 = vmatpush.bf16.msra.mxu0 %v172
    %416 = vmatpush.bf16.msra.mxu0 %v169
    %417 = vmatpush.bf16.msra.mxu0 %v166
    %418 = vmatpush.bf16.msra.mxu0 %v163
    %419 = vmatmul.bf16.gmra.mxu0 %v397
    %v420 = vpop.f32.mrf.mxu0
    %v421 = vadd.f32 0.0, %v420
    %v422 = vpop.f32.mrf.mxu0
    %423 = vdwg.mxu0
    %424 = vmatpush.bf16.msra.mxu0 %v185
    %425 = vmatpush.bf16.msra.mxu0 %v182
    %426 = vmatpush.bf16.msra.mxu0 %v179
    %427 = vmatpush.bf16.msra.mxu0 %v176
    %428 = vmatpush.bf16.msra.mxu0 %v173
    %429 = vmatpush.bf16.msra.mxu0 %v170
    %430 = vmatpush.bf16.msra.mxu0 %v167
    %431 = vmatpush.bf16.msra.mxu0 %v164
    %432 = vmatmul.bf16.gmra.mxu0 %v397
    %v433 = vpop.f32.mrf.mxu0
    %v434 = vadd.f32 0.0, %v433
    %v435 = vpop.f32.mrf.mxu0
    %436 = vdwg.mxu0
    %v437 = vadd.f32 %v434, %v75
    %v438 = vadd.f32 %v393, %v408
    %v439 = vxor.u32 %v438, 2147483648
    %v440 = vmul.f32 %v439, 1.442695
    %v441 = vpow.pop %v440
    %v442 = vadd.f32 %v441, 1.0
    %v443 = vrcp.pop %v442
    %v444 = vmul.f32 %v442, %v443
    %v445 = vsub.f32 1.0, %v444
    %v446 = vmul.f32 %v443, %v445
    %v447 = vadd.f32 %v443, %v446
    %vm448 = vweird.f32 %v442
    %vm449 = vweird.f32 %v443
    %vm450 = vmor %vm448, %vm449
    %v451 = vsel %vm450, %v443, %v447
    %v452 = vand.u32 2147483647, %v442
    %vm453 = vcmp.eq.f32.partialorder %v452, 8.507059e+37
    %v454 = vand.u32 %v442, 2147483648
    %v455 = vor.u32 1.1754944e-38, %v454
    %v456 = vsel %vm453, %v455, %v451
    %v457 = vmul.f32 1.0, %v456
    %v458 = vadd.f32 %v394, %v421
    %v459 = vxor.u32 %v458, 2147483648
    %v460 = vmul.f32 %v459, 1.442695
    %v461 = vpow.pop %v460
    %v462 = vadd.f32 %v461, 1.0
    %v463 = vrcp.pop %v462
    %v464 = vmul.f32 %v462, %v463
    %v465 = vsub.f32 1.0, %v464
    %v466 = vmul.f32 %v463, %v465
    %v467 = vadd.f32 %v463, %v466
    %vm468 = vweird.f32 %v462
    %vm469 = vweird.f32 %v463
    %vm470 = vmor %vm468, %vm469
    %v471 = vsel %vm470, %v463, %v467
    %v472 = vand.u32 2147483647, %v462
    %vm473 = vcmp.eq.f32.partialorder %v472, 8.507059e+37
    %v474 = vand.u32 %v462, 2147483648
    %v475 = vor.u32 1.1754944e-38, %v474
    %v476 = vsel %vm473, %v475, %v471
    %v477 = vmul.f32 1.0, %v476
    %v478 = vmul.f32 %v457, %v437
    %v479 = vadd.f32 %v395, %v478
    %v480 = vtanh.pop %v479
    %v481 = vsub.f32 1.0, %v477
    %v482 = vmul.f32 %v481, %v480
    %v483 = vmul.f32 %v477, %v396
    %v484 = vadd.f32 %v482, %v483
    %485 = vst [vmem:[#allocation2] sm:$0xff] %v484
    %s486 = scalar_lea.vmem %s0, 72
    %v487 = vld [vmem:[%s486] sm:$0xff]
    %v488 = vld [vmem:[%s486 + $0x8] sm:$0xff]
    %v489 = vld [vmem:[%s486 + $0x10] sm:$0xff]
    %v490 = vld [vmem:[#allocation2] sm:$0xff]
    %v491 = vpack.c.bf16 %v490, %v490
    %492 = vmatpush.bf16.msra.mxu0 %v183
    %493 = vmatpush.bf16.msra.mxu0 %v180
    %494 = vmatpush.bf16.msra.mxu0 %v177
    %495 = vmatpush.bf16.msra.mxu0 %v174
    %496 = vmatpush.bf16.msra.mxu0 %v171
    %497 = vmatpush.bf16.msra.mxu0 %v168
    %498 = vmatpush.bf16.msra.mxu0 %v165
    %499 = vmatpush.bf16.msra.mxu0 %v162
    %500 = vmatmul.bf16.gmra.mxu0 %v491
    %v501 = vpop.f32.mrf.mxu0
    %v502 = vadd.f32 0.0, %v501
    %v503 = vpop.f32.mrf.mxu0
    %504 = vdwg.mxu0
    %505 = vmatpush.bf16.msra.mxu0 %v184
    %506 = vmatpush.bf16.msra.mxu0 %v181
    %507 = vmatpush.bf16.msra.mxu0 %v178
    %508 = vmatpush.bf16.msra.mxu0 %v175
    %509 = vmatpush.bf16.msra.mxu0 %v172
    %510 = vmatpush.bf16.msra.mxu0 %v169
    %511 = vmatpush.bf16.msra.mxu0 %v166
    %512 = vmatpush.bf16.msra.mxu0 %v163
    %513 = vmatmul.bf16.gmra.mxu0 %v491
    %v514 = vpop.f32.mrf.mxu0
    %v515 = vadd.f32 0.0, %v514
    %v516 = vpop.f32.mrf.mxu0
    %517 = vdwg.mxu0
    %518 = vmatpush.bf16.msra.mxu0 %v185
    %519 = vmatpush.bf16.msra.mxu0 %v182
    %520 = vmatpush.bf16.msra.mxu0 %v179
    %521 = vmatpush.bf16.msra.mxu0 %v176
    %522 = vmatpush.bf16.msra.mxu0 %v173
    %523 = vmatpush.bf16.msra.mxu0 %v170
    %524 = vmatpush.bf16.msra.mxu0 %v167
    %525 = vmatpush.bf16.msra.mxu0 %v164
    %526 = vmatmul.bf16.gmra.mxu0 %v491
    %v527 = vpop.f32.mrf.mxu0
    %v528 = vadd.f32 0.0, %v527
    %v529 = vpop.f32.mrf.mxu0
    %530 = vdwg.mxu0
    %v531 = vadd.f32 %v528, %v75
    %v532 = vadd.f32 %v487, %v502
    %v533 = vxor.u32 %v532, 2147483648
    %v534 = vmul.f32 %v533, 1.442695
    %v535 = vpow.pop %v534
    %v536 = vadd.f32 %v535, 1.0
    %v537 = vrcp.pop %v536
    %v538 = vmul.f32 %v536, %v537
    %v539 = vsub.f32 1.0, %v538
    %v540 = vmul.f32 %v537, %v539
    %v541 = vadd.f32 %v537, %v540
    %vm542 = vweird.f32 %v536
    %vm543 = vweird.f32 %v537
    %vm544 = vmor %vm542, %vm543
    %v545 = vsel %vm544, %v537, %v541
    %v546 = vand.u32 2147483647, %v536
    %vm547 = vcmp.eq.f32.partialorder %v546, 8.507059e+37
    %v548 = vand.u32 %v536, 2147483648
    %v549 = vor.u32 1.1754944e-38, %v548
    %v550 = vsel %vm547, %v549, %v545
    %v551 = vmul.f32 1.0, %v550
    %v552 = vadd.f32 %v488, %v515
    %v553 = vxor.u32 %v552, 2147483648
    %v554 = vmul.f32 %v553, 1.442695
    %v555 = vpow.pop %v554
    %v556 = vadd.f32 %v555, 1.0
    %v557 = vrcp.pop %v556
    %v558 = vmul.f32 %v556, %v557
    %v559 = vsub.f32 1.0, %v558
    %v560 = vmul.f32 %v557, %v559
    %v561 = vadd.f32 %v557, %v560
    %vm562 = vweird.f32 %v556
    %vm563 = vweird.f32 %v557
    %vm564 = vmor %vm562, %vm563
    %v565 = vsel %vm564, %v557, %v561
    %v566 = vand.u32 2147483647, %v556
    %vm567 = vcmp.eq.f32.partialorder %v566, 8.507059e+37
    %v568 = vand.u32 %v556, 2147483648
    %v569 = vor.u32 1.1754944e-38, %v568
    %v570 = vsel %vm567, %v569, %v565
    %v571 = vmul.f32 1.0, %v570
    %v572 = vmul.f32 %v551, %v531
    %v573 = vadd.f32 %v489, %v572
    %v574 = vtanh.pop %v573
    %v575 = vsub.f32 1.0, %v571
    %v576 = vmul.f32 %v575, %v574
    %v577 = vmul.f32 %v571, %v490
    %v578 = vadd.f32 %v576, %v577
    %579 = vst [vmem:[#allocation2] sm:$0xff] %v578
    %s580 = scalar_lea.vmem %s0, 96
    %v581 = vld [vmem:[%s580] sm:$0xff]
    %v582 = vld [vmem:[%s580 + $0x8] sm:$0xff]
    %v583 = vld [vmem:[%s580 + $0x10] sm:$0xff]
    %v584 = vld [vmem:[#allocation2] sm:$0xff]
    %v585 = vpack.c.bf16 %v584, %v584
    %586 = vmatpush.bf16.msra.mxu0 %v183
    %587 = vmatpush.bf16.msra.mxu0 %v180
    %588 = vmatpush.bf16.msra.mxu0 %v177
    %589 = vmatpush.bf16.msra.mxu0 %v174
    %590 = vmatpush.bf16.msra.mxu0 %v171
    %591 = vmatpush.bf16.msra.mxu0 %v168
    %592 = vmatpush.bf16.msra.mxu0 %v165
    %593 = vmatpush.bf16.msra.mxu0 %v162
    %594 = vmatmul.bf16.gmra.mxu0 %v585
    %v595 = vpop.f32.mrf.mxu0
    %v596 = vadd.f32 0.0, %v595
    %v597 = vpop.f32.mrf.mxu0
    %598 = vdwg.mxu0
    %599 = vmatpush.bf16.msra.mxu0 %v184
    %600 = vmatpush.bf16.msra.mxu0 %v181
    %601 = vmatpush.bf16.msra.mxu0 %v178
    %602 = vmatpush.bf16.msra.mxu0 %v175
    %603 = vmatpush.bf16.msra.mxu0 %v172
    %604 = vmatpush.bf16.msra.mxu0 %v169
    %605 = vmatpush.bf16.msra.mxu0 %v166
    %606 = vmatpush.bf16.msra.mxu0 %v163
    %607 = vmatmul.bf16.gmra.mxu0 %v585
    %v608 = vpop.f32.mrf.mxu0
    %v609 = vadd.f32 0.0, %v608
    %v610 = vpop.f32.mrf.mxu0
    %611 = vdwg.mxu0
    %612 = vmatpush.bf16.msra.mxu0 %v185
    %613 = vmatpush.bf16.msra.mxu0 %v182
    %614 = vmatpush.bf16.msra.mxu0 %v179
    %615 = vmatpush.bf16.msra.mxu0 %v176
    %616 = vmatpush.bf16.msra.mxu0 %v173
    %617 = vmatpush.bf16.msra.mxu0 %v170
    %618 = vmatpush.bf16.msra.mxu0 %v167
    %619 = vmatpush.bf16.msra.mxu0 %v164
    %620 = vmatmul.bf16.gmra.mxu0 %v585
    %v621 = vpop.f32.mrf.mxu0
    %v622 = vadd.f32 0.0, %v621
    %v623 = vpop.f32.mrf.mxu0
    %624 = vdwg.mxu0
    %v625 = vadd.f32 %v622, %v75
    %v626 = vadd.f32 %v581, %v596
    %v627 = vxor.u32 %v626, 2147483648
    %v628 = vmul.f32 %v627, 1.442695
    %v629 = vpow.pop %v628
    %v630 = vadd.f32 %v629, 1.0
    %v631 = vrcp.pop %v630
    %v632 = vmul.f32 %v630, %v631
    %v633 = vsub.f32 1.0, %v632
    %v634 = vmul.f32 %v631, %v633
    %v635 = vadd.f32 %v631, %v634
    %vm636 = vweird.f32 %v630
    %vm637 = vweird.f32 %v631
    %vm638 = vmor %vm636, %vm637
    %v639 = vsel %vm638, %v631, %v635
    %v640 = vand.u32 2147483647, %v630
    %vm641 = vcmp.eq.f32.partialorder %v640, 8.507059e+37
    %v642 = vand.u32 %v630, 2147483648
    %v643 = vor.u32 1.1754944e-38, %v642
    %v644 = vsel %vm641, %v643, %v639
    %v645 = vmul.f32 1.0, %v644
    %v646 = vadd.f32 %v582, %v609
    %v647 = vxor.u32 %v646, 2147483648
    %v648 = vmul.f32 %v647, 1.442695
    %v649 = vpow.pop %v648
    %v650 = vadd.f32 %v649, 1.0
    %v651 = vrcp.pop %v650
    %v652 = vmul.f32 %v650, %v651
    %v653 = vsub.f32 1.0, %v652
    %v654 = vmul.f32 %v651, %v653
    %v655 = vadd.f32 %v651, %v654
    %vm656 = vweird.f32 %v650
    %vm657 = vweird.f32 %v651
    %vm658 = vmor %vm656, %vm657
    %v659 = vsel %vm658, %v651, %v655
    %v660 = vand.u32 2147483647, %v650
    %vm661 = vcmp.eq.f32.partialorder %v660, 8.507059e+37
    %v662 = vand.u32 %v650, 2147483648
    %v663 = vor.u32 1.1754944e-38, %v662
    %v664 = vsel %vm661, %v663, %v659
    %v665 = vmul.f32 1.0, %v664
    %v666 = vmul.f32 %v645, %v625
    %v667 = vadd.f32 %v583, %v666
    %v668 = vtanh.pop %v667
    %v669 = vsub.f32 1.0, %v665
    %v670 = vmul.f32 %v669, %v668
    %v671 = vmul.f32 %v665, %v584
    %v672 = vadd.f32 %v670, %v671
    %673 = vst [vmem:[#allocation2] sm:$0xff] %v672
    %s674 = scalar_lea.vmem %s0, 120
    %v675 = vld [vmem:[%s674] sm:$0xff]
    %v676 = vld [vmem:[%s674 + $0x8] sm:$0xff]
    %v677 = vld [vmem:[%s674 + $0x10] sm:$0xff]
    %v678 = vld [vmem:[#allocation2] sm:$0xff]
    %v679 = vpack.c.bf16 %v678, %v678
    %680 = vmatpush.bf16.msra.mxu0 %v183
    %681 = vmatpush.bf16.msra.mxu0 %v180
    %682 = vmatpush.bf16.msra.mxu0 %v177
    %683 = vmatpush.bf16.msra.mxu0 %v174
    %684 = vmatpush.bf16.msra.mxu0 %v171
    %685 = vmatpush.bf16.msra.mxu0 %v168
    %686 = vmatpush.bf16.msra.mxu0 %v165
    %687 = vmatpush.bf16.msra.mxu0 %v162
    %688 = vmatmul.bf16.gmra.mxu0 %v679
    %v689 = vpop.f32.mrf.mxu0
    %v690 = vadd.f32 0.0, %v689
    %v691 = vpop.f32.mrf.mxu0
    %692 = vdwg.mxu0
    %693 = vmatpush.bf16.msra.mxu0 %v184
    %694 = vmatpush.bf16.msra.mxu0 %v181
    %695 = vmatpush.bf16.msra.mxu0 %v178
    %696 = vmatpush.bf16.msra.mxu0 %v175
    %697 = vmatpush.bf16.msra.mxu0 %v172
    %698 = vmatpush.bf16.msra.mxu0 %v169
    %699 = vmatpush.bf16.msra.mxu0 %v166
    %700 = vmatpush.bf16.msra.mxu0 %v163
    %701 = vmatmul.bf16.gmra.mxu0 %v679
    %v702 = vpop.f32.mrf.mxu0
    %v703 = vadd.f32 0.0, %v702
    %v704 = vpop.f32.mrf.mxu0
    %705 = vdwg.mxu0
    %706 = vmatpush.bf16.msra.mxu0 %v185
    %707 = vmatpush.bf16.msra.mxu0 %v182
    %708 = vmatpush.bf16.msra.mxu0 %v179
    %709 = vmatpush.bf16.msra.mxu0 %v176
    %710 = vmatpush.bf16.msra.mxu0 %v173
    %711 = vmatpush.bf16.msra.mxu0 %v170
    %712 = vmatpush.bf16.msra.mxu0 %v167
    %713 = vmatpush.bf16.msra.mxu0 %v164
    %714 = vmatmul.bf16.gmra.mxu0 %v679
    %v715 = vpop.f32.mrf.mxu0
    %v716 = vadd.f32 0.0, %v715
    %v717 = vpop.f32.mrf.mxu0
    %718 = vdwg.mxu0
    %v719 = vadd.f32 %v716, %v75
    %v720 = vadd.f32 %v675, %v690
    %v721 = vxor.u32 %v720, 2147483648
    %v722 = vmul.f32 %v721, 1.442695
    %v723 = vpow.pop %v722
    %v724 = vadd.f32 %v723, 1.0
    %v725 = vrcp.pop %v724
    %v726 = vmul.f32 %v724, %v725
    %v727 = vsub.f32 1.0, %v726
    %v728 = vmul.f32 %v725, %v727
    %v729 = vadd.f32 %v725, %v728
    %vm730 = vweird.f32 %v724
    %vm731 = vweird.f32 %v725
    %vm732 = vmor %vm730, %vm731
    %v733 = vsel %vm732, %v725, %v729
    %v734 = vand.u32 2147483647, %v724
    %vm735 = vcmp.eq.f32.partialorder %v734, 8.507059e+37
    %v736 = vand.u32 %v724, 2147483648
    %v737 = vor.u32 1.1754944e-38, %v736
    %v738 = vsel %vm735, %v737, %v733
    %v739 = vmul.f32 1.0, %v738
    %v740 = vadd.f32 %v676, %v703
    %v741 = vxor.u32 %v740, 2147483648
    %v742 = vmul.f32 %v741, 1.442695
    %v743 = vpow.pop %v742
    %v744 = vadd.f32 %v743, 1.0
    %v745 = vrcp.pop %v744
    %v746 = vmul.f32 %v744, %v745
    %v747 = vsub.f32 1.0, %v746
    %v748 = vmul.f32 %v745, %v747
    %v749 = vadd.f32 %v745, %v748
    %vm750 = vweird.f32 %v744
    %vm751 = vweird.f32 %v745
    %vm752 = vmor %vm750, %vm751
    %v753 = vsel %vm752, %v745, %v749
    %v754 = vand.u32 2147483647, %v744
    %vm755 = vcmp.eq.f32.partialorder %v754, 8.507059e+37
    %v756 = vand.u32 %v744, 2147483648
    %v757 = vor.u32 1.1754944e-38, %v756
    %v758 = vsel %vm755, %v757, %v753
    %v759 = vmul.f32 1.0, %v758
    %v760 = vmul.f32 %v739, %v719
    %v761 = vadd.f32 %v677, %v760
    %v762 = vtanh.pop %v761
    %v763 = vsub.f32 1.0, %v759
    %v764 = vmul.f32 %v763, %v762
    %v765 = vmul.f32 %v759, %v678
    %v766 = vadd.f32 %v764, %v765
    %767 = vst [vmem:[#allocation2] sm:$0xff] %v766
    %s768 = scalar_lea.vmem %s0, 144
    %v769 = vld [vmem:[%s768] sm:$0xff]
    %v770 = vld [vmem:[%s768 + $0x8] sm:$0xff]
    %v771 = vld [vmem:[%s768 + $0x10] sm:$0xff]
    %v772 = vld [vmem:[#allocation2] sm:$0xff]
    %v773 = vpack.c.bf16 %v772, %v772
    %774 = vmatpush.bf16.msra.mxu0 %v183
    %775 = vmatpush.bf16.msra.mxu0 %v180
    %776 = vmatpush.bf16.msra.mxu0 %v177
    %777 = vmatpush.bf16.msra.mxu0 %v174
    %778 = vmatpush.bf16.msra.mxu0 %v171
    %779 = vmatpush.bf16.msra.mxu0 %v168
    %780 = vmatpush.bf16.msra.mxu0 %v165
    %781 = vmatpush.bf16.msra.mxu0 %v162
    %782 = vmatmul.bf16.gmra.mxu0 %v773
    %v783 = vpop.f32.mrf.mxu0
    %v784 = vadd.f32 0.0, %v783
    %v785 = vpop.f32.mrf.mxu0
    %786 = vdwg.mxu0
    %787 = vmatpush.bf16.msra.mxu0 %v184
    %788 = vmatpush.bf16.msra.mxu0 %v181
    %789 = vmatpush.bf16.msra.mxu0 %v178
    %790 = vmatpush.bf16.msra.mxu0 %v175
    %791 = vmatpush.bf16.msra.mxu0 %v172
    %792 = vmatpush.bf16.msra.mxu0 %v169
    %793 = vmatpush.bf16.msra.mxu0 %v166
    %794 = vmatpush.bf16.msra.mxu0 %v163
    %795 = vmatmul.bf16.gmra.mxu0 %v773
    %v796 = vpop.f32.mrf.mxu0
    %v797 = vadd.f32 0.0, %v796
    %v798 = vpop.f32.mrf.mxu0
    %799 = vdwg.mxu0
    %800 = vmatpush.bf16.msra.mxu0 %v185
    %801 = vmatpush.bf16.msra.mxu0 %v182
    %802 = vmatpush.bf16.msra.mxu0 %v179
    %803 = vmatpush.bf16.msra.mxu0 %v176
    %804 = vmatpush.bf16.msra.mxu0 %v173
    %805 = vmatpush.bf16.msra.mxu0 %v170
    %806 = vmatpush.bf16.msra.mxu0 %v167
    %807 = vmatpush.bf16.msra.mxu0 %v164
    %808 = vmatmul.bf16.gmra.mxu0 %v773
    %v809 = vpop.f32.mrf.mxu0
    %v810 = vadd.f32 0.0, %v809
    %v811 = vpop.f32.mrf.mxu0
    %812 = vdwg.mxu0
    %v813 = vadd.f32 %v810, %v75
    %v814 = vadd.f32 %v769, %v784
    %v815 = vxor.u32 %v814, 2147483648
    %v816 = vmul.f32 %v815, 1.442695
    %v817 = vpow.pop %v816
    %v818 = vadd.f32 %v817, 1.0
    %v819 = vrcp.pop %v818
    %v820 = vmul.f32 %v818, %v819
    %v821 = vsub.f32 1.0, %v820
    %v822 = vmul.f32 %v819, %v821
    %v823 = vadd.f32 %v819, %v822
    %vm824 = vweird.f32 %v818
    %vm825 = vweird.f32 %v819
    %vm826 = vmor %vm824, %vm825
    %v827 = vsel %vm826, %v819, %v823
    %v828 = vand.u32 2147483647, %v818
    %vm829 = vcmp.eq.f32.partialorder %v828, 8.507059e+37
    %v830 = vand.u32 %v818, 2147483648
    %v831 = vor.u32 1.1754944e-38, %v830
    %v832 = vsel %vm829, %v831, %v827
    %v833 = vmul.f32 1.0, %v832
    %v834 = vadd.f32 %v770, %v797
    %v835 = vxor.u32 %v834, 2147483648
    %v836 = vmul.f32 %v835, 1.442695
    %v837 = vpow.pop %v836
    %v838 = vadd.f32 %v837, 1.0
    %v839 = vrcp.pop %v838
    %v840 = vmul.f32 %v838, %v839
    %v841 = vsub.f32 1.0, %v840
    %v842 = vmul.f32 %v839, %v841
    %v843 = vadd.f32 %v839, %v842
    %vm844 = vweird.f32 %v838
    %vm845 = vweird.f32 %v839
    %vm846 = vmor %vm844, %vm845
    %v847 = vsel %vm846, %v839, %v843
    %v848 = vand.u32 2147483647, %v838
    %vm849 = vcmp.eq.f32.partialorder %v848, 8.507059e+37
    %v850 = vand.u32 %v838, 2147483648
    %v851 = vor.u32 1.1754944e-38, %v850
    %v852 = vsel %vm849, %v851, %v847
    %v853 = vmul.f32 1.0, %v852
    %v854 = vmul.f32 %v833, %v813
    %v855 = vadd.f32 %v771, %v854
    %v856 = vtanh.pop %v855
    %v857 = vsub.f32 1.0, %v853
    %v858 = vmul.f32 %v857, %v856
    %v859 = vmul.f32 %v853, %v772
    %v860 = vadd.f32 %v858, %v859
    %861 = vst [vmem:[#allocation2] sm:$0xff] %v860
    %s862 = scalar_lea.vmem %s0, 168
    %v863 = vld [vmem:[%s862] sm:$0xff]
    %v864 = vld [vmem:[%s862 + $0x8] sm:$0xff]
    %v865 = vld [vmem:[%s862 + $0x10] sm:$0xff]
    %v866 = vld [vmem:[#allocation2] sm:$0xff]
    %v867 = vpack.c.bf16 %v866, %v866
    %868 = vmatpush.bf16.msra.mxu0 %v183
    %869 = vmatpush.bf16.msra.mxu0 %v180
    %870 = vmatpush.bf16.msra.mxu0 %v177
    %871 = vmatpush.bf16.msra.mxu0 %v174
    %872 = vmatpush.bf16.msra.mxu0 %v171
    %873 = vmatpush.bf16.msra.mxu0 %v168
    %874 = vmatpush.bf16.msra.mxu0 %v165
    %875 = vmatpush.bf16.msra.mxu0 %v162
    %876 = vmatmul.bf16.gmra.mxu0 %v867
    %v877 = vpop.f32.mrf.mxu0
    %v878 = vadd.f32 0.0, %v877
    %v879 = vpop.f32.mrf.mxu0
    %880 = vdwg.mxu0
    %881 = vmatpush.bf16.msra.mxu0 %v184
    %882 = vmatpush.bf16.msra.mxu0 %v181
    %883 = vmatpush.bf16.msra.mxu0 %v178
    %884 = vmatpush.bf16.msra.mxu0 %v175
    %885 = vmatpush.bf16.msra.mxu0 %v172
    %886 = vmatpush.bf16.msra.mxu0 %v169
    %887 = vmatpush.bf16.msra.mxu0 %v166
    %888 = vmatpush.bf16.msra.mxu0 %v163
    %889 = vmatmul.bf16.gmra.mxu0 %v867
    %v890 = vpop.f32.mrf.mxu0
    %v891 = vadd.f32 0.0, %v890
    %v892 = vpop.f32.mrf.mxu0
    %893 = vdwg.mxu0
    %894 = vmatpush.bf16.msra.mxu0 %v185
    %895 = vmatpush.bf16.msra.mxu0 %v182
    %896 = vmatpush.bf16.msra.mxu0 %v179
    %897 = vmatpush.bf16.msra.mxu0 %v176
    %898 = vmatpush.bf16.msra.mxu0 %v173
    %899 = vmatpush.bf16.msra.mxu0 %v170
    %900 = vmatpush.bf16.msra.mxu0 %v167
    %901 = vmatpush.bf16.msra.mxu0 %v164
    %902 = vmatmul.bf16.gmra.mxu0 %v867
    %v903 = vpop.f32.mrf.mxu0
    %v904 = vadd.f32 0.0, %v903
    %v905 = vpop.f32.mrf.mxu0
    %906 = vdwg.mxu0
    %v907 = vadd.f32 %v904, %v75
    %v908 = vadd.f32 %v863, %v878
    %v909 = vxor.u32 %v908, 2147483648
    %v910 = vmul.f32 %v909, 1.442695
    %v911 = vpow.pop %v910
    %v912 = vadd.f32 %v911, 1.0
    %v913 = vrcp.pop %v912
    %v914 = vmul.f32 %v912, %v913
    %v915 = vsub.f32 1.0, %v914
    %v916 = vmul.f32 %v913, %v915
    %v917 = vadd.f32 %v913, %v916
    %vm918 = vweird.f32 %v912
    %vm919 = vweird.f32 %v913
    %vm920 = vmor %vm918, %vm919
    %v921 = vsel %vm920, %v913, %v917
    %v922 = vand.u32 2147483647, %v912
    %vm923 = vcmp.eq.f32.partialorder %v922, 8.507059e+37
    %v924 = vand.u32 %v912, 2147483648
    %v925 = vor.u32 1.1754944e-38, %v924
    %v926 = vsel %vm923, %v925, %v921
    %v927 = vmul.f32 1.0, %v926
    %v928 = vadd.f32 %v864, %v891
    %v929 = vxor.u32 %v928, 2147483648
    %v930 = vmul.f32 %v929, 1.442695
    %v931 = vpow.pop %v930
    %v932 = vadd.f32 %v931, 1.0
    %v933 = vrcp.pop %v932
    %v934 = vmul.f32 %v932, %v933
    %v935 = vsub.f32 1.0, %v934
    %v936 = vmul.f32 %v933, %v935
    %v937 = vadd.f32 %v933, %v936
    %vm938 = vweird.f32 %v932
    %vm939 = vweird.f32 %v933
    %vm940 = vmor %vm938, %vm939
    %v941 = vsel %vm940, %v933, %v937
    %v942 = vand.u32 2147483647, %v932
    %vm943 = vcmp.eq.f32.partialorder %v942, 8.507059e+37
    %v944 = vand.u32 %v932, 2147483648
    %v945 = vor.u32 1.1754944e-38, %v944
    %v946 = vsel %vm943, %v945, %v941
    %v947 = vmul.f32 1.0, %v946
    %v948 = vmul.f32 %v927, %v907
    %v949 = vadd.f32 %v865, %v948
    %v950 = vtanh.pop %v949
    %v951 = vsub.f32 1.0, %v947
    %v952 = vmul.f32 %v951, %v950
    %v953 = vmul.f32 %v947, %v866
    %v954 = vadd.f32 %v952, %v953
    %955 = vst [vmem:[#allocation2] sm:$0xff] %v954
    // Predicated region
    $region30: #{gru_model_forward.5} parent=1 // pred_check
      %p956 = pneg %p36
    $region31: #{gru_model_forward.5} parent=1 // pred_check_branch
      %958 = sbr.rel (%p956) target = $region33
    $region32: #{gru_model_forward.5} parent=1 // pred_region
      %v959 = vld [vmem:[#allocation2] sm:$0xff]
      %v960 = vpack.c.bf16 %v959, %v959
      %v961 = vld [vmem:[%s3] sm:$0xf]
      %v962 = vld [vmem:[%s3 + $0x4] sm:$0xf]
      %v963 = vld [vmem:[%s3 + $0x8] sm:$0xf]
      %v964 = vld [vmem:[%s3 + $0xc] sm:$0xf]
      %v965 = vld [vmem:[%s3 + $0x10] sm:$0xf]
      %v966 = vld [vmem:[%s3 + $0x14] sm:$0xf]
      %v967 = vld [vmem:[%s3 + $0x18] sm:$0xf]
      %v968 = vld [vmem:[%s3 + $0x1c] sm:$0xf]
      %v969 = vld [vmem:[%s3 + $0x20] sm:$0xf]
      %v970 = vld [vmem:[%s3 + $0x24] sm:$0xf]
      %v971 = vld [vmem:[%s3 + $0x28] sm:$0xf]
      %v972 = vld [vmem:[%s3 + $0x2c] sm:$0xf]
      %v973 = vld [vmem:[%s3 + $0x30] sm:$0xf]
      %v974 = vld [vmem:[%s3 + $0x34] sm:$0xf]
      %v975 = vld [vmem:[%s3 + $0x38] sm:$0xf]
      %v976 = vld [vmem:[%s3 + $0x3c] sm:$0xf]
      %v977 = vld [vmem:[%s4] sm:$0x1]
      %v979 = vperm.slane %v977, 0
      %v997 = vunpack.c.l.b16 %v961
      %v998 = vunpack.c.l.b16 %v962
      %v999 = vunpack.c.l.b16 %v963
      %v1000 = vunpack.c.l.b16 %v964
      %v1001 = vunpack.c.l.b16 %v965
      %v1002 = vunpack.c.l.b16 %v966
      %v1003 = vunpack.c.l.b16 %v967
      %v1004 = vunpack.c.l.b16 %v968
      %v1005 = vunpack.c.l.b16 %v969
      %v1006 = vunpack.c.l.b16 %v970
      %v1007 = vunpack.c.l.b16 %v971
      %v1008 = vunpack.c.l.b16 %v972
      %v1009 = vunpack.c.l.b16 %v973
      %v1010 = vunpack.c.l.b16 %v974
      %v1011 = vunpack.c.l.b16 %v975
      %v1012 = vunpack.c.l.b16 %v976
      %v1013 = vpack.c.b16 %v998, %v997
      %v1014 = vpack.c.b16 %v1000, %v999
      %v1015 = vpack.c.b16 %v1002, %v1001
      %v1016 = vpack.c.b16 %v1004, %v1003
      %v1017 = vpack.c.b16 %v1006, %v1005
      %v1018 = vpack.c.b16 %v1008, %v1007
      %v1019 = vpack.c.b16 %v1010, %v1009
      %v1020 = vpack.c.b16 %v1012, %v1011
      %1029 = vmatpush.bf16.msra.mxu0 %v1020
      %1030 = vmatpush.bf16.msra.mxu0 %v1019
      %1031 = vmatpush.bf16.msra.mxu0 %v1018
      %1032 = vmatpush.bf16.msra.mxu0 %v1017
      %1033 = vmatpush.bf16.msra.mxu0 %v1016
      %1034 = vmatpush.bf16.msra.mxu0 %v1015
      %1035 = vmatpush.bf16.msra.mxu0 %v1014
      %1036 = vmatpush.bf16.msra.mxu0 %v1013
      %1037 = vmatmul.bf16.gmra.mxu0 %v960
      %v1038 = vpop.f32.mrf.mxu0
      %v1039 = vadd.f32 %v979, %v1038
      %v1040 = vpop.f32.mrf.mxu0
      %1041 = vdwg.mxu0
      %1042 = vst [vmem:[%s5] sm:$0xff] %v1039
    $region33: #{gru_model_forward.5} parent=1 // pred_fallthru
      _
    // Predicated region
    $region34: #{gru_model_forward.5} parent=1 // pred_check
      _
    $region35: #{gru_model_forward.5} parent=1 // pred_check_branch
      %1044 = sbr.rel (0) target = $region37
    $region36: #{gru_model_forward.5} parent=1 // pred_region
      _
    $region37: #{gru_model_forward.5} parent=1 // pred_fallthru
      _
    // Predicated region
    $region38: #{gru_model_forward.5} parent=1 // pred_check
      _
    $region39: #{gru_model_forward.5} parent=1 // pred_check_branch
      %1046 = sbr.rel (0) target = $region41
    $region40: #{gru_model_forward.5} parent=1 // pred_region
      _
    $region41: #{gru_model_forward.5} parent=1 // pred_fallthru
      _
    %1047 = vsyncpa [#allocation4], 1

// kernel: gru_model_forward.4
$region0: #{gru_model_forward.4}
  #allocation0 [shape = 'u32[]', space=smem, size = 0x4, offset = 0x4, fixed_abs, tag = 'smem constant byte address 0x4 - core index']
  #allocation1 [shape = 'u32[72,128]{1,0:T(1,128)}', space=vmem, size = 0x9000, scoped, tag = 'internal scratch']
  #allocation2 [shape = 'f32[8,128]{1,0:T(8,128)}', space=vmem, size = 0x1000, scoped, tag = 'scratch operand']
  #allocation3 [shape = 'f32[8,8,128]{2,1,0:T(8,128)}', space=vmem, size = 0x8000, scoped, tag = 'scratch operand']
  %s0 = inlined_call_operand.vmem [shape: f32[8,8,384], index: 0, kind: input, shape index: {}]
  %s1 = inlined_call_operand.hbm [shape: bf16[128,384], index: 1, kind: input, shape index: {}]
  %s2 = inlined_call_operand.vmem [shape: f32[1,128], index: 2, kind: input, shape index: {}]
  %s3 = inlined_call_operand.hbm [shape: bf16[128,384], index: 3, kind: input, shape index: {}]
  %s4 = inlined_call_operand.vmem [shape: f32[1,384], index: 4, kind: input, shape index: {}]
  %s5 = inlined_call_operand.vmem [shape: f32[8,8,384], index: 5, kind: output, shape index: {}]
  %s6 = sld [smem:[#allocation0]]
  $region42: #{gru_model_forward.4} parent=0
    _
  %s8 = ssub.s32 1, %s6
  %s9 = scalar_select 0, %s8, %s6
  $region1: #{gru_model_forward.4} parent=0
    #allocation4 [shape = 'u8[98304]{0}', space=vmem, size = 0x18000, scoped, tag = 'input window, operand 1, single buffered']
    #allocation5 [shape = 's32[1]{0}', space=sflag, size = 0x4, scoped, tag = 'scoped memory for gru_model_forward.4']
    #allocation6 [shape = 'u8[98304]{0}', space=vmem, size = 0x18000, scoped, tag = 'input window, operand 3, single buffered']
    #allocation7 [shape = 's32[1]{0}', space=sflag, size = 0x4, scoped, tag = 'scoped memory for gru_model_forward.4']
    %10 = vsyncpa [#allocation5], 0
    %11 = vsyncpa [#allocation7], 0
    // Predicated region
    $region2: #{gru_model_forward.4} parent=1 // pred_check
      _
    $region3: #{gru_model_forward.4} parent=1 // pred_check_branch
      %13 = sbr.rel (0) target = $region5
    $region4: #{gru_model_forward.4} parent=1 // pred_region
      _
    $region5: #{gru_model_forward.4} parent=1 // pred_fallthru
      _
    // Predicated region
    $region6: #{gru_model_forward.4} parent=1 // pred_check
      _
    $region7: #{gru_model_forward.4} parent=1 // pred_check_branch
      %15 = sbr.rel (0) target = $region9
    $region8: #{gru_model_forward.4} parent=1 // pred_region
      %17 = vsyncadd [#allocation5], 0
      %s18 = sshll.u32 %s1, 4
      %s19 = int_to_ptr.hbm [resolvable:$true] %s18
      %s20 = sshll.u32 [#allocation4], 4
      %s21 = int_to_ptr.vmem [resolvable:$true] %s20
      %26 = dma.hbm_to_vmem [thread:$0]  %s19, 3072, %s21, [#allocation5], 192, 192, 12
    $region9: #{gru_model_forward.4} parent=1 // pred_fallthru
      _
    // Predicated region
    $region10: #{gru_model_forward.4} parent=1 // pred_check
      _
    $region11: #{gru_model_forward.4} parent=1 // pred_check_branch
      %28 = sbr.rel (0) target = $region13
    $region12: #{gru_model_forward.4} parent=1 // pred_region
      _
    $region13: #{gru_model_forward.4} parent=1 // pred_fallthru
      _
    // Predicated region
    $region14: #{gru_model_forward.4} parent=1 // pred_check
      _
    $region15: #{gru_model_forward.4} parent=1 // pred_check_branch
      %30 = sbr.rel (0) target = $region17
    $region16: #{gru_model_forward.4} parent=1 // pred_region
      %32 = vsyncadd [#allocation7], 0
      %s33 = sshll.u32 %s3, 4
      %s34 = int_to_ptr.hbm [resolvable:$true] %s33
      %s35 = sshll.u32 [#allocation6], 4
      %s36 = int_to_ptr.vmem [resolvable:$true] %s35
      %41 = dma.hbm_to_vmem [thread:$0]  %s34, 3072, %s36, [#allocation7], 192, 192, 12
    $region17: #{gru_model_forward.4} parent=1 // pred_fallthru
      _
    // Predicated region
    $region18: #{gru_model_forward.4} parent=1 // pred_check
      _
    $region19: #{gru_model_forward.4} parent=1 // pred_check_branch
      %43 = sbr.rel (0) target = $region21
    $region20: #{gru_model_forward.4} parent=1 // pred_region
      _
    $region21: #{gru_model_forward.4} parent=1 // pred_fallthru
      _
    // Predicated region
    $region22: #{gru_model_forward.4} parent=1 // pred_check
      _
    $region23: #{gru_model_forward.4} parent=1 // pred_check_branch
      %45 = sbr.rel (0) target = $region25
    $region24: #{gru_model_forward.4} parent=1 // pred_region
      %47 = dma.done [#allocation5], 3072
    $region25: #{gru_model_forward.4} parent=1 // pred_fallthru
      _
    // Predicated region
    $region26: #{gru_model_forward.4} parent=1 // pred_check
      _
    $region27: #{gru_model_forward.4} parent=1 // pred_check_branch
      %49 = sbr.rel (0) target = $region29
    $region28: #{gru_model_forward.4} parent=1 // pred_region
      %51 = dma.done [#allocation7], 3072
    $region29: #{gru_model_forward.4} parent=1 // pred_fallthru
      _
    %p52 = scmp.eq.s32.totalorder 0, 0
    // Predicated region
    $region30: #{gru_model_forward.4} parent=1 // pred_check
      %p53 = pneg %p52
    $region31: #{gru_model_forward.4} parent=1 // pred_check_branch
      %55 = sbr.rel (%p53) target = $region33
    $region32: #{gru_model_forward.4} parent=1 // pred_region
      %56 = vst [vmem:[#allocation2] sm:$0xff] 0.0
    $region33: #{gru_model_forward.4} parent=1 // pred_fallthru
      _
    %v57 = vld [vmem:[#allocation4] sm:$0xff]
    %v58 = vld [vmem:[#allocation4 + $0x8] sm:$0xf]
    %v59 = vld [vmem:[#allocation4 + $0xc] sm:$0xff]
    %v60 = vld [vmem:[#allocation4 + $0x14] sm:$0xf]
    %v61 = vld [vmem:[#allocation4 + $0x18] sm:$0xff]
    %v62 = vld [vmem:[#allocation4 + $0x20] sm:$0xf]
    %v63 = vld [vmem:[#allocation4 + $0x24] sm:$0xff]
    %v64 = vld [vmem:[#allocation4 + $0x2c] sm:$0xf]
    %v65 = vld [vmem:[#allocation4 + $0x30] sm:$0xff]
    %v66 = vld [vmem:[#allocation4 + $0x38] sm:$0xf]
    %v67 = vld [vmem:[#allocation4 + $0x3c] sm:$0xff]
    %v68 = vld [vmem:[#allocation4 + $0x44] sm:$0xf]
    %v69 = vld [vmem:[#allocation4 + $0x48] sm:$0xff]
    %v70 = vld [vmem:[#allocation4 + $0x50] sm:$0xf]
    %v71 = vld [vmem:[#allocation4 + $0x54] sm:$0xff]
    %v72 = vld [vmem:[#allocation4 + $0x5c] sm:$0xf]
    %v73 = vld [vmem:[#allocation4 + $0x60] sm:$0xff]
    %v74 = vld [vmem:[#allocation4 + $0x68] sm:$0xf]
    %v75 = vld [vmem:[#allocation4 + $0x6c] sm:$0xff]
    %v76 = vld [vmem:[#allocation4 + $0x74] sm:$0xf]
    %v77 = vld [vmem:[#allocation4 + $0x78] sm:$0xff]
    %v78 = vld [vmem:[#allocation4 + $0x80] sm:$0xf]
    %v79 = vld [vmem:[#allocation4 + $0x84] sm:$0xff]
    %v80 = vld [vmem:[#allocation4 + $0x8c] sm:$0xf]
    %v81 = vld [vmem:[#allocation4 + $0x90] sm:$0xff]
    %v82 = vld [vmem:[#allocation4 + $0x98] sm:$0xf]
    %v83 = vld [vmem:[#allocation4 + $0x9c] sm:$0xff]
    %v84 = vld [vmem:[#allocation4 + $0xa4] sm:$0xf]
    %v85 = vld [vmem:[#allocation4 + $0xa8] sm:$0xff]
    %v86 = vld [vmem:[#allocation4 + $0xb0] sm:$0xf]
    %v87 = vld [vmem:[#allocation4 + $0xb4] sm:$0xff]
    %v88 = vld [vmem:[#allocation4 + $0xbc] sm:$0xf]
    %v89 = vld [vmem:[%s2] sm:$0x1]
    %v91 = vperm.slane %v89, 0
    %v93 = vld [vmem:[%s0] sm:$0xff]
    %v94 = vld [vmem:[%s0 + $0x8] sm:$0xff]
    %v95 = vld [vmem:[%s0 + $0x10] sm:$0xff]
    %v96 = vld [vmem:[#allocation2] sm:$0xff]
    %v97 = vpack.c.bf16 %v96, %v96
    %v130 = vunpack.c.l.b16 %v57
    %v131 = vunpack.c.h.b16 %v57
    %v132 = vunpack.c.l.b16 %v58
    %v133 = vunpack.c.l.b16 %v59
    %v134 = vunpack.c.h.b16 %v59
    %v135 = vunpack.c.l.b16 %v60
    %v136 = vunpack.c.l.b16 %v61
    %v137 = vunpack.c.h.b16 %v61
    %v138 = vunpack.c.l.b16 %v62
    %v139 = vunpack.c.l.b16 %v63
    %v140 = vunpack.c.h.b16 %v63
    %v141 = vunpack.c.l.b16 %v64
    %v142 = vunpack.c.l.b16 %v65
    %v143 = vunpack.c.h.b16 %v65
    %v144 = vunpack.c.l.b16 %v66
    %v145 = vunpack.c.l.b16 %v67
    %v146 = vunpack.c.h.b16 %v67
    %v147 = vunpack.c.l.b16 %v68
    %v148 = vunpack.c.l.b16 %v69
    %v149 = vunpack.c.h.b16 %v69
    %v150 = vunpack.c.l.b16 %v70
    %v151 = vunpack.c.l.b16 %v71
    %v152 = vunpack.c.h.b16 %v71
    %v153 = vunpack.c.l.b16 %v72
    %v154 = vunpack.c.l.b16 %v73
    %v155 = vunpack.c.h.b16 %v73
    %v156 = vunpack.c.l.b16 %v74
    %v157 = vunpack.c.l.b16 %v75
    %v158 = vunpack.c.h.b16 %v75
    %v159 = vunpack.c.l.b16 %v76
    %v160 = vunpack.c.l.b16 %v77
    %v161 = vunpack.c.h.b16 %v77
    %v162 = vunpack.c.l.b16 %v78
    %v163 = vunpack.c.l.b16 %v79
    %v164 = vunpack.c.h.b16 %v79
    %v165 = vunpack.c.l.b16 %v80
    %v166 = vunpack.c.l.b16 %v81
    %v167 = vunpack.c.h.b16 %v81
    %v168 = vunpack.c.l.b16 %v82
    %v169 = vunpack.c.l.b16 %v83
    %v170 = vunpack.c.h.b16 %v83
    %v171 = vunpack.c.l.b16 %v84
    %v172 = vunpack.c.l.b16 %v85
    %v173 = vunpack.c.h.b16 %v85
    %v174 = vunpack.c.l.b16 %v86
    %v175 = vunpack.c.l.b16 %v87
    %v176 = vunpack.c.h.b16 %v87
    %v177 = vunpack.c.l.b16 %v88
    %v178 = vpack.c.b16 %v133, %v130
    %v179 = vpack.c.b16 %v134, %v131
    %v180 = vpack.c.b16 %v135, %v132
    %v181 = vpack.c.b16 %v139, %v136
    %v182 = vpack.c.b16 %v140, %v137
    %v183 = vpack.c.b16 %v141, %v138
    %v184 = vpack.c.b16 %v145, %v142
    %v185 = vpack.c.b16 %v146, %v143
    %v186 = vpack.c.b16 %v147, %v144
    %v187 = vpack.c.b16 %v151, %v148
    %v188 = vpack.c.b16 %v152, %v149
    %v189 = vpack.c.b16 %v153, %v150
    %v190 = vpack.c.b16 %v157, %v154
    %v191 = vpack.c.b16 %v158, %v155
    %v192 = vpack.c.b16 %v159, %v156
    %v193 = vpack.c.b16 %v163, %v160
    %v194 = vpack.c.b16 %v164, %v161
    %v195 = vpack.c.b16 %v165, %v162
    %v196 = vpack.c.b16 %v169, %v166
    %v197 = vpack.c.b16 %v170, %v167
    %v198 = vpack.c.b16 %v171, %v168
    %v199 = vpack.c.b16 %v175, %v172
    %v200 = vpack.c.b16 %v176, %v173
    %v201 = vpack.c.b16 %v177, %v174
    %226 = vmatpush.bf16.msra.mxu0 %v199
    %227 = vmatpush.bf16.msra.mxu0 %v196
    %228 = vmatpush.bf16.msra.mxu0 %v193
    %229 = vmatpush.bf16.msra.mxu0 %v190
    %230 = vmatpush.bf16.msra.mxu0 %v187
    %231 = vmatpush.bf16.msra.mxu0 %v184
    %232 = vmatpush.bf16.msra.mxu0 %v181
    %233 = vmatpush.bf16.msra.mxu0 %v178
    %234 = vmatmul.bf16.gmra.mxu0 %v97
    %v235 = vpop.f32.mrf.mxu0
    %v236 = vadd.f32 0.0, %v235
    %v237 = vpop.f32.mrf.mxu0
    %238 = vdwg.mxu0
    %239 = vmatpush.bf16.msra.mxu0 %v200
    %240 = vmatpush.bf16.msra.mxu0 %v197
    %241 = vmatpush.bf16.msra.mxu0 %v194
    %242 = vmatpush.bf16.msra.mxu0 %v191
    %243 = vmatpush.bf16.msra.mxu0 %v188
    %244 = vmatpush.bf16.msra.mxu0 %v185
    %245 = vmatpush.bf16.msra.mxu0 %v182
    %246 = vmatpush.bf16.msra.mxu0 %v179
    %247 = vmatmul.bf16.gmra.mxu0 %v97
    %v248 = vpop.f32.mrf.mxu0
    %v249 = vadd.f32 0.0, %v248
    %v250 = vpop.f32.mrf.mxu0
    %251 = vdwg.mxu0
    %252 = vmatpush.bf16.msra.mxu0 %v201
    %253 = vmatpush.bf16.msra.mxu0 %v198
    %254 = vmatpush.bf16.msra.mxu0 %v195
    %255 = vmatpush.bf16.msra.mxu0 %v192
    %256 = vmatpush.bf16.msra.mxu0 %v189
    %257 = vmatpush.bf16.msra.mxu0 %v186
    %258 = vmatpush.bf16.msra.mxu0 %v183
    %259 = vmatpush.bf16.msra.mxu0 %v180
    %260 = vmatmul.bf16.gmra.mxu0 %v97
    %v261 = vpop.f32.mrf.mxu0
    %v262 = vadd.f32 0.0, %v261
    %v263 = vpop.f32.mrf.mxu0
    %264 = vdwg.mxu0
    %v265 = vadd.f32 %v262, %v91
    %v266 = vadd.f32 %v93, %v236
    %v267 = vxor.u32 %v266, 2147483648
    %v268 = vmul.f32 %v267, 1.442695
    %v269 = vpow.pop %v268
    %v270 = vadd.f32 %v269, 1.0
    %v271 = vrcp.pop %v270
    %v272 = vmul.f32 %v270, %v271
    %v273 = vsub.f32 1.0, %v272
    %v274 = vmul.f32 %v271, %v273
    %v275 = vadd.f32 %v271, %v274
    %vm276 = vweird.f32 %v270
    %vm277 = vweird.f32 %v271
    %vm278 = vmor %vm276, %vm277
    %v279 = vsel %vm278, %v271, %v275
    %v280 = vand.u32 2147483647, %v270
    %vm281 = vcmp.eq.f32.partialorder %v280, 8.507059e+37
    %v282 = vand.u32 %v270, 2147483648
    %v283 = vor.u32 1.1754944e-38, %v282
    %v284 = vsel %vm281, %v283, %v279
    %v285 = vmul.f32 1.0, %v284
    %v286 = vadd.f32 %v94, %v249
    %v287 = vxor.u32 %v286, 2147483648
    %v288 = vmul.f32 %v287, 1.442695
    %v289 = vpow.pop %v288
    %v290 = vadd.f32 %v289, 1.0
    %v291 = vrcp.pop %v290
    %v292 = vmul.f32 %v290, %v291
    %v293 = vsub.f32 1.0, %v292
    %v294 = vmul.f32 %v291, %v293
    %v295 = vadd.f32 %v291, %v294
    %vm296 = vweird.f32 %v290
    %vm297 = vweird.f32 %v291
    %vm298 = vmor %vm296, %vm297
    %v299 = vsel %vm298, %v291, %v295
    %v300 = vand.u32 2147483647, %v290
    %vm301 = vcmp.eq.f32.partialorder %v300, 8.507059e+37
    %v302 = vand.u32 %v290, 2147483648
    %v303 = vor.u32 1.1754944e-38, %v302
    %v304 = vsel %vm301, %v303, %v299
    %v305 = vmul.f32 1.0, %v304
    %v306 = vmul.f32 %v285, %v265
    %v307 = vadd.f32 %v95, %v306
    %v308 = vtanh.pop %v307
    %v309 = vsub.f32 1.0, %v305
    %v310 = vmul.f32 %v309, %v308
    %v311 = vmul.f32 %v305, %v96
    %v312 = vadd.f32 %v310, %v311
    %313 = vst [vmem:[#allocation2] sm:$0xff] %v312
    %314 = vst [vmem:[#allocation3] sm:$0xff] %v312
    %s315 = scalar_lea.vmem %s0, 24
    %v316 = vld [vmem:[%s315] sm:$0xff]
    %v317 = vld [vmem:[%s315 + $0x8] sm:$0xff]
    %v318 = vld [vmem:[%s315 + $0x10] sm:$0xff]
    %v319 = vld [vmem:[#allocation2] sm:$0xff]
    %v320 = vpack.c.bf16 %v319, %v319
    %321 = vmatpush.bf16.msra.mxu0 %v199
    %322 = vmatpush.bf16.msra.mxu0 %v196
    %323 = vmatpush.bf16.msra.mxu0 %v193
    %324 = vmatpush.bf16.msra.mxu0 %v190
    %325 = vmatpush.bf16.msra.mxu0 %v187
    %326 = vmatpush.bf16.msra.mxu0 %v184
    %327 = vmatpush.bf16.msra.mxu0 %v181
    %328 = vmatpush.bf16.msra.mxu0 %v178
    %329 = vmatmul.bf16.gmra.mxu0 %v320
    %v330 = vpop.f32.mrf.mxu0
    %v331 = vadd.f32 0.0, %v330
    %v332 = vpop.f32.mrf.mxu0
    %333 = vdwg.mxu0
    %334 = vmatpush.bf16.msra.mxu0 %v200
    %335 = vmatpush.bf16.msra.mxu0 %v197
    %336 = vmatpush.bf16.msra.mxu0 %v194
    %337 = vmatpush.bf16.msra.mxu0 %v191
    %338 = vmatpush.bf16.msra.mxu0 %v188
    %339 = vmatpush.bf16.msra.mxu0 %v185
    %340 = vmatpush.bf16.msra.mxu0 %v182
    %341 = vmatpush.bf16.msra.mxu0 %v179
    %342 = vmatmul.bf16.gmra.mxu0 %v320
    %v343 = vpop.f32.mrf.mxu0
    %v344 = vadd.f32 0.0, %v343
    %v345 = vpop.f32.mrf.mxu0
    %346 = vdwg.mxu0
    %347 = vmatpush.bf16.msra.mxu0 %v201
    %348 = vmatpush.bf16.msra.mxu0 %v198
    %349 = vmatpush.bf16.msra.mxu0 %v195
    %350 = vmatpush.bf16.msra.mxu0 %v192
    %351 = vmatpush.bf16.msra.mxu0 %v189
    %352 = vmatpush.bf16.msra.mxu0 %v186
    %353 = vmatpush.bf16.msra.mxu0 %v183
    %354 = vmatpush.bf16.msra.mxu0 %v180
    %355 = vmatmul.bf16.gmra.mxu0 %v320
    %v356 = vpop.f32.mrf.mxu0
    %v357 = vadd.f32 0.0, %v356
    %v358 = vpop.f32.mrf.mxu0
    %359 = vdwg.mxu0
    %v360 = vadd.f32 %v357, %v91
    %v361 = vadd.f32 %v316, %v331
    %v362 = vxor.u32 %v361, 2147483648
    %v363 = vmul.f32 %v362, 1.442695
    %v364 = vpow.pop %v363
    %v365 = vadd.f32 %v364, 1.0
    %v366 = vrcp.pop %v365
    %v367 = vmul.f32 %v365, %v366
    %v368 = vsub.f32 1.0, %v367
    %v369 = vmul.f32 %v366, %v368
    %v370 = vadd.f32 %v366, %v369
    %vm371 = vweird.f32 %v365
    %vm372 = vweird.f32 %v366
    %vm373 = vmor %vm371, %vm372
    %v374 = vsel %vm373, %v366, %v370
    %v375 = vand.u32 2147483647, %v365
    %vm376 = vcmp.eq.f32.partialorder %v375, 8.507059e+37
    %v377 = vand.u32 %v365, 2147483648
    %v378 = vor.u32 1.1754944e-38, %v377
    %v379 = vsel %vm376, %v378, %v374
    %v380 = vmul.f32 1.0, %v379
    %v381 = vadd.f32 %v317, %v344
    %v382 = vxor.u32 %v381, 2147483648
    %v383 = vmul.f32 %v382, 1.442695
    %v384 = vpow.pop %v383
    %v385 = vadd.f32 %v384, 1.0
    %v386 = vrcp.pop %v385
    %v387 = vmul.f32 %v385, %v386
    %v388 = vsub.f32 1.0, %v387
    %v389 = vmul.f32 %v386, %v388
    %v390 = vadd.f32 %v386, %v389
    %vm391 = vweird.f32 %v385
    %vm392 = vweird.f32 %v386
    %vm393 = vmor %vm391, %vm392
    %v394 = vsel %vm393, %v386, %v390
    %v395 = vand.u32 2147483647, %v385
    %vm396 = vcmp.eq.f32.partialorder %v395, 8.507059e+37
    %v397 = vand.u32 %v385, 2147483648
    %v398 = vor.u32 1.1754944e-38, %v397
    %v399 = vsel %vm396, %v398, %v394
    %v400 = vmul.f32 1.0, %v399
    %v401 = vmul.f32 %v380, %v360
    %v402 = vadd.f32 %v318, %v401
    %v403 = vtanh.pop %v402
    %v404 = vsub.f32 1.0, %v400
    %v405 = vmul.f32 %v404, %v403
    %v406 = vmul.f32 %v400, %v319
    %v407 = vadd.f32 %v405, %v406
    %408 = vst [vmem:[#allocation2] sm:$0xff] %v407
    %s409 = scalar_lea.vmem [#allocation3], 8
    %410 = vst [vmem:[%s409] sm:$0xff] %v407
    %s411 = scalar_lea.vmem %s0, 48
    %v412 = vld [vmem:[%s411] sm:$0xff]
    %v413 = vld [vmem:[%s411 + $0x8] sm:$0xff]
    %v414 = vld [vmem:[%s411 + $0x10] sm:$0xff]
    %v415 = vld [vmem:[#allocation2] sm:$0xff]
    %v416 = vpack.c.bf16 %v415, %v415
    %417 = vmatpush.bf16.msra.mxu0 %v199
    %418 = vmatpush.bf16.msra.mxu0 %v196
    %419 = vmatpush.bf16.msra.mxu0 %v193
    %420 = vmatpush.bf16.msra.mxu0 %v190
    %421 = vmatpush.bf16.msra.mxu0 %v187
    %422 = vmatpush.bf16.msra.mxu0 %v184
    %423 = vmatpush.bf16.msra.mxu0 %v181
    %424 = vmatpush.bf16.msra.mxu0 %v178
    %425 = vmatmul.bf16.gmra.mxu0 %v416
    %v426 = vpop.f32.mrf.mxu0
    %v427 = vadd.f32 0.0, %v426
    %v428 = vpop.f32.mrf.mxu0
    %429 = vdwg.mxu0
    %430 = vmatpush.bf16.msra.mxu0 %v200
    %431 = vmatpush.bf16.msra.mxu0 %v197
    %432 = vmatpush.bf16.msra.mxu0 %v194
    %433 = vmatpush.bf16.msra.mxu0 %v191
    %434 = vmatpush.bf16.msra.mxu0 %v188
    %435 = vmatpush.bf16.msra.mxu0 %v185
    %436 = vmatpush.bf16.msra.mxu0 %v182
    %437 = vmatpush.bf16.msra.mxu0 %v179
    %438 = vmatmul.bf16.gmra.mxu0 %v416
    %v439 = vpop.f32.mrf.mxu0
    %v440 = vadd.f32 0.0, %v439
    %v441 = vpop.f32.mrf.mxu0
    %442 = vdwg.mxu0
    %443 = vmatpush.bf16.msra.mxu0 %v201
    %444 = vmatpush.bf16.msra.mxu0 %v198
    %445 = vmatpush.bf16.msra.mxu0 %v195
    %446 = vmatpush.bf16.msra.mxu0 %v192
    %447 = vmatpush.bf16.msra.mxu0 %v189
    %448 = vmatpush.bf16.msra.mxu0 %v186
    %449 = vmatpush.bf16.msra.mxu0 %v183
    %450 = vmatpush.bf16.msra.mxu0 %v180
    %451 = vmatmul.bf16.gmra.mxu0 %v416
    %v452 = vpop.f32.mrf.mxu0
    %v453 = vadd.f32 0.0, %v452
    %v454 = vpop.f32.mrf.mxu0
    %455 = vdwg.mxu0
    %v456 = vadd.f32 %v453, %v91
    %v457 = vadd.f32 %v412, %v427
    %v458 = vxor.u32 %v457, 2147483648
    %v459 = vmul.f32 %v458, 1.442695
    %v460 = vpow.pop %v459
    %v461 = vadd.f32 %v460, 1.0
    %v462 = vrcp.pop %v461
    %v463 = vmul.f32 %v461, %v462
    %v464 = vsub.f32 1.0, %v463
    %v465 = vmul.f32 %v462, %v464
    %v466 = vadd.f32 %v462, %v465
    %vm467 = vweird.f32 %v461
    %vm468 = vweird.f32 %v462
    %vm469 = vmor %vm467, %vm468
    %v470 = vsel %vm469, %v462, %v466
    %v471 = vand.u32 2147483647, %v461
    %vm472 = vcmp.eq.f32.partialorder %v471, 8.507059e+37
    %v473 = vand.u32 %v461, 2147483648
    %v474 = vor.u32 1.1754944e-38, %v473
    %v475 = vsel %vm472, %v474, %v470
    %v476 = vmul.f32 1.0, %v475
    %v477 = vadd.f32 %v413, %v440
    %v478 = vxor.u32 %v477, 2147483648
    %v479 = vmul.f32 %v478, 1.442695
    %v480 = vpow.pop %v479
    %v481 = vadd.f32 %v480, 1.0
    %v482 = vrcp.pop %v481
    %v483 = vmul.f32 %v481, %v482
    %v484 = vsub.f32 1.0, %v483
    %v485 = vmul.f32 %v482, %v484
    %v486 = vadd.f32 %v482, %v485
    %vm487 = vweird.f32 %v481
    %vm488 = vweird.f32 %v482
    %vm489 = vmor %vm487, %vm488
    %v490 = vsel %vm489, %v482, %v486
    %v491 = vand.u32 2147483647, %v481
    %vm492 = vcmp.eq.f32.partialorder %v491, 8.507059e+37
    %v493 = vand.u32 %v481, 2147483648
    %v494 = vor.u32 1.1754944e-38, %v493
    %v495 = vsel %vm492, %v494, %v490
    %v496 = vmul.f32 1.0, %v495
    %v497 = vmul.f32 %v476, %v456
    %v498 = vadd.f32 %v414, %v497
    %v499 = vtanh.pop %v498
    %v500 = vsub.f32 1.0, %v496
    %v501 = vmul.f32 %v500, %v499
    %v502 = vmul.f32 %v496, %v415
    %v503 = vadd.f32 %v501, %v502
    %504 = vst [vmem:[#allocation2] sm:$0xff] %v503
    %s505 = scalar_lea.vmem [#allocation3], 16
    %506 = vst [vmem:[%s505] sm:$0xff] %v503
    %s507 = scalar_lea.vmem %s0, 72
    %v508 = vld [vmem:[%s507] sm:$0xff]
    %v509 = vld [vmem:[%s507 + $0x8] sm:$0xff]
    %v510 = vld [vmem:[%s507 + $0x10] sm:$0xff]
    %v511 = vld [vmem:[#allocation2] sm:$0xff]
    %v512 = vpack.c.bf16 %v511, %v511
    %513 = vmatpush.bf16.msra.mxu0 %v199
    %514 = vmatpush.bf16.msra.mxu0 %v196
    %515 = vmatpush.bf16.msra.mxu0 %v193
    %516 = vmatpush.bf16.msra.mxu0 %v190
    %517 = vmatpush.bf16.msra.mxu0 %v187
    %518 = vmatpush.bf16.msra.mxu0 %v184
    %519 = vmatpush.bf16.msra.mxu0 %v181
    %520 = vmatpush.bf16.msra.mxu0 %v178
    %521 = vmatmul.bf16.gmra.mxu0 %v512
    %v522 = vpop.f32.mrf.mxu0
    %v523 = vadd.f32 0.0, %v522
    %v524 = vpop.f32.mrf.mxu0
    %525 = vdwg.mxu0
    %526 = vmatpush.bf16.msra.mxu0 %v200
    %527 = vmatpush.bf16.msra.mxu0 %v197
    %528 = vmatpush.bf16.msra.mxu0 %v194
    %529 = vmatpush.bf16.msra.mxu0 %v191
    %530 = vmatpush.bf16.msra.mxu0 %v188
    %531 = vmatpush.bf16.msra.mxu0 %v185
    %532 = vmatpush.bf16.msra.mxu0 %v182
    %533 = vmatpush.bf16.msra.mxu0 %v179
    %534 = vmatmul.bf16.gmra.mxu0 %v512
    %v535 = vpop.f32.mrf.mxu0
    %v536 = vadd.f32 0.0, %v535
    %v537 = vpop.f32.mrf.mxu0
    %538 = vdwg.mxu0
    %539 = vmatpush.bf16.msra.mxu0 %v201
    %540 = vmatpush.bf16.msra.mxu0 %v198
    %541 = vmatpush.bf16.msra.mxu0 %v195
    %542 = vmatpush.bf16.msra.mxu0 %v192
    %543 = vmatpush.bf16.msra.mxu0 %v189
    %544 = vmatpush.bf16.msra.mxu0 %v186
    %545 = vmatpush.bf16.msra.mxu0 %v183
    %546 = vmatpush.bf16.msra.mxu0 %v180
    %547 = vmatmul.bf16.gmra.mxu0 %v512
    %v548 = vpop.f32.mrf.mxu0
    %v549 = vadd.f32 0.0, %v548
    %v550 = vpop.f32.mrf.mxu0
    %551 = vdwg.mxu0
    %v552 = vadd.f32 %v549, %v91
    %v553 = vadd.f32 %v508, %v523
    %v554 = vxor.u32 %v553, 2147483648
    %v555 = vmul.f32 %v554, 1.442695
    %v556 = vpow.pop %v555
    %v557 = vadd.f32 %v556, 1.0
    %v558 = vrcp.pop %v557
    %v559 = vmul.f32 %v557, %v558
    %v560 = vsub.f32 1.0, %v559
    %v561 = vmul.f32 %v558, %v560
    %v562 = vadd.f32 %v558, %v561
    %vm563 = vweird.f32 %v557
    %vm564 = vweird.f32 %v558
    %vm565 = vmor %vm563, %vm564
    %v566 = vsel %vm565, %v558, %v562
    %v567 = vand.u32 2147483647, %v557
    %vm568 = vcmp.eq.f32.partialorder %v567, 8.507059e+37
    %v569 = vand.u32 %v557, 2147483648
    %v570 = vor.u32 1.1754944e-38, %v569
    %v571 = vsel %vm568, %v570, %v566
    %v572 = vmul.f32 1.0, %v571
    %v573 = vadd.f32 %v509, %v536
    %v574 = vxor.u32 %v573, 2147483648
    %v575 = vmul.f32 %v574, 1.442695
    %v576 = vpow.pop %v575
    %v577 = vadd.f32 %v576, 1.0
    %v578 = vrcp.pop %v577
    %v579 = vmul.f32 %v577, %v578
    %v580 = vsub.f32 1.0, %v579
    %v581 = vmul.f32 %v578, %v580
    %v582 = vadd.f32 %v578, %v581
    %vm583 = vweird.f32 %v577
    %vm584 = vweird.f32 %v578
    %vm585 = vmor %vm583, %vm584
    %v586 = vsel %vm585, %v578, %v582
    %v587 = vand.u32 2147483647, %v577
    %vm588 = vcmp.eq.f32.partialorder %v587, 8.507059e+37
    %v589 = vand.u32 %v577, 2147483648
    %v590 = vor.u32 1.1754944e-38, %v589
    %v591 = vsel %vm588, %v590, %v586
    %v592 = vmul.f32 1.0, %v591
    %v593 = vmul.f32 %v572, %v552
    %v594 = vadd.f32 %v510, %v593
    %v595 = vtanh.pop %v594
    %v596 = vsub.f32 1.0, %v592
    %v597 = vmul.f32 %v596, %v595
    %v598 = vmul.f32 %v592, %v511
    %v599 = vadd.f32 %v597, %v598
    %600 = vst [vmem:[#allocation2] sm:$0xff] %v599
    %s601 = scalar_lea.vmem [#allocation3], 24
    %602 = vst [vmem:[%s601] sm:$0xff] %v599
    %s603 = scalar_lea.vmem %s0, 96
    %v604 = vld [vmem:[%s603] sm:$0xff]
    %v605 = vld [vmem:[%s603 + $0x8] sm:$0xff]
    %v606 = vld [vmem:[%s603 + $0x10] sm:$0xff]
    %v607 = vld [vmem:[#allocation2] sm:$0xff]
    %v608 = vpack.c.bf16 %v607, %v607
    %609 = vmatpush.bf16.msra.mxu0 %v199
    %610 = vmatpush.bf16.msra.mxu0 %v196
    %611 = vmatpush.bf16.msra.mxu0 %v193
    %612 = vmatpush.bf16.msra.mxu0 %v190
    %613 = vmatpush.bf16.msra.mxu0 %v187
    %614 = vmatpush.bf16.msra.mxu0 %v184
    %615 = vmatpush.bf16.msra.mxu0 %v181
    %616 = vmatpush.bf16.msra.mxu0 %v178
    %617 = vmatmul.bf16.gmra.mxu0 %v608
    %v618 = vpop.f32.mrf.mxu0
    %v619 = vadd.f32 0.0, %v618
    %v620 = vpop.f32.mrf.mxu0
    %621 = vdwg.mxu0
    %622 = vmatpush.bf16.msra.mxu0 %v200
    %623 = vmatpush.bf16.msra.mxu0 %v197
    %624 = vmatpush.bf16.msra.mxu0 %v194
    %625 = vmatpush.bf16.msra.mxu0 %v191
    %626 = vmatpush.bf16.msra.mxu0 %v188
    %627 = vmatpush.bf16.msra.mxu0 %v185
    %628 = vmatpush.bf16.msra.mxu0 %v182
    %629 = vmatpush.bf16.msra.mxu0 %v179
    %630 = vmatmul.bf16.gmra.mxu0 %v608
    %v631 = vpop.f32.mrf.mxu0
    %v632 = vadd.f32 0.0, %v631
    %v633 = vpop.f32.mrf.mxu0
    %634 = vdwg.mxu0
    %635 = vmatpush.bf16.msra.mxu0 %v201
    %636 = vmatpush.bf16.msra.mxu0 %v198
    %637 = vmatpush.bf16.msra.mxu0 %v195
    %638 = vmatpush.bf16.msra.mxu0 %v192
    %639 = vmatpush.bf16.msra.mxu0 %v189
    %640 = vmatpush.bf16.msra.mxu0 %v186
    %641 = vmatpush.bf16.msra.mxu0 %v183
    %642 = vmatpush.bf16.msra.mxu0 %v180
    %643 = vmatmul.bf16.gmra.mxu0 %v608
    %v644 = vpop.f32.mrf.mxu0
    %v645 = vadd.f32 0.0, %v644
    %v646 = vpop.f32.mrf.mxu0
    %647 = vdwg.mxu0
    %v648 = vadd.f32 %v645, %v91
    %v649 = vadd.f32 %v604, %v619
    %v650 = vxor.u32 %v649, 2147483648
    %v651 = vmul.f32 %v650, 1.442695
    %v652 = vpow.pop %v651
    %v653 = vadd.f32 %v652, 1.0
    %v654 = vrcp.pop %v653
    %v655 = vmul.f32 %v653, %v654
    %v656 = vsub.f32 1.0, %v655
    %v657 = vmul.f32 %v654, %v656
    %v658 = vadd.f32 %v654, %v657
    %vm659 = vweird.f32 %v653
    %vm660 = vweird.f32 %v654
    %vm661 = vmor %vm659, %vm660
    %v662 = vsel %vm661, %v654, %v658
    %v663 = vand.u32 2147483647, %v653
    %vm664 = vcmp.eq.f32.partialorder %v663, 8.507059e+37
    %v665 = vand.u32 %v653, 2147483648
    %v666 = vor.u32 1.1754944e-38, %v665
    %v667 = vsel %vm664, %v666, %v662
    %v668 = vmul.f32 1.0, %v667
    %v669 = vadd.f32 %v605, %v632
    %v670 = vxor.u32 %v669, 2147483648
    %v671 = vmul.f32 %v670, 1.442695
    %v672 = vpow.pop %v671
    %v673 = vadd.f32 %v672, 1.0
    %v674 = vrcp.pop %v673
    %v675 = vmul.f32 %v673, %v674
    %v676 = vsub.f32 1.0, %v675
    %v677 = vmul.f32 %v674, %v676
    %v678 = vadd.f32 %v674, %v677
    %vm679 = vweird.f32 %v673
    %vm680 = vweird.f32 %v674
    %vm681 = vmor %vm679, %vm680
    %v682 = vsel %vm681, %v674, %v678
    %v683 = vand.u32 2147483647, %v673
    %vm684 = vcmp.eq.f32.partialorder %v683, 8.507059e+37
    %v685 = vand.u32 %v673, 2147483648
    %v686 = vor.u32 1.1754944e-38, %v685
    %v687 = vsel %vm684, %v686, %v682
    %v688 = vmul.f32 1.0, %v687
    %v689 = vmul.f32 %v668, %v648
    %v690 = vadd.f32 %v606, %v689
    %v691 = vtanh.pop %v690
    %v692 = vsub.f32 1.0, %v688
    %v693 = vmul.f32 %v692, %v691
    %v694 = vmul.f32 %v688, %v607
    %v695 = vadd.f32 %v693, %v694
    %696 = vst [vmem:[#allocation2] sm:$0xff] %v695
    %s697 = scalar_lea.vmem [#allocation3], 32
    %698 = vst [vmem:[%s697] sm:$0xff] %v695
    %s699 = scalar_lea.vmem %s0, 120
    %v700 = vld [vmem:[%s699] sm:$0xff]
    %v701 = vld [vmem:[%s699 + $0x8] sm:$0xff]
    %v702 = vld [vmem:[%s699 + $0x10] sm:$0xff]
    %v703 = vld [vmem:[#allocation2] sm:$0xff]
    %v704 = vpack.c.bf16 %v703, %v703
    %705 = vmatpush.bf16.msra.mxu0 %v199
    %706 = vmatpush.bf16.msra.mxu0 %v196
    %707 = vmatpush.bf16.msra.mxu0 %v193
    %708 = vmatpush.bf16.msra.mxu0 %v190
    %709 = vmatpush.bf16.msra.mxu0 %v187
    %710 = vmatpush.bf16.msra.mxu0 %v184
    %711 = vmatpush.bf16.msra.mxu0 %v181
    %712 = vmatpush.bf16.msra.mxu0 %v178
    %713 = vmatmul.bf16.gmra.mxu0 %v704
    %v714 = vpop.f32.mrf.mxu0
    %v715 = vadd.f32 0.0, %v714
    %v716 = vpop.f32.mrf.mxu0
    %717 = vdwg.mxu0
    %718 = vmatpush.bf16.msra.mxu0 %v200
    %719 = vmatpush.bf16.msra.mxu0 %v197
    %720 = vmatpush.bf16.msra.mxu0 %v194
    %721 = vmatpush.bf16.msra.mxu0 %v191
    %722 = vmatpush.bf16.msra.mxu0 %v188
    %723 = vmatpush.bf16.msra.mxu0 %v185
    %724 = vmatpush.bf16.msra.mxu0 %v182
    %725 = vmatpush.bf16.msra.mxu0 %v179
    %726 = vmatmul.bf16.gmra.mxu0 %v704
    %v727 = vpop.f32.mrf.mxu0
    %v728 = vadd.f32 0.0, %v727
    %v729 = vpop.f32.mrf.mxu0
    %730 = vdwg.mxu0
    %731 = vmatpush.bf16.msra.mxu0 %v201
    %732 = vmatpush.bf16.msra.mxu0 %v198
    %733 = vmatpush.bf16.msra.mxu0 %v195
    %734 = vmatpush.bf16.msra.mxu0 %v192
    %735 = vmatpush.bf16.msra.mxu0 %v189
    %736 = vmatpush.bf16.msra.mxu0 %v186
    %737 = vmatpush.bf16.msra.mxu0 %v183
    %738 = vmatpush.bf16.msra.mxu0 %v180
    %739 = vmatmul.bf16.gmra.mxu0 %v704
    %v740 = vpop.f32.mrf.mxu0
    %v741 = vadd.f32 0.0, %v740
    %v742 = vpop.f32.mrf.mxu0
    %743 = vdwg.mxu0
    %v744 = vadd.f32 %v741, %v91
    %v745 = vadd.f32 %v700, %v715
    %v746 = vxor.u32 %v745, 2147483648
    %v747 = vmul.f32 %v746, 1.442695
    %v748 = vpow.pop %v747
    %v749 = vadd.f32 %v748, 1.0
    %v750 = vrcp.pop %v749
    %v751 = vmul.f32 %v749, %v750
    %v752 = vsub.f32 1.0, %v751
    %v753 = vmul.f32 %v750, %v752
    %v754 = vadd.f32 %v750, %v753
    %vm755 = vweird.f32 %v749
    %vm756 = vweird.f32 %v750
    %vm757 = vmor %vm755, %vm756
    %v758 = vsel %vm757, %v750, %v754
    %v759 = vand.u32 2147483647, %v749
    %vm760 = vcmp.eq.f32.partialorder %v759, 8.507059e+37
    %v761 = vand.u32 %v749, 2147483648
    %v762 = vor.u32 1.1754944e-38, %v761
    %v763 = vsel %vm760, %v762, %v758
    %v764 = vmul.f32 1.0, %v763
    %v765 = vadd.f32 %v701, %v728
    %v766 = vxor.u32 %v765, 2147483648
    %v767 = vmul.f32 %v766, 1.442695
    %v768 = vpow.pop %v767
    %v769 = vadd.f32 %v768, 1.0
    %v770 = vrcp.pop %v769
    %v771 = vmul.f32 %v769, %v770
    %v772 = vsub.f32 1.0, %v771
    %v773 = vmul.f32 %v770, %v772
    %v774 = vadd.f32 %v770, %v773
    %vm775 = vweird.f32 %v769
    %vm776 = vweird.f32 %v770
    %vm777 = vmor %vm775, %vm776
    %v778 = vsel %vm777, %v770, %v774
    %v779 = vand.u32 2147483647, %v769
    %vm780 = vcmp.eq.f32.partialorder %v779, 8.507059e+37
    %v781 = vand.u32 %v769, 2147483648
    %v782 = vor.u32 1.1754944e-38, %v781
    %v783 = vsel %vm780, %v782, %v778
    %v784 = vmul.f32 1.0, %v783
    %v785 = vmul.f32 %v764, %v744
    %v786 = vadd.f32 %v702, %v785
    %v787 = vtanh.pop %v786
    %v788 = vsub.f32 1.0, %v784
    %v789 = vmul.f32 %v788, %v787
    %v790 = vmul.f32 %v784, %v703
    %v791 = vadd.f32 %v789, %v790
    %792 = vst [vmem:[#allocation2] sm:$0xff] %v791
    %s793 = scalar_lea.vmem [#allocation3], 40
    %794 = vst [vmem:[%s793] sm:$0xff] %v791
    %s795 = scalar_lea.vmem %s0, 144
    %v796 = vld [vmem:[%s795] sm:$0xff]
    %v797 = vld [vmem:[%s795 + $0x8] sm:$0xff]
    %v798 = vld [vmem:[%s795 + $0x10] sm:$0xff]
    %v799 = vld [vmem:[#allocation2] sm:$0xff]
    %v800 = vpack.c.bf16 %v799, %v799
    %801 = vmatpush.bf16.msra.mxu0 %v199
    %802 = vmatpush.bf16.msra.mxu0 %v196
    %803 = vmatpush.bf16.msra.mxu0 %v193
    %804 = vmatpush.bf16.msra.mxu0 %v190
    %805 = vmatpush.bf16.msra.mxu0 %v187
    %806 = vmatpush.bf16.msra.mxu0 %v184
    %807 = vmatpush.bf16.msra.mxu0 %v181
    %808 = vmatpush.bf16.msra.mxu0 %v178
    %809 = vmatmul.bf16.gmra.mxu0 %v800
    %v810 = vpop.f32.mrf.mxu0
    %v811 = vadd.f32 0.0, %v810
    %v812 = vpop.f32.mrf.mxu0
    %813 = vdwg.mxu0
    %814 = vmatpush.bf16.msra.mxu0 %v200
    %815 = vmatpush.bf16.msra.mxu0 %v197
    %816 = vmatpush.bf16.msra.mxu0 %v194
    %817 = vmatpush.bf16.msra.mxu0 %v191
    %818 = vmatpush.bf16.msra.mxu0 %v188
    %819 = vmatpush.bf16.msra.mxu0 %v185
    %820 = vmatpush.bf16.msra.mxu0 %v182
    %821 = vmatpush.bf16.msra.mxu0 %v179
    %822 = vmatmul.bf16.gmra.mxu0 %v800
    %v823 = vpop.f32.mrf.mxu0
    %v824 = vadd.f32 0.0, %v823
    %v825 = vpop.f32.mrf.mxu0
    %826 = vdwg.mxu0
    %827 = vmatpush.bf16.msra.mxu0 %v201
    %828 = vmatpush.bf16.msra.mxu0 %v198
    %829 = vmatpush.bf16.msra.mxu0 %v195
    %830 = vmatpush.bf16.msra.mxu0 %v192
    %831 = vmatpush.bf16.msra.mxu0 %v189
    %832 = vmatpush.bf16.msra.mxu0 %v186
    %833 = vmatpush.bf16.msra.mxu0 %v183
    %834 = vmatpush.bf16.msra.mxu0 %v180
    %835 = vmatmul.bf16.gmra.mxu0 %v800
    %v836 = vpop.f32.mrf.mxu0
    %v837 = vadd.f32 0.0, %v836
    %v838 = vpop.f32.mrf.mxu0
    %839 = vdwg.mxu0
    %v840 = vadd.f32 %v837, %v91
    %v841 = vadd.f32 %v796, %v811
    %v842 = vxor.u32 %v841, 2147483648
    %v843 = vmul.f32 %v842, 1.442695
    %v844 = vpow.pop %v843
    %v845 = vadd.f32 %v844, 1.0
    %v846 = vrcp.pop %v845
    %v847 = vmul.f32 %v845, %v846
    %v848 = vsub.f32 1.0, %v847
    %v849 = vmul.f32 %v846, %v848
    %v850 = vadd.f32 %v846, %v849
    %vm851 = vweird.f32 %v845
    %vm852 = vweird.f32 %v846
    %vm853 = vmor %vm851, %vm852
    %v854 = vsel %vm853, %v846, %v850
    %v855 = vand.u32 2147483647, %v845
    %vm856 = vcmp.eq.f32.partialorder %v855, 8.507059e+37
    %v857 = vand.u32 %v845, 2147483648
    %v858 = vor.u32 1.1754944e-38, %v857
    %v859 = vsel %vm856, %v858, %v854
    %v860 = vmul.f32 1.0, %v859
    %v861 = vadd.f32 %v797, %v824
    %v862 = vxor.u32 %v861, 2147483648
    %v863 = vmul.f32 %v862, 1.442695
    %v864 = vpow.pop %v863
    %v865 = vadd.f32 %v864, 1.0
    %v866 = vrcp.pop %v865
    %v867 = vmul.f32 %v865, %v866
    %v868 = vsub.f32 1.0, %v867
    %v869 = vmul.f32 %v866, %v868
    %v870 = vadd.f32 %v866, %v869
    %vm871 = vweird.f32 %v865
    %vm872 = vweird.f32 %v866
    %vm873 = vmor %vm871, %vm872
    %v874 = vsel %vm873, %v866, %v870
    %v875 = vand.u32 2147483647, %v865
    %vm876 = vcmp.eq.f32.partialorder %v875, 8.507059e+37
    %v877 = vand.u32 %v865, 2147483648
    %v878 = vor.u32 1.1754944e-38, %v877
    %v879 = vsel %vm876, %v878, %v874
    %v880 = vmul.f32 1.0, %v879
    %v881 = vmul.f32 %v860, %v840
    %v882 = vadd.f32 %v798, %v881
    %v883 = vtanh.pop %v882
    %v884 = vsub.f32 1.0, %v880
    %v885 = vmul.f32 %v884, %v883
    %v886 = vmul.f32 %v880, %v799
    %v887 = vadd.f32 %v885, %v886
    %888 = vst [vmem:[#allocation2] sm:$0xff] %v887
    %s889 = scalar_lea.vmem [#allocation3], 48
    %890 = vst [vmem:[%s889] sm:$0xff] %v887
    %s891 = scalar_lea.vmem %s0, 168
    %v892 = vld [vmem:[%s891] sm:$0xff]
    %v893 = vld [vmem:[%s891 + $0x8] sm:$0xff]
    %v894 = vld [vmem:[%s891 + $0x10] sm:$0xff]
    %v895 = vld [vmem:[#allocation2] sm:$0xff]
    %v896 = vpack.c.bf16 %v895, %v895
    %897 = vmatpush.bf16.msra.mxu0 %v199
    %898 = vmatpush.bf16.msra.mxu0 %v196
    %899 = vmatpush.bf16.msra.mxu0 %v193
    %900 = vmatpush.bf16.msra.mxu0 %v190
    %901 = vmatpush.bf16.msra.mxu0 %v187
    %902 = vmatpush.bf16.msra.mxu0 %v184
    %903 = vmatpush.bf16.msra.mxu0 %v181
    %904 = vmatpush.bf16.msra.mxu0 %v178
    %905 = vmatmul.bf16.gmra.mxu0 %v896
    %v906 = vpop.f32.mrf.mxu0
    %v907 = vadd.f32 0.0, %v906
    %v908 = vpop.f32.mrf.mxu0
    %909 = vdwg.mxu0
    %910 = vmatpush.bf16.msra.mxu0 %v200
    %911 = vmatpush.bf16.msra.mxu0 %v197
    %912 = vmatpush.bf16.msra.mxu0 %v194
    %913 = vmatpush.bf16.msra.mxu0 %v191
    %914 = vmatpush.bf16.msra.mxu0 %v188
    %915 = vmatpush.bf16.msra.mxu0 %v185
    %916 = vmatpush.bf16.msra.mxu0 %v182
    %917 = vmatpush.bf16.msra.mxu0 %v179
    %918 = vmatmul.bf16.gmra.mxu0 %v896
    %v919 = vpop.f32.mrf.mxu0
    %v920 = vadd.f32 0.0, %v919
    %v921 = vpop.f32.mrf.mxu0
    %922 = vdwg.mxu0
    %923 = vmatpush.bf16.msra.mxu0 %v201
    %924 = vmatpush.bf16.msra.mxu0 %v198
    %925 = vmatpush.bf16.msra.mxu0 %v195
    %926 = vmatpush.bf16.msra.mxu0 %v192
    %927 = vmatpush.bf16.msra.mxu0 %v189
    %928 = vmatpush.bf16.msra.mxu0 %v186
    %929 = vmatpush.bf16.msra.mxu0 %v183
    %930 = vmatpush.bf16.msra.mxu0 %v180
    %931 = vmatmul.bf16.gmra.mxu0 %v896
    %v932 = vpop.f32.mrf.mxu0
    %v933 = vadd.f32 0.0, %v932
    %v934 = vpop.f32.mrf.mxu0
    %935 = vdwg.mxu0
    %v936 = vadd.f32 %v933, %v91
    %v937 = vadd.f32 %v892, %v907
    %v938 = vxor.u32 %v937, 2147483648
    %v939 = vmul.f32 %v938, 1.442695
    %v940 = vpow.pop %v939
    %v941 = vadd.f32 %v940, 1.0
    %v942 = vrcp.pop %v941
    %v943 = vmul.f32 %v941, %v942
    %v944 = vsub.f32 1.0, %v943
    %v945 = vmul.f32 %v942, %v944
    %v946 = vadd.f32 %v942, %v945
    %vm947 = vweird.f32 %v941
    %vm948 = vweird.f32 %v942
    %vm949 = vmor %vm947, %vm948
    %v950 = vsel %vm949, %v942, %v946
    %v951 = vand.u32 2147483647, %v941
    %vm952 = vcmp.eq.f32.partialorder %v951, 8.507059e+37
    %v953 = vand.u32 %v941, 2147483648
    %v954 = vor.u32 1.1754944e-38, %v953
    %v955 = vsel %vm952, %v954, %v950
    %v956 = vmul.f32 1.0, %v955
    %v957 = vadd.f32 %v893, %v920
    %v958 = vxor.u32 %v957, 2147483648
    %v959 = vmul.f32 %v958, 1.442695
    %v960 = vpow.pop %v959
    %v961 = vadd.f32 %v960, 1.0
    %v962 = vrcp.pop %v961
    %v963 = vmul.f32 %v961, %v962
    %v964 = vsub.f32 1.0, %v963
    %v965 = vmul.f32 %v962, %v964
    %v966 = vadd.f32 %v962, %v965
    %vm967 = vweird.f32 %v961
    %vm968 = vweird.f32 %v962
    %vm969 = vmor %vm967, %vm968
    %v970 = vsel %vm969, %v962, %v966
    %v971 = vand.u32 2147483647, %v961
    %vm972 = vcmp.eq.f32.partialorder %v971, 8.507059e+37
    %v973 = vand.u32 %v961, 2147483648
    %v974 = vor.u32 1.1754944e-38, %v973
    %v975 = vsel %vm972, %v974, %v970
    %v976 = vmul.f32 1.0, %v975
    %v977 = vmul.f32 %v956, %v936
    %v978 = vadd.f32 %v894, %v977
    %v979 = vtanh.pop %v978
    %v980 = vsub.f32 1.0, %v976
    %v981 = vmul.f32 %v980, %v979
    %v982 = vmul.f32 %v976, %v895
    %v983 = vadd.f32 %v981, %v982
    %984 = vst [vmem:[#allocation2] sm:$0xff] %v983
    %s985 = scalar_lea.vmem [#allocation3], 56
    %986 = vst [vmem:[%s985] sm:$0xff] %v983
    %v987 = vld [vmem:[#allocation3] sm:$0xff]
    %v988 = vld [vmem:[#allocation3 + $0x8] sm:$0xff]
    %v989 = vld [vmem:[#allocation3 + $0x10] sm:$0xff]
    %v990 = vld [vmem:[#allocation3 + $0x18] sm:$0xff]
    %v991 = vld [vmem:[#allocation3 + $0x20] sm:$0xff]
    %v992 = vld [vmem:[#allocation3 + $0x28] sm:$0xff]
    %v993 = vld [vmem:[#allocation3 + $0x30] sm:$0xff]
    %v994 = vld [vmem:[#allocation3 + $0x38] sm:$0xff]
    %v995 = vpack.c.bf16 %v988, %v987
    %v996 = vpack.c.bf16 %v990, %v989
    %v997 = vpack.c.bf16 %v992, %v991
    %v998 = vpack.c.bf16 %v994, %v993
    %v999 = vld [vmem:[#allocation6] sm:$0xff]
    %v1000 = vld [vmem:[#allocation6 + $0x8] sm:$0xf]
    %v1001 = vld [vmem:[#allocation6 + $0xc] sm:$0xff]
    %v1002 = vld [vmem:[#allocation6 + $0x14] sm:$0xf]
    %v1003 = vld [vmem:[#allocation6 + $0x18] sm:$0xff]
    %v1004 = vld [vmem:[#allocation6 + $0x20] sm:$0xf]
    %v1005 = vld [vmem:[#allocation6 + $0x24] sm:$0xff]
    %v1006 = vld [vmem:[#allocation6 + $0x2c] sm:$0xf]
    %v1007 = vld [vmem:[#allocation6 + $0x30] sm:$0xff]
    %v1008 = vld [vmem:[#allocation6 + $0x38] sm:$0xf]
    %v1009 = vld [vmem:[#allocation6 + $0x3c] sm:$0xff]
    %v1010 = vld [vmem:[#allocation6 + $0x44] sm:$0xf]
    %v1011 = vld [vmem:[#allocation6 + $0x48] sm:$0xff]
    %v1012 = vld [vmem:[#allocation6 + $0x50] sm:$0xf]
    %v1013 = vld [vmem:[#allocation6 + $0x54] sm:$0xff]
    %v1014 = vld [vmem:[#allocation6 + $0x5c] sm:$0xf]
    %v1015 = vld [vmem:[#allocation6 + $0x60] sm:$0xff]
    %v1016 = vld [vmem:[#allocation6 + $0x68] sm:$0xf]
    %v1017 = vld [vmem:[#allocation6 + $0x6c] sm:$0xff]
    %v1018 = vld [vmem:[#allocation6 + $0x74] sm:$0xf]
    %v1019 = vld [vmem:[#allocation6 + $0x78] sm:$0xff]
    %v1020 = vld [vmem:[#allocation6 + $0x80] sm:$0xf]
    %v1021 = vld [vmem:[#allocation6 + $0x84] sm:$0xff]
    %v1022 = vld [vmem:[#allocation6 + $0x8c] sm:$0xf]
    %v1023 = vld [vmem:[#allocation6 + $0x90] sm:$0xff]
    %v1024 = vld [vmem:[#allocation6 + $0x98] sm:$0xf]
    %v1025 = vld [vmem:[#allocation6 + $0x9c] sm:$0xff]
    %v1026 = vld [vmem:[#allocation6 + $0xa4] sm:$0xf]
    %v1027 = vld [vmem:[#allocation6 + $0xa8] sm:$0xff]
    %v1028 = vld [vmem:[#allocation6 + $0xb0] sm:$0xf]
    %v1029 = vld [vmem:[#allocation6 + $0xb4] sm:$0xff]
    %v1030 = vld [vmem:[#allocation6 + $0xbc] sm:$0xf]
    %v1031 = vld [vmem:[%s4] sm:$0x7]
    %v1033 = vperm.slane %v1031, 0
    %v1034 = vperm.slane %v1031, 1
    %v1035 = vperm.slane %v1031, 2
    %v1071 = vunpack.c.l.b16 %v999
    %v1072 = vunpack.c.h.b16 %v999
    %v1073 = vunpack.c.l.b16 %v1000
    %v1074 = vunpack.c.l.b16 %v1001
    %v1075 = vunpack.c.h.b16 %v1001
    %v1076 = vunpack.c.l.b16 %v1002
    %v1077 = vunpack.c.l.b16 %v1003
    %v1078 = vunpack.c.h.b16 %v1003
    %v1079 = vunpack.c.l.b16 %v1004
    %v1080 = vunpack.c.l.b16 %v1005
    %v1081 = vunpack.c.h.b16 %v1005
    %v1082 = vunpack.c.l.b16 %v1006
    %v1083 = vunpack.c.l.b16 %v1007
    %v1084 = vunpack.c.h.b16 %v1007
    %v1085 = vunpack.c.l.b16 %v1008
    %v1086 = vunpack.c.l.b16 %v1009
    %v1087 = vunpack.c.h.b16 %v1009
    %v1088 = vunpack.c.l.b16 %v1010
    %v1089 = vunpack.c.l.b16 %v1011
    %v1090 = vunpack.c.h.b16 %v1011
    %v1091 = vunpack.c.l.b16 %v1012
    %v1092 = vunpack.c.l.b16 %v1013
    %v1093 = vunpack.c.h.b16 %v1013
    %v1094 = vunpack.c.l.b16 %v1014
    %v1095 = vunpack.c.l.b16 %v1015
    %v1096 = vunpack.c.h.b16 %v1015
    %v1097 = vunpack.c.l.b16 %v1016
    %v1098 = vunpack.c.l.b16 %v1017
    %v1099 = vunpack.c.h.b16 %v1017
    %v1100 = vunpack.c.l.b16 %v1018
    %v1101 = vunpack.c.l.b16 %v1019
    %v1102 = vunpack.c.h.b16 %v1019
    %v1103 = vunpack.c.l.b16 %v1020
    %v1104 = vunpack.c.l.b16 %v1021
    %v1105 = vunpack.c.h.b16 %v1021
    %v1106 = vunpack.c.l.b16 %v1022
    %v1107 = vunpack.c.l.b16 %v1023
    %v1108 = vunpack.c.h.b16 %v1023
    %v1109 = vunpack.c.l.b16 %v1024
    %v1110 = vunpack.c.l.b16 %v1025
    %v1111 = vunpack.c.h.b16 %v1025
    %v1112 = vunpack.c.l.b16 %v1026
    %v1113 = vunpack.c.l.b16 %v1027
    %v1114 = vunpack.c.h.b16 %v1027
    %v1115 = vunpack.c.l.b16 %v1028
    %v1116 = vunpack.c.l.b16 %v1029
    %v1117 = vunpack.c.h.b16 %v1029
    %v1118 = vunpack.c.l.b16 %v1030
    %v1119 = vpack.c.b16 %v1074, %v1071
    %v1120 = vpack.c.b16 %v1075, %v1072
    %v1121 = vpack.c.b16 %v1076, %v1073
    %v1122 = vpack.c.b16 %v1080, %v1077
    %v1123 = vpack.c.b16 %v1081, %v1078
    %v1124 = vpack.c.b16 %v1082, %v1079
    %v1125 = vpack.c.b16 %v1086, %v1083
    %v1126 = vpack.c.b16 %v1087, %v1084
    %v1127 = vpack.c.b16 %v1088, %v1085
    %v1128 = vpack.c.b16 %v1092, %v1089
    %v1129 = vpack.c.b16 %v1093, %v1090
    %v1130 = vpack.c.b16 %v1094, %v1091
    %v1131 = vpack.c.b16 %v1098, %v1095
    %v1132 = vpack.c.b16 %v1099, %v1096
    %v1133 = vpack.c.b16 %v1100, %v1097
    %v1134 = vpack.c.b16 %v1104, %v1101
    %v1135 = vpack.c.b16 %v1105, %v1102
    %v1136 = vpack.c.b16 %v1106, %v1103
    %v1137 = vpack.c.b16 %v1110, %v1107
    %v1138 = vpack.c.b16 %v1111, %v1108
    %v1139 = vpack.c.b16 %v1112, %v1109
    %v1140 = vpack.c.b16 %v1116, %v1113
    %v1141 = vpack.c.b16 %v1117, %v1114
    %v1142 = vpack.c.b16 %v1118, %v1115
    %1167 = vmatpush.bf16.msra.mxu0 %v1140
    %1168 = vmatpush.bf16.msra.mxu0 %v1137
    %1169 = vmatpush.bf16.msra.mxu0 %v1134
    %1170 = vmatpush.bf16.msra.mxu0 %v1131
    %1171 = vmatpush.bf16.msra.mxu0 %v1128
    %1172 = vmatpush.bf16.msra.mxu0 %v1125
    %1173 = vmatpush.bf16.msra.mxu0 %v1122
    %1174 = vmatpush.bf16.msra.mxu0 %v1119
    %1175 = vmatmul.bf16.gmra.mxu0 %v995
    %v1176 = vpop.f32.mrf.mxu0
    %v1177 = vadd.f32 %v1033, %v1176
    %v1178 = vpop.f32.mrf.mxu0
    %v1179 = vadd.f32 %v1033, %v1178
    %1180 = vmatmul.bf16.gmra.mxu0 %v996
    %v1181 = vpop.f32.mrf.mxu0
    %v1182 = vadd.f32 %v1033, %v1181
    %v1183 = vpop.f32.mrf.mxu0
    %v1184 = vadd.f32 %v1033, %v1183
    %1185 = vmatmul.bf16.gmra.mxu0 %v997
    %v1186 = vpop.f32.mrf.mxu0
    %v1187 = vadd.f32 %v1033, %v1186
    %v1188 = vpop.f32.mrf.mxu0
    %v1189 = vadd.f32 %v1033, %v1188
    %1190 = vmatmul.bf16.gmra.mxu0 %v998
    %v1191 = vpop.f32.mrf.mxu0
    %v1192 = vadd.f32 %v1033, %v1191
    %v1193 = vpop.f32.mrf.mxu0
    %v1194 = vadd.f32 %v1033, %v1193
    %1195 = vdwg.mxu0
    %1196 = vmatpush.bf16.msra.mxu0 %v1141
    %1197 = vmatpush.bf16.msra.mxu0 %v1138
    %1198 = vmatpush.bf16.msra.mxu0 %v1135
    %1199 = vmatpush.bf16.msra.mxu0 %v1132
    %1200 = vmatpush.bf16.msra.mxu0 %v1129
    %1201 = vmatpush.bf16.msra.mxu0 %v1126
    %1202 = vmatpush.bf16.msra.mxu0 %v1123
    %1203 = vmatpush.bf16.msra.mxu0 %v1120
    %1204 = vmatmul.bf16.gmra.mxu0 %v995
    %v1205 = vpop.f32.mrf.mxu0
    %v1206 = vadd.f32 %v1034, %v1205
    %v1207 = vpop.f32.mrf.mxu0
    %v1208 = vadd.f32 %v1034, %v1207
    %1209 = vmatmul.bf16.gmra.mxu0 %v996
    %v1210 = vpop.f32.mrf.mxu0
    %v1211 = vadd.f32 %v1034, %v1210
    %v1212 = vpop.f32.mrf.mxu0
    %v1213 = vadd.f32 %v1034, %v1212
    %1214 = vmatmul.bf16.gmra.mxu0 %v997
    %v1215 = vpop.f32.mrf.mxu0
    %v1216 = vadd.f32 %v1034, %v1215
    %v1217 = vpop.f32.mrf.mxu0
    %v1218 = vadd.f32 %v1034, %v1217
    %1219 = vmatmul.bf16.gmra.mxu0 %v998
    %v1220 = vpop.f32.mrf.mxu0
    %v1221 = vadd.f32 %v1034, %v1220
    %v1222 = vpop.f32.mrf.mxu0
    %v1223 = vadd.f32 %v1034, %v1222
    %1224 = vdwg.mxu0
    %1225 = vmatpush.bf16.msra.mxu0 %v1142
    %1226 = vmatpush.bf16.msra.mxu0 %v1139
    %1227 = vmatpush.bf16.msra.mxu0 %v1136
    %1228 = vmatpush.bf16.msra.mxu0 %v1133
    %1229 = vmatpush.bf16.msra.mxu0 %v1130
    %1230 = vmatpush.bf16.msra.mxu0 %v1127
    %1231 = vmatpush.bf16.msra.mxu0 %v1124
    %1232 = vmatpush.bf16.msra.mxu0 %v1121
    %1233 = vmatmul.bf16.gmra.mxu0 %v995
    %v1234 = vpop.f32.mrf.mxu0
    %v1235 = vadd.f32 %v1035, %v1234
    %v1236 = vpop.f32.mrf.mxu0
    %v1237 = vadd.f32 %v1035, %v1236
    %1238 = vmatmul.bf16.gmra.mxu0 %v996
    %v1239 = vpop.f32.mrf.mxu0
    %v1240 = vadd.f32 %v1035, %v1239
    %v1241 = vpop.f32.mrf.mxu0
    %v1242 = vadd.f32 %v1035, %v1241
    %1243 = vmatmul.bf16.gmra.mxu0 %v997
    %v1244 = vpop.f32.mrf.mxu0
    %v1245 = vadd.f32 %v1035, %v1244
    %v1246 = vpop.f32.mrf.mxu0
    %v1247 = vadd.f32 %v1035, %v1246
    %1248 = vmatmul.bf16.gmra.mxu0 %v998
    %v1249 = vpop.f32.mrf.mxu0
    %v1250 = vadd.f32 %v1035, %v1249
    %v1251 = vpop.f32.mrf.mxu0
    %v1252 = vadd.f32 %v1035, %v1251
    %1253 = vdwg.mxu0
    %1254 = vst [vmem:[%s5] sm:$0xff] %v1177
    %1255 = vst [vmem:[%s5 + $0x8] sm:$0xff] %v1206
    %1256 = vst [vmem:[%s5 + $0x10] sm:$0xff] %v1235
    %1257 = vst [vmem:[%s5 + $0x18] sm:$0xff] %v1179
    %1258 = vst [vmem:[%s5 + $0x20] sm:$0xff] %v1208
    %1259 = vst [vmem:[%s5 + $0x28] sm:$0xff] %v1237
    %1260 = vst [vmem:[%s5 + $0x30] sm:$0xff] %v1182
    %1261 = vst [vmem:[%s5 + $0x38] sm:$0xff] %v1211
    %1262 = vst [vmem:[%s5 + $0x40] sm:$0xff] %v1240
    %1263 = vst [vmem:[%s5 + $0x48] sm:$0xff] %v1184
    %1264 = vst [vmem:[%s5 + $0x50] sm:$0xff] %v1213
    %1265 = vst [vmem:[%s5 + $0x58] sm:$0xff] %v1242
    %1266 = vst [vmem:[%s5 + $0x60] sm:$0xff] %v1187
    %1267 = vst [vmem:[%s5 + $0x68] sm:$0xff] %v1216
    %1268 = vst [vmem:[%s5 + $0x70] sm:$0xff] %v1245
    %1269 = vst [vmem:[%s5 + $0x78] sm:$0xff] %v1189
    %1270 = vst [vmem:[%s5 + $0x80] sm:$0xff] %v1218
    %1271 = vst [vmem:[%s5 + $0x88] sm:$0xff] %v1247
    %1272 = vst [vmem:[%s5 + $0x90] sm:$0xff] %v1192
    %1273 = vst [vmem:[%s5 + $0x98] sm:$0xff] %v1221
    %1274 = vst [vmem:[%s5 + $0xa0] sm:$0xff] %v1250
    %1275 = vst [vmem:[%s5 + $0xa8] sm:$0xff] %v1194
    %1276 = vst [vmem:[%s5 + $0xb0] sm:$0xff] %v1223
    %1277 = vst [vmem:[%s5 + $0xb8] sm:$0xff] %v1252
    // Predicated region
    $region34: #{gru_model_forward.4} parent=1 // pred_check
      _
    $region35: #{gru_model_forward.4} parent=1 // pred_check_branch
      %1279 = sbr.rel (0) target = $region37
    $region36: #{gru_model_forward.4} parent=1 // pred_region
      _
    $region37: #{gru_model_forward.4} parent=1 // pred_fallthru
      _
    // Predicated region
    $region38: #{gru_model_forward.4} parent=1 // pred_check
      _
    $region39: #{gru_model_forward.4} parent=1 // pred_check_branch
      %1281 = sbr.rel (0) target = $region41
    $region40: #{gru_model_forward.4} parent=1 // pred_region
      _
    $region41: #{gru_model_forward.4} parent=1 // pred_fallthru
      _
    %1282 = vsyncpa [#allocation5], 1
    %1283 = vsyncpa [#allocation7], 1

</llo_original>
